<compile_context>
chip_gen: v7x
topology: tpu7x:2x2x1
jax: 0.10.0
libtpu: 0.0.40
codegen_flags: <defaults>
</compile_context>

<pallas_src>
import functools

import jax
import jax.numpy as jnp
from jax.experimental import pallas as pl
from jax.experimental.pallas import tpu as pltpu

# --------------------------------------------------------------------------
# Model dimensions (those implied by the PyTorch module)
# --------------------------------------------------------------------------
HIDDEN = 768                 # BERT hidden size
EXTRA = 5                    # additional_features dim
EXTRA_PAD = 8                # padded to a sublane-friendly width
D1_OUT = 768                 # dense1: Linear(773, 768)
D2_OUT = 512                 # dense2: Linear(768, 512)
NUM_CLASSES = 6              # dense3: Linear(512, 6)
OUT_PAD = 128                # class dim padded to a full lane width
NEG_INF = -1e30


# --------------------------------------------------------------------------
# Pallas kernel: fused pooler + classifier head for one batch tile
# --------------------------------------------------------------------------
def head_kernel(pooled_ref, extra_ref,
                pw_ref, pb_ref,
                w1a_ref, w1b_ref, b1_ref,
                w2_ref, b2_ref,
                w3_ref, b3_ref,
                out_ref, *, bf16_tanh):
    """pooled_ref: (TB, 768) bf16, extra_ref: (TB, 8) bf16 (cols 5..7 zero),
    out_ref: (TB, 128) f32 log-probs (cols 6..127 are padding)."""
    # ---- BERT pooler (fused): cls = tanh(pooled @ Wp + bp) -----------------
    pooler = jnp.dot(pooled_ref[...], pw_ref[...],
                     preferred_element_type=jnp.float32) + pb_ref[...]
    if bf16_tanh:
        # v6e/v7x: bf16 EUP tanh, result is already bf16 for dense1's MXU op.
        cls = jnp.tanh(pooler.astype(jnp.bfloat16))                  # (TB, 768) bf16
    else:
        # v5e: no bf16 VPU/EUP -> keep tanh in f32, cast once for the MXU.
        cls = jnp.tanh(pooler).astype(jnp.bfloat16)

    # ---- dense1 (K = 773 split as 768 + 8) + ReLU; dropout = identity ------
    h = jnp.dot(cls, w1a_ref[...], preferred_element_type=jnp.float32)
    h = h + jnp.dot(extra_ref[...], w1b_ref[...],
                    preferred_element_type=jnp.float32)
    h = jnp.maximum(h + b1_ref[...], 0.0)                            # (TB, 768) f32

    # ---- dense2 + ReLU ------------------------------------------------------
    h = jnp.dot(h.astype(jnp.bfloat16), w2_ref[...],
                preferred_element_type=jnp.float32)
    h = jnp.maximum(h + b2_ref[...], 0.0)                            # (TB, 512) f32

    # ---- dense3 (class dim padded to 128; padded biases = -1e30) ------------
    logits = jnp.dot(h.astype(jnp.bfloat16), w3_ref[...],
                     preferred_element_type=jnp.float32) + b3_ref[...]

    # ---- LogSoftmax over the padded lane dim (pad cols contribute exp()=0) --
    m = jnp.max(logits, axis=1, keepdims=True)
    shifted = logits - m
    lse = jnp.log(jnp.sum(jnp.exp(shifted), axis=1, keepdims=True))
    out_ref[...] = shifted - lse


# --------------------------------------------------------------------------
# Small helpers
# --------------------------------------------------------------------------
def _round_up(x, m):
    return (x + m - 1) // m * m


def _default_bf16_tanh():
    """bf16 elementwise math on v6e/v7x; f32 on v5* (no bf16 VPU/EUP)."""
    try:
        kind = jax.devices()[0].device_kind.lower()
    except Exception:
        return True
    return "v5" not in kind


def _copy_probe_kernel(x_ref, o_ref):
    o_ref[...] = x_ref[...]


_BUFFERED1_OK = None


def _single_buffer_weights_supported():
    """One-time probe: can a constant-index BlockSpec use pl.Buffered(1)?"""
    global _BUFFERED1_OK
    if _BUFFERED1_OK is None:
        try:
            probe = pl.pallas_call(
                _copy_probe_kernel,
                out_shape=jax.ShapeDtypeStruct((16, 128), jnp.float32),
                grid=(2,),
                in_specs=[pl.BlockSpec((8, 128), lambda i: (0, 0),
                                       pipeline_mode=pl.Buffered(1))],
                out_specs=pl.BlockSpec((8, 128), lambda i: (i, 0)),
            )
            jax.block_until_ready(probe(jnp.zeros((8, 128), jnp.float32)))
            _BUFFERED1_OK = True
        except Exception:
            _BUFFERED1_OK = False
    return _BUFFERED1_OK


# --------------------------------------------------------------------------
# Wrapper: parameter prep + pallas_call
# --------------------------------------------------------------------------
def prepare_head_params(params):
    """Split / pad / cast module parameters for the Pallas kernel."""
    w1 = params["w1"]                                   # (773, 768), (in, out)
    w1a = w1[:HIDDEN]                                   # (768, 768)
    w1b = jnp.zeros((EXTRA_PAD, D1_OUT), jnp.float32).at[:EXTRA].set(w1[HIDDEN:])
    w3 = jnp.zeros((D2_OUT, OUT_PAD), jnp.float32).at[:, :NUM_CLASSES].set(params["w3"])
    b3 = jnp.full((OUT_PAD,), NEG_INF, jnp.float32).at[:NUM_CLASSES].set(params["b3"])
    bf = lambda a: a.astype(jnp.bfloat16)
    return dict(
        pw=bf(params["bert"]["pooler_w"]),
        pb=params["bert"]["pooler_b"].reshape(1, -1),
        w1a=bf(w1a), w1b=bf(w1b), b1=params["b1"].reshape(1, -1),
        w2=bf(params["w2"]), b2=params["b2"].reshape(1, -1),
        w3=bf(w3), b3=b3.reshape(1, -1),
    )


def classifier_head(pooled, extra, prep, *, max_tb=None, bf16_tanh=None):
    """pooled: (B, 768) f32, extra: (B, 5) f32 -> (B, 6) log-probabilities."""
    B = pooled.shape[0]
    if max_tb is None:
        # Large batches: fewer grid steps amortize the ~0.35us/step overhead.
        max_tb = 512 if B >= 2048 else 256
    if bf16_tanh is None:
        bf16_tanh = _default_bf16_tanh()

    # Pick the tile so the batch grid has >= 2 tiles whenever B >= 16, letting
    # v7x's 2 TensorCores split the "parallel" batch axis.
    TB = max(8, min(max_tb, _round_up(pl.cdiv(B, 2), 8)))
    B_pad = _round_up(B, TB)
    grid = (B_pad // TB,)

    # Fused pad + cast (single XLA fusion; no extra HBM copy of the activation).
    pooled_p = jnp.pad(pooled.astype(jnp.bfloat16), ((0, B_pad - B), (0, 0)))
    extra_p = jnp.pad(extra.astype(jnp.bfloat16),
                      ((0, B_pad - B), (0, EXTRA_PAD - EXTRA)))

    # Weights never change block index -> single-buffer them (frees ~3 MiB VMEM).
    if _single_buffer_weights_supported():
        resident = lambda shape: pl.BlockSpec(shape, lambda i: (0, 0),
                                              pipeline_mode=pl.Buffered(1))
    else:
        resident = lambda shape: pl.BlockSpec(shape, lambda i: (0, 0))
    batched = lambda shape: pl.BlockSpec(shape, lambda i: (i, 0))    # streamed

    mm = (HIDDEN * HIDDEN + HIDDEN * D1_OUT + EXTRA_PAD * D1_OUT
          + D1_OUT * D2_OUT + D2_OUT * OUT_PAD)
    cost = pl.CostEstimate(
        flops=2 * B_pad * mm,
        transcendentals=B_pad * (HIDDEN + OUT_PAD + 1),
        bytes_accessed=2 * mm + 4 * (HIDDEN + D1_OUT + D2_OUT + OUT_PAD)
        + B_pad * (2 * (HIDDEN + EXTRA_PAD) + 4 * OUT_PAD),
    )

    out = pl.pallas_call(
        functools.partial(head_kernel, bf16_tanh=bf16_tanh),
        out_shape=jax.ShapeDtypeStruct((B_pad, OUT_PAD), jnp.float32),
        grid=grid,
        in_specs=[
            batched((TB, HIDDEN)),            # pooled
            batched((TB, EXTRA_PAD)),         # extra features
            resident((HIDDEN, HIDDEN)),       # pooler W (bf16)
            resident((1, HIDDEN)),            # pooler b (f32)
            resident((HIDDEN, D1_OUT)),       # W1[:768]   (bf16)
            resident((EXTRA_PAD, D1_OUT)),    # W1[768:]   (bf16, zero-padded rows)
            resident((1, D1_OUT)),            # b1
            resident((D1_OUT, D2_OUT)),       # W2 (bf16)
            resident((1, D2_OUT)),            # b2
            resident((D2_OUT, OUT_PAD)),      # W3 (bf16, class dim padded to 128)
            resident((1, OUT_PAD)),           # b3 (pad cols = -1e30)
        ],
        out_specs=batched((TB, OUT_PAD)),
        compiler_params=pltpu.CompilerParams(
            dimension_semantics=("parallel",),        # v7x: shard batch over 2 TCs
            vmem_limit_bytes=32 * 1024 * 1024),       # ~16-24 MiB actual need at TB=256
        cost_estimate=cost,
    )(pooled_p, extra_p,
      prep["pw"], prep["pb"],
      prep["w1a"], prep["w1b"], prep["b1"],
      prep["w2"], prep["b2"],
      prep["w3"], prep["b3"])

    return out[:B, :NUM_CLASSES]


# --------------------------------------------------------------------------
# Deterministic stand-in for the BERT backbone (plain JAX glue)
# --------------------------------------------------------------------------
def bert_pooled_stub(bert_params, input_ids, attention_mask):
    """Embedding lookup + masked mean pool -> (B, 768).  The pooler matmul +
    tanh is fused into the Pallas kernel."""
    # TODO(synk): the full pretrained 12-layer BERT encoder is not replicated here.
    tok = bert_params["emb"][input_ids]                       # (B, S, H)
    mask = attention_mask.astype(jnp.float32)[..., None]      # (B, S, 1)
    return (tok * mask).sum(axis=1) / jnp.maximum(mask.sum(axis=1), 1.0)


# --------------------------------------------------------------------------
# Parameter init (deterministic, mimics nn.Linear default init; (in, out) layout)
# --------------------------------------------------------------------------
def init_params(key, vocab=64):
    keys = jax.random.split(key, 10)

    def linear(kw, kb, fan_in, fan_out):
        bound = 1.0 / jnp.sqrt(fan_in)
        w = jax.random.uniform(kw, (fan_in, fan_out), jnp.float32, -bound, bound)
        b = jax.random.uniform(kb, (fan_out,), jnp.float32, -bound, bound)
        return w, b

    w1, b1 = linear(keys[0], keys[1], HIDDEN + EXTRA, D1_OUT)
    w2, b2 = linear(keys[2], keys[3], D1_OUT, D2_OUT)
    w3, b3 = linear(keys[4], keys[5], D2_OUT, NUM_CLASSES)

    bert = {
        "emb": 0.02 * jax.random.normal(keys[6], (vocab, HIDDEN), jnp.float32),
        "pooler_w": 0.02 * jax.random.normal(keys[7], (HIDDEN, HIDDEN), jnp.float32),
        "pooler_b": jnp.zeros((HIDDEN,), jnp.float32),
    }
    return {"bert": bert, "w1": w1, "b1": b1, "w2": w2, "b2": b2, "w3": w3, "b3": b3}


# --------------------------------------------------------------------------
# Full forward (BERT stub pooling in JAX, pooler + head fused in Pallas)
# --------------------------------------------------------------------------
def custom_bert_classifier(params, prep, input_ids, attention_mask,
                           additional_features, *, bf16_tanh=None):
    pooled = bert_pooled_stub(params["bert"], input_ids, attention_mask)   # (B, 768)
    return classifier_head(pooled, additional_features.astype(jnp.float32), prep,
                           bf16_tanh=bf16_tanh)


# Pure-JAX reference (matching bf16 matmul inputs, f32 accumulation, and the
# kernel's tanh precision path)
def reference_forward(params, input_ids, attention_mask, additional_features,
                      *, bf16_tanh):
    bf = jnp.bfloat16
    pooled = bert_pooled_stub(params["bert"], input_ids, attention_mask)
    acc = (jnp.dot(pooled.astype(bf), params["bert"]["pooler_w"].astype(bf),
                   preferred_element_type=jnp.float32)
           + params["bert"]["pooler_b"])
    if bf16_tanh:
        cls = jnp.tanh(acc.astype(bf)).astype(jnp.float32)
    else:
        cls = jnp.tanh(acc)
    combined = jnp.concatenate([cls, additional_features.astype(jnp.float32)], axis=1)
    h = jnp.maximum(jnp.dot(combined.astype(bf), params["w1"].astype(bf),
                            preferred_element_type=jnp.float32) + params["b1"], 0.0)
    h = jnp.maximum(jnp.dot(h.astype(bf), params["w2"].astype(bf),
                            preferred_element_type=jnp.float32) + params["b2"], 0.0)
    logits = jnp.dot(h.astype(bf), params["w3"].astype(bf),
                     preferred_element_type=jnp.float32) + params["b3"]
    return jax.nn.log_softmax(logits, axis=1)


if __name__ == "__main__":
    key = jax.random.PRNGKey(0)
    k_param, k_ids, k_mask, k_feat = jax.random.split(key, 4)

    B, S, VOCAB = 4, 8, 64
    params = init_params(k_param, vocab=VOCAB)
    prep = prepare_head_params(params)

    input_ids = jax.random.randint(k_ids, (B, S), 0, VOCAB, dtype=jnp.int32)
    attention_mask = jnp.ones((B, S), dtype=jnp.int32).at[:, S - 2:].set(0)
    additional_features = jax.random.normal(k_feat, (B, EXTRA), jnp.float32)

    use_bf16_tanh = _default_bf16_tanh()

    log_probs = custom_bert_classifier(params, prep, input_ids, attention_mask,
                                       additional_features, bf16_tanh=use_bf16_tanh)
    log_probs = jax.block_until_ready(log_probs)

    ref = reference_forward(params, input_ids, attention_mask, additional_features,
                            bf16_tanh=use_bf16_tanh)

    assert log_probs.shape == (B, NUM_CLASSES)
    assert bool(jnp.all(jnp.isfinite(log_probs)))
    assert bool(jnp.allclose(jnp.exp(log_probs).sum(axis=1), 1.0, atol=1e-3))
    assert bool(jnp.allclose(log_probs, ref, atol=1e-2, rtol=1e-2))

    print("KERNEL_OK")
</pallas_src>

<mosaic_0001>
module attributes {stable_mosaic.version = 11 : i64} {
  func.func @_copy_probe_kernel(%arg0: i32, %arg1: memref<8x128xf32, #tpu.memory_space<vmem>>, %arg2: memref<8x128xf32, #tpu.memory_space<vmem>>) attributes {dimension_semantics = [#tpu.dimension_semantics<arbitrary>], iteration_bounds = array<i64: 2>, scalar_prefetch = 0 : i64, scratch_operands = 0 : i64, tpu.core_type = #tpu.core_type<tc>, window_params = [{pipeline_mode = #tpu.pipeline_mode<synchronous>, transform_indices = @transform_0, window_bounds = array<i64: 8, 128>}, {transform_indices = @transform_1, window_bounds = array<i64: 8, 128>}]} {
    %c0 = arith.constant 0 : index
    %c0_0 = arith.constant 0 : index
    %0 = vector.load %arg1[%c0, %c0_0] : memref<8x128xf32, #tpu.memory_space<vmem>>, vector<8x128xf32>
    %c0_1 = arith.constant 0 : index
    %c0_2 = arith.constant 0 : index
    %1 = vector.load %arg2[%c0_1, %c0_2] : memref<8x128xf32, #tpu.memory_space<vmem>>, vector<8x128xf32>
    tpu.vector_store %arg2[%c0_1, %c0_2], %0 {strides = array<i32>} : memref<8x128xf32, #tpu.memory_space<vmem>>, vector<8x128xf32>,
    return
  }
  func.func @transform_0(%arg0: i32) -> (i32, i32) {
    %c0_i32 = arith.constant 0 : i32
    %c0_i32_0 = arith.constant 0 : i32
    %c0_i32_1 = arith.constant 0 : i32
    return %c0_i32, %c0_i32_0 : i32, i32
  }
  func.func @transform_1(%arg0: i32) -> (i32, i32) {
    %c0_i32 = arith.constant 0 : i32
    %c0_i32_0 = arith.constant 0 : i32
    return %arg0, %c0_i32 : i32, i32
  }
}

module attributes {stable_mosaic.version = 11 : i64} {
  func.func @head_kernel(%arg0: i32, %arg1: memref<8x768xbf16, #tpu.memory_space<vmem>>, %arg2: memref<8x8xbf16, #tpu.memory_space<vmem>>, %arg3: memref<768x768xbf16, #tpu.memory_space<vmem>>, %arg4: memref<1x768xf32, #tpu.memory_space<vmem>>, %arg5: memref<768x768xbf16, #tpu.memory_space<vmem>>, %arg6: memref<8x768xbf16, #tpu.memory_space<vmem>>, %arg7: memref<1x768xf32, #tpu.memory_space<vmem>>, %arg8: memref<768x512xbf16, #tpu.memory_space<vmem>>, %arg9: memref<1x512xf32, #tpu.memory_space<vmem>>, %arg10: memref<512x128xbf16, #tpu.memory_space<vmem>>, %arg11: memref<1x128xf32, #tpu.memory_space<vmem>>, %arg12: memref<8x128xf32, #tpu.memory_space<vmem>>) attributes {dimension_semantics = [#tpu.dimension_semantics<parallel>], iteration_bounds = array<i64: 1>, scalar_prefetch = 0 : i64, scratch_operands = 0 : i64, tpu.core_type = #tpu.core_type<tc>, window_params = [{transform_indices = @transform_0, window_bounds = array<i64: 8, 768>}, {transform_indices = @transform_1, window_bounds = array<i64: 8, 8>}, {pipeline_mode = #tpu.pipeline_mode<synchronous>, transform_indices = @transform_2, window_bounds = array<i64: 768, 768>}, {pipeline_mode = #tpu.pipeline_mode<synchronous>, transform_indices = @transform_3, window_bounds = array<i64: 1, 768>}, {pipeline_mode = #tpu.pipeline_mode<synchronous>, transform_indices = @transform_4, window_bounds = array<i64: 768, 768>}, {pipeline_mode = #tpu.pipeline_mode<synchronous>, transform_indices = @transform_5, window_bounds = array<i64: 8, 768>}, {pipeline_mode = #tpu.pipeline_mode<synchronous>, transform_indices = @transform_6, window_bounds = array<i64: 1, 768>}, {pipeline_mode = #tpu.pipeline_mode<synchronous>, transform_indices = @transform_7, window_bounds = array<i64: 768, 512>}, {pipeline_mode = #tpu.pipeline_mode<synchronous>, transform_indices = @transform_8, window_bounds = array<i64: 1, 512>}, {pipeline_mode = #tpu.pipeline_mode<synchronous>, transform_indices = @transform_9, window_bounds = array<i64: 512, 128>}, {pipeline_mode = #tpu.pipeline_mode<synchronous>, transform_indices = @transform_10, window_bounds = array<i64: 1, 128>}, {transform_indices = @transform_11, window_bounds = array<i64: 8, 128>}]} {
    %c0 = arith.constant 0 : index
    %c0_0 = arith.constant 0 : index
    %0 = vector.load %arg1[%c0, %c0_0] : memref<8x768xbf16, #tpu.memory_space<vmem>>, vector<8x768xbf16>
    %c0_1 = arith.constant 0 : index
    %c0_2 = arith.constant 0 : index
    %1 = vector.load %arg3[%c0_1, %c0_2] : memref<768x768xbf16, #tpu.memory_space<vmem>>, vector<768x768xbf16>
    %cst = arith.constant dense<0.000000e+00> : vector<8x768xf32>
    %2 = tpu.matmul %0, %1, %cst {dimension_numbers = #tpu.dot_dimension_numbers<[1], [0], [0], [1], [0, 0, 1, 1], [], []>} : vector<8x768xbf16>, vector<768x768xbf16>, vector<8x768xf32> -> vector<8x768xf32>
    %c0_3 = arith.constant 0 : index
    %c0_4 = arith.constant 0 : index
    %3 = vector.load %arg4[%c0_3, %c0_4] : memref<1x768xf32, #tpu.memory_space<vmem>>, vector<1x768xf32>
    %4 = vector.broadcast %3 : vector<1x768xf32> to vector<8x768xf32>
    %5 = arith.addf %2, %4 : vector<8x768xf32>
    %6 = arith.truncf %5 : vector<8x768xf32> to vector<8x768xbf16>
    %7 = math.tanh %6 : vector<8x768xbf16>
    %c0_5 = arith.constant 0 : index
    %c0_6 = arith.constant 0 : index
    %8 = vector.load %arg5[%c0_5, %c0_6] : memref<768x768xbf16, #tpu.memory_space<vmem>>, vector<768x768xbf16>
    %cst_7 = arith.constant dense<0.000000e+00> : vector<8x768xf32>
    %9 = tpu.matmul %7, %8, %cst_7 {dimension_numbers = #tpu.dot_dimension_numbers<[1], [0], [0], [1], [0, 0, 1, 1], [], []>} : vector<8x768xbf16>, vector<768x768xbf16>, vector<8x768xf32> -> vector<8x768xf32>
    %c0_8 = arith.constant 0 : index
    %c0_9 = arith.constant 0 : index
    %10 = vector.load %arg2[%c0_8, %c0_9] : memref<8x8xbf16, #tpu.memory_space<vmem>>, vector<8x8xbf16>
    %c0_10 = arith.constant 0 : index
    %c0_11 = arith.constant 0 : index
    %11 = vector.load %arg6[%c0_10, %c0_11] : memref<8x768xbf16, #tpu.memory_space<vmem>>, vector<8x768xbf16>
    %cst_12 = arith.constant dense<0.000000e+00> : vector<8x768xf32>
    %12 = tpu.matmul %10, %11, %cst_12 {dimension_numbers = #tpu.dot_dimension_numbers<[1], [0], [0], [1], [0, 0, 1, 1], [], []>} : vector<8x8xbf16>, vector<8x768xbf16>, vector<8x768xf32> -> vector<8x768xf32>
    %13 = arith.addf %9, %12 : vector<8x768xf32>
    %c0_13 = arith.constant 0 : index
    %c0_14 = arith.constant 0 : index
    %14 = vector.load %arg7[%c0_13, %c0_14] : memref<1x768xf32, #tpu.memory_space<vmem>>, vector<1x768xf32>
    %15 = vector.broadcast %14 : vector<1x768xf32> to vector<8x768xf32>
    %16 = arith.addf %13, %15 : vector<8x768xf32>
    %cst_15 = arith.constant 0.000000e+00 : f32
    %17 = vector.broadcast %cst_15 : f32 to vector<8x768xf32>
    %18 = arith.maximumf %16, %17 : vector<8x768xf32>
    %19 = arith.truncf %18 : vector<8x768xf32> to vector<8x768xbf16>
    %c0_16 = arith.constant 0 : index
    %c0_17 = arith.constant 0 : index
    %20 = vector.load %arg8[%c0_16, %c0_17] : memref<768x512xbf16, #tpu.memory_space<vmem>>, vector<768x512xbf16>
    %cst_18 = arith.constant dense<0.000000e+00> : vector<8x512xf32>
    %21 = tpu.matmul %19, %20, %cst_18 {dimension_numbers = #tpu.dot_dimension_numbers<[1], [0], [0], [1], [0, 0, 1, 1], [], []>} : vector<8x768xbf16>, vector<768x512xbf16>, vector<8x512xf32> -> vector<8x512xf32>
    %c0_19 = arith.constant 0 : index
    %c0_20 = arith.constant 0 : index
    %22 = vector.load %arg9[%c0_19, %c0_20] : memref<1x512xf32, #tpu.memory_space<vmem>>, vector<1x512xf32>
    %23 = vector.broadcast %22 : vector<1x512xf32> to vector<8x512xf32>
    %24 = arith.addf %21, %23 : vector<8x512xf32>
    %cst_21 = arith.constant 0.000000e+00 : f32
    %25 = vector.broadcast %cst_21 : f32 to vector<8x512xf32>
    %26 = arith.maximumf %24, %25 : vector<8x512xf32>
    %27 = arith.truncf %26 : vector<8x512xf32> to vector<8x512xbf16>
    %c0_22 = arith.constant 0 : index
    %c0_23 = arith.constant 0 : index
    %28 = vector.load %arg10[%c0_22, %c0_23] : memref<512x128xbf16, #tpu.memory_space<vmem>>, vector<512x128xbf16>
    %cst_24 = arith.constant dense<0.000000e+00> : vector<8x128xf32>
    %29 = tpu.matmul %27, %28, %cst_24 {dimension_numbers = #tpu.dot_dimension_numbers<[1], [0], [0], [1], [0, 0, 1, 1], [], []>} : vector<8x512xbf16>, vector<512x128xbf16>, vector<8x128xf32> -> vector<8x128xf32>
    %c0_25 = arith.constant 0 : index
    %c0_26 = arith.constant 0 : index
    %30 = vector.load %arg11[%c0_25, %c0_26] : memref<1x128xf32, #tpu.memory_space<vmem>>, vector<1x128xf32>
    %31 = vector.broadcast %30 : vector<1x128xf32> to vector<8x128xf32>
    %32 = arith.addf %29, %31 : vector<8x128xf32>
    %cst_27 = arith.constant dense<0xFF800000> : vector<8xf32>
    %33 = vector.multi_reduction <maximumf>, %32, %cst_27 [1] : vector<8x128xf32> to vector<8xf32>
    %34 = vector.shape_cast %33 : vector<8xf32> to vector<8x1xf32>
    %35 = vector.broadcast %34 : vector<8x1xf32> to vector<8x128xf32>
    %36 = arith.subf %32, %35 : vector<8x128xf32>
    %37 = math.exp %36 : vector<8x128xf32>
    %cst_28 = arith.constant dense<0.000000e+00> : vector<8xf32>
    %38 = vector.multi_reduction <add>, %37, %cst_28 [1] : vector<8x128xf32> to vector<8xf32>
    %39 = vector.shape_cast %38 : vector<8xf32> to vector<8x1xf32>
    %40 = math.log %39 : vector<8x1xf32>
    %41 = vector.broadcast %40 : vector<8x1xf32> to vector<8x128xf32>
    %42 = arith.subf %36, %41 : vector<8x128xf32>
    %c0_29 = arith.constant 0 : index
    %c0_30 = arith.constant 0 : index
    %43 = vector.load %arg12[%c0_29, %c0_30] : memref<8x128xf32, #tpu.memory_space<vmem>>, vector<8x128xf32>
    tpu.vector_store %arg12[%c0_29, %c0_30], %42 {strides = array<i32>} : memref<8x128xf32, #tpu.memory_space<vmem>>, vector<8x128xf32>,
    return
  }
  func.func @transform_0(%arg0: i32) -> (i32, i32) {
    %c0_i32 = arith.constant 0 : i32
    %c0_i32_0 = arith.constant 0 : i32
    return %arg0, %c0_i32 : i32, i32
  }
  func.func @transform_1(%arg0: i32) -> (i32, i32) {
    %c0_i32 = arith.constant 0 : i32
    %c0_i32_0 = arith.constant 0 : i32
    return %arg0, %c0_i32 : i32, i32
  }
  func.func @transform_2(%arg0: i32) -> (i32, i32) {
    %c0_i32 = arith.constant 0 : i32
    %c0_i32_0 = arith.constant 0 : i32
    %c0_i32_1 = arith.constant 0 : i32
    return %c0_i32, %c0_i32_0 : i32, i32
  }
  func.func @transform_3(%arg0: i32) -> (i32, i32) {
    %c0_i32 = arith.constant 0 : i32
    %c0_i32_0 = arith.constant 0 : i32
    %c0_i32_1 = arith.constant 0 : i32
    return %c0_i32, %c0_i32_0 : i32, i32
  }
  func.func @transform_4(%arg0: i32) -> (i32, i32) {
    %c0_i32 = arith.constant 0 : i32
    %c0_i32_0 = arith.constant 0 : i32
    %c0_i32_1 = arith.constant 0 : i32
    return %c0_i32, %c0_i32_0 : i32, i32
  }
  func.func @transform_5(%arg0: i32) -> (i32, i32) {
    %c0_i32 = arith.constant 0 : i32
    %c0_i32_0 = arith.constant 0 : i32
    %c0_i32_1 = arith.constant 0 : i32
    return %c0_i32, %c0_i32_0 : i32, i32
  }
  func.func @transform_6(%arg0: i32) -> (i32, i32) {
    %c0_i32 = arith.constant 0 : i32
    %c0_i32_0 = arith.constant 0 : i32
    %c0_i32_1 = arith.constant 0 : i32
    return %c0_i32, %c0_i32_0 : i32, i32
  }
  func.func @transform_7(%arg0: i32) -> (i32, i32) {
    %c0_i32 = arith.constant 0 : i32
    %c0_i32_0 = arith.constant 0 : i32
    %c0_i32_1 = arith.constant 0 : i32
    return %c0_i32, %c0_i32_0 : i32, i32
  }
  func.func @transform_8(%arg0: i32) -> (i32, i32) {
    %c0_i32 = arith.constant 0 : i32
    %c0_i32_0 = arith.constant 0 : i32
    %c0_i32_1 = arith.constant 0 : i32
    return %c0_i32, %c0_i32_0 : i32, i32
  }
  func.func @transform_9(%arg0: i32) -> (i32, i32) {
    %c0_i32 = arith.constant 0 : i32
    %c0_i32_0 = arith.constant 0 : i32
    %c0_i32_1 = arith.constant 0 : i32
    return %c0_i32, %c0_i32_0 : i32, i32
  }
  func.func @transform_10(%arg0: i32) -> (i32, i32) {
    %c0_i32 = arith.constant 0 : i32
    %c0_i32_0 = arith.constant 0 : i32
    %c0_i32_1 = arith.constant 0 : i32
    return %c0_i32, %c0_i32_0 : i32, i32
  }
  func.func @transform_11(%arg0: i32) -> (i32, i32) {
    %c0_i32 = arith.constant 0 : i32
    %c0_i32_0 = arith.constant 0 : i32
    return %arg0, %c0_i32 : i32, i32
  }
}

</mosaic_0001>

<llo_original>
// kernel: tpu_custom_call.1
$region0: #{tpu_custom_call.1}
  #allocation0 [shape = 'u32[]', space=smem, size = 0x4, offset = 0x4, fixed_abs, tag = 'smem constant byte address 0x4 - core index']
  #allocation1 [shape = 'u32[144,128]{1,0:T(1,128)}', space=vmem, size = 0x12000, scoped, tag = 'internal scratch']
  %s0 = inlined_call_operand.hbm [shape: f32[8,128], index: 0, kind: input, shape index: {}]
  %s1 = inlined_call_operand.hbm [shape: f32[16,128], index: 1, kind: output, shape index: {}]
  %s2 = sld [smem:[#allocation0]]
  $region41: #{tpu_custom_call.1} parent=0
    _
  %s4 = ssub.s32 1, %s2
  %s5 = scalar_select 0, %s4, %s2
  $region1: #{tpu_custom_call.1} parent=0
    #allocation2 [shape = 'u8[4096]{0}', space=vmem, size = 0x1000, scoped, tag = 'input window, operand 0, single buffered']
    #allocation3 [shape = 's32[2]{0}', space=sflag, size = 0x8, scoped, tag = 'scoped memory for tpu_custom_call.1']
    #allocation4 [shape = 's32[2]{0}', space=sflag, size = 0x8, scoped, tag = 'scoped memory for tpu_custom_call.1']
    #allocation5 [shape = 'u8[8192]{0}', space=vmem, size = 0x2000, scoped, tag = 'output window, operand 0']
    %6 = vsyncpa [#allocation3], 0
    %7 = vsyncpa [#allocation4], 0
    %s8 = scalar_lea.sflag [#allocation4], 1
    %9 = vsyncpa %s8, 0
    loop: start=0, step=1, limit=4
    $region2: #{tpu_custom_call.1} parent=1 // loop_pre_header
      _
    $region3: #{tpu_custom_call.1} parent=1 // loop_header
      %s11 = sphi 0, %s15
      %p12 = scmp.ge.s32.totalorder %s11, 4
      %s19 = sphi 0, %s19
      %s21 = sphi 0, %s19
      %s22 = sphi 0, %s21
      %s36 = sphi 0, %s22
      %s42 = sphi 0, %s44
      %s45 = sphi 0, %s42
      %s46 = sphi 0, %s45
      %s62 = sphi 0, %s46
    $region4: #{tpu_custom_call.1} parent=1 // loop_header_branch
      %14 = sbr.rel (%p12) target = $region8
    $region5: #{tpu_custom_call.1} parent=1 // loop_body
      %s16 = ssub.s32 %s11, 1
      %s17 = ssub.s32 %s11, 2
      %s18 = sadd.s32 %s11, 1
      %s20 = sadd.s32 %s19, 1
      %p23 = scmp.eq.s32.totalorder %s11, 1
      %p24 = scmp.ne.s32.totalorder %s19, %s21
      %p25 = scmp.eq.s32.totalorder %s11, 0
      %p26 = por %p24, %p25
      %p27 = scmp.ne.s32.totalorder %s19, %s21
      %p28 = scmp.eq.s32.totalorder %s16, 1
      %p29 = por %p27, %p28
      %p30 = scmp.ne.s32.totalorder %s21, %s22
      %p31 = scmp.eq.s32.totalorder %s16, 0
      %p32 = por %p30, %p31
      %p33 = scmp.ne.s32.totalorder %s21, %s22
      %p34 = scmp.eq.s32.totalorder %s17, 1
      %p35 = por %p33, %p34
      %p37 = scmp.ne.s32.totalorder %s22, %s36
      %p38 = scmp.eq.s32.totalorder %s17, 0
      %p39 = por %p37, %p38
      %s40 = ssub.s32 %s11, %s18
      %p41 = scmp.eq.s32.totalorder %s40, 0
      %s43 = sadd.s32 %s42, 1
      %s44 = scalar_select %p41, %s42, %s43
      %p47 = pneg %p41
      %p48 = scmp.eq.s32.totalorder %s11, 1
      %p49 = por %p47, %p48
      %p50 = scmp.ne.s32.totalorder %s42, %s45
      %p51 = scmp.eq.s32.totalorder %s11, 0
      %p52 = por %p50, %p51
      %p53 = scmp.ne.s32.totalorder %s42, %s45
      %p54 = scmp.eq.s32.totalorder %s16, 1
      %p55 = por %p53, %p54
      %p56 = scmp.ne.s32.totalorder %s45, %s46
      %p57 = scmp.eq.s32.totalorder %s16, 0
      %p58 = por %p56, %p57
      %p59 = scmp.ne.s32.totalorder %s45, %s46
      %p60 = scmp.eq.s32.totalorder %s17, 1
      %p61 = por %p59, %p60
      %p63 = scmp.ne.s32.totalorder %s46, %s62
      %p64 = scmp.eq.s32.totalorder %s17, 0
      %p65 = por %p63, %p64
      %p66 = scmp.le.s32.totalorder 1, %s11
      %p67 = scmp.lt.s32.totalorder %s11, 3
      %p68 = pnand %p66, %p67
      %p69 = pneg %p68
      // Predicated region
      $region9: #{tpu_custom_call.1} parent=5 // pred_check
        _
      $region10: #{tpu_custom_call.1} parent=5 // pred_check_branch
        %71 = sbr.rel (%p68) target = $region12
      $region11: #{tpu_custom_call.1} parent=5 // pred_region
        %s72 = ssub.s32 %s11, 1
        // Predicated region
        $region13: #{tpu_custom_call.1} parent=11 // pred_check
          %p73 = pneg %p32
        $region14: #{tpu_custom_call.1} parent=11 // pred_check_branch
          %75 = sbr.rel (%p73) target = $region16
        $region15: #{tpu_custom_call.1} parent=11 // pred_region
          %s77 = ssub.s32 128, 128
          %78 = vsyncadd [#allocation3], %s77
          %s80 = sshll.u32 [#allocation2], 4
          %s81 = int_to_ptr.vmem [resolvable:$true] %s80
          %83 = dma.hbm_to_vmem [thread:$0]  %s0, 128, %s81, [#allocation3]
        $region16: #{tpu_custom_call.1} parent=11 // pred_fallthru
          _
      $region12: #{tpu_custom_call.1} parent=5 // pred_fallthru
        _
      %p84 = scmp.lt.s32.totalorder %s11, 2
      // Predicated region
      $region17: #{tpu_custom_call.1} parent=5 // pred_check
        %p85 = pneg %p84
      $region18: #{tpu_custom_call.1} parent=5 // pred_check_branch
        %87 = sbr.rel (%p85) target = $region20
      $region19: #{tpu_custom_call.1} parent=5 // pred_region
        _
      $region20: #{tpu_custom_call.1} parent=5 // pred_fallthru
        _
      %p88 = scmp.le.s32.totalorder 1, %s11
      %p89 = scmp.lt.s32.totalorder %s11, 3
      %p90 = pnand %p88, %p89
      %p91 = pneg %p90
      // Predicated region
      $region21: #{tpu_custom_call.1} parent=5 // pred_check
        _
      $region22: #{tpu_custom_call.1} parent=5 // pred_check_branch
        %93 = sbr.rel (%p90) target = $region24
      $region23: #{tpu_custom_call.1} parent=5 // pred_region
        %s94 = ssub.s32 %s11, 1
        // Predicated region
        $region25: #{tpu_custom_call.1} parent=23 // pred_check
          %p95 = pneg %p32
        $region26: #{tpu_custom_call.1} parent=23 // pred_check_branch
          %97 = sbr.rel (%p95) target = $region28
        $region27: #{tpu_custom_call.1} parent=23 // pred_region
          %98 = dma.done [#allocation3], 128
        $region28: #{tpu_custom_call.1} parent=23 // pred_fallthru
          _
        %p99 = pneg %p32
        %p100 = pneg %p29
        %p101 = pneg %p58
        %p102 = pneg %p55
        %s103 = sand.u32 %s45, 1
        %s104 = scalar_lea.sflag [#allocation4], %s103
        %s105 = sand.u32 %s45, 1
        %s106 = smul.addr %s105, 8
        %s107 = scalar_lea.vmem [#allocation5], %s106
        %v108 = vld [vmem:[#allocation2] sm:$0xff]
        %109 = vst [vmem:[%s107] sm:$0xff] %v108
        %s110 = sand.u32 %s45, 1
        %s111 = scalar_lea.sflag [#allocation4], %s110
        %s112 = sand.u32 %s45, 1
        %s113 = smul.addr %s112, 8
        %s114 = scalar_lea.vmem [#allocation5], %s113
        // Predicated region
        $region29: #{tpu_custom_call.1} parent=23 // pred_check
          %p115 = pneg %p55
        $region30: #{tpu_custom_call.1} parent=23 // pred_check_branch
          %117 = sbr.rel (%p115) target = $region32
        $region31: #{tpu_custom_call.1} parent=23 // pred_region
          %s119 = ssub.s32 128, 128
          %120 = vsyncadd %s111, %s119
          %s121 = smul.addr %s16, 128
          %s122 = scalar_lea.hbm %s1, %s121
          %s124 = sshll.u32 %s114, 4
          %s125 = int_to_ptr.vmem [resolvable:$true] %s124
          %127 = dma.vmem_to_hbm [thread:$0]  %s125, 128, %s122, %s111
        $region32: #{tpu_custom_call.1} parent=23 // pred_fallthru
          _
      $region24: #{tpu_custom_call.1} parent=5 // pred_fallthru
        _
      %p128 = scmp.le.s32.totalorder 2, %s11
      // Predicated region
      $region33: #{tpu_custom_call.1} parent=5 // pred_check
        %p129 = pneg %p128
      $region34: #{tpu_custom_call.1} parent=5 // pred_check_branch
        %131 = sbr.rel (%p129) target = $region36
      $region35: #{tpu_custom_call.1} parent=5 // pred_region
        %s132 = ssub.s32 %s11, 2
        // Predicated region
        $region37: #{tpu_custom_call.1} parent=35 // pred_check
          %p133 = pneg %p61
        $region38: #{tpu_custom_call.1} parent=35 // pred_check_branch
          %135 = sbr.rel (%p133) target = $region40
        $region39: #{tpu_custom_call.1} parent=35 // pred_region
          %s136 = sand.u32 %s46, 1
          %s137 = scalar_lea.sflag [#allocation4], %s136
          %s138 = sand.u32 %s46, 1
          %s139 = smul.addr %s138, 8
          %s140 = scalar_lea.vmem [#allocation5], %s139
          %141 = dma.done %s137, 128
        $region40: #{tpu_custom_call.1} parent=35 // pred_fallthru
          _
      $region36: #{tpu_custom_call.1} parent=5 // pred_fallthru
        _
    $region6: #{tpu_custom_call.1} parent=1 // loop_footer
      %s15 = sadd.s32 1, %s11
    $region7: #{tpu_custom_call.1} parent=1 // loop_footer_branch
      %10 = sbr.rel target = $region3
    $region8: #{tpu_custom_call.1} parent=1 // loop_exit
      _
    %142 = vsyncpa [#allocation3], 1
    %s143 = scalar_lea.sflag [#allocation3], 1
    %144 = vsyncpa %s143, 1
    %145 = vsyncpa [#allocation4], 1
    %s146 = scalar_lea.sflag [#allocation4], 1
    %147 = vsyncpa %s146, 1

// kernel: tpu_custom_call.1
$region0: #{tpu_custom_call.1}
  #allocation0 [shape = 'u32[]', space=smem, size = 0x4, offset = 0x4, fixed_abs, tag = 'smem constant byte address 0x4 - core index']
  #allocation1 [shape = 'u32[144,128]{1,0:T(1,128)}', space=vmem, size = 0x12000, scoped, tag = 'internal scratch']
  %s0 = inlined_call_operand.hbm [shape: bf16[8,768], index: 0, kind: input, shape index: {}]
  %s1 = inlined_call_operand.hbm [shape: bf16[8,8], index: 1, kind: input, shape index: {}]
  %s2 = inlined_call_operand.hbm [shape: bf16[768,768], index: 2, kind: input, shape index: {}]
  %s3 = inlined_call_operand.hbm [shape: f32[1,768], index: 3, kind: input, shape index: {}]
  %s4 = inlined_call_operand.hbm [shape: bf16[768,768], index: 4, kind: input, shape index: {}]
  %s5 = inlined_call_operand.hbm [shape: bf16[8,768], index: 5, kind: input, shape index: {}]
  %s6 = inlined_call_operand.hbm [shape: f32[1,768], index: 6, kind: input, shape index: {}]
  %s7 = inlined_call_operand.hbm [shape: bf16[768,512], index: 7, kind: input, shape index: {}]
  %s8 = inlined_call_operand.hbm [shape: f32[1,512], index: 8, kind: input, shape index: {}]
  %s9 = inlined_call_operand.hbm [shape: bf16[512,128], index: 9, kind: input, shape index: {}]
  %s10 = inlined_call_operand.hbm [shape: f32[1,128], index: 10, kind: input, shape index: {}]
  %s11 = inlined_call_operand.hbm [shape: f32[8,128], index: 11, kind: output, shape index: {}]
  %s12 = sld [smem:[#allocation0]]
  $region98: #{tpu_custom_call.1} parent=0
    _
  %s14 = ssub.s32 1, %s12
  %s15 = scalar_select 0, %s14, %s12
  $region1: #{tpu_custom_call.1} parent=0
    #allocation2 [shape = 'u8[12288]{0}', space=vmem, size = 0x3000, scoped, tag = 'input window, operand 0, single buffered']
    #allocation3 [shape = 's32[1]{0}', space=sflag, size = 0x4, scoped, tag = 'scoped memory for tpu_custom_call.1']
    #allocation4 [shape = 's32[1]{0}', space=sflag, size = 0x4, scoped, tag = 'scoped memory for tpu_custom_call.1']
    #allocation5 [shape = 'u8[2048]{0}', space=vmem, size = 0x800, scoped, tag = 'input window, operand 1, single buffered']
    #allocation6 [shape = 's32[1]{0}', space=sflag, size = 0x4, scoped, tag = 'scoped memory for tpu_custom_call.1']
    #allocation7 [shape = 'u8[1179648]{0}', space=vmem, size = 0x120000, scoped, tag = 'input window, operand 2, single buffered']
    #allocation8 [shape = 'u8[3072]{0}', space=vmem, size = 0xc00, scoped, tag = 'input window, operand 3, single buffered']
    #allocation9 [shape = 's32[1]{0}', space=sflag, size = 0x4, scoped, tag = 'scoped memory for tpu_custom_call.1']
    #allocation10 [shape = 'u8[1179648]{0}', space=vmem, size = 0x120000, scoped, tag = 'input window, operand 4, single buffered']
    #allocation11 [shape = 'u8[12288]{0}', space=vmem, size = 0x3000, scoped, tag = 'input window, operand 5, single buffered']
    #allocation12 [shape = 's32[1]{0}', space=sflag, size = 0x4, scoped, tag = 'scoped memory for tpu_custom_call.1']
    #allocation13 [shape = 'u8[3072]{0}', space=vmem, size = 0xc00, scoped, tag = 'input window, operand 6, single buffered']
    #allocation14 [shape = 'u8[786432]{0}', space=vmem, size = 0xc0000, scoped, tag = 'input window, operand 7, single buffered']
    #allocation15 [shape = 's32[1]{0}', space=sflag, size = 0x4, scoped, tag = 'scoped memory for tpu_custom_call.1']
    #allocation16 [shape = 'u8[2048]{0}', space=vmem, size = 0x800, scoped, tag = 'input window, operand 8, single buffered']
    #allocation17 [shape = 'u8[131072]{0}', space=vmem, size = 0x20000, scoped, tag = 'input window, operand 9, single buffered']
    #allocation18 [shape = 's32[1]{0}', space=sflag, size = 0x4, scoped, tag = 'scoped memory for tpu_custom_call.1']
    #allocation19 [shape = 'u8[512]{0}', space=vmem, size = 0x400, scoped, tag = 'input window, operand 10, single buffered']
    #allocation20 [shape = 'u8[4096]{0}', space=vmem, size = 0x1000, scoped, tag = 'output window, operand 0, single buffered']
    %16 = vsyncpa [#allocation3], 0
    %17 = vsyncpa [#allocation6], 0
    %18 = vsyncpa [#allocation9], 0
    %19 = vsyncpa [#allocation12], 0
    %20 = vsyncpa [#allocation15], 0
    %21 = vsyncpa [#allocation18], 0
    %22 = vsyncpa [#allocation4], 0
    // Predicated region
    $region2: #{tpu_custom_call.1} parent=1 // pred_check
      _
    $region3: #{tpu_custom_call.1} parent=1 // pred_check_branch
      %24 = sbr.rel (0) target = $region5
    $region4: #{tpu_custom_call.1} parent=1 // pred_region
      %s26 = ssub.s32 384, 384
      %27 = vsyncadd [#allocation3], %s26
      %s29 = sshll.u32 [#allocation2], 4
      %s30 = int_to_ptr.vmem [resolvable:$true] %s29
      %32 = dma.hbm_to_vmem [thread:$0]  %s0, 384, %s30, [#allocation3]
    $region5: #{tpu_custom_call.1} parent=1 // pred_fallthru
      _
    // Predicated region
    $region6: #{tpu_custom_call.1} parent=1 // pred_check
      _
    $region7: #{tpu_custom_call.1} parent=1 // pred_check_branch
      %34 = sbr.rel (0) target = $region9
    $region8: #{tpu_custom_call.1} parent=1 // pred_region
      %s36 = ssub.s32 64, 64
      %37 = vsyncadd [#allocation6], %s36
      %s39 = sshll.u32 [#allocation5], 4
      %s40 = int_to_ptr.vmem [resolvable:$true] %s39
      %42 = dma.hbm_to_vmem [thread:$0]  %s1, 64, %s40, [#allocation6]
    $region9: #{tpu_custom_call.1} parent=1 // pred_fallthru
      _
    // Predicated region
    $region10: #{tpu_custom_call.1} parent=1 // pred_check
      _
    $region11: #{tpu_custom_call.1} parent=1 // pred_check_branch
      %44 = sbr.rel (0) target = $region13
    $region12: #{tpu_custom_call.1} parent=1 // pred_region
      %s46 = ssub.s32 36864, 36864
      %47 = vsyncadd [#allocation6], %s46
      %s48 = sshll.u32 [#allocation7], 4
      %s49 = int_to_ptr.vmem [resolvable:$true] %s48
      %54 = dma.hbm_to_vmem [thread:$0]  %s2, 36864, %s49, [#allocation6], 384, 384, 24
    $region13: #{tpu_custom_call.1} parent=1 // pred_fallthru
      _
    // Predicated region
    $region14: #{tpu_custom_call.1} parent=1 // pred_check
      _
    $region15: #{tpu_custom_call.1} parent=1 // pred_check_branch
      %56 = sbr.rel (0) target = $region17
    $region16: #{tpu_custom_call.1} parent=1 // pred_region
      %s58 = ssub.s32 96, 96
      %59 = vsyncadd [#allocation9], %s58
      %s61 = sshll.u32 [#allocation8], 4
      %s62 = int_to_ptr.vmem [resolvable:$true] %s61
      %64 = dma.hbm_to_vmem [thread:$0]  %s3, 96, %s62, [#allocation9]
    $region17: #{tpu_custom_call.1} parent=1 // pred_fallthru
      _
    // Predicated region
    $region18: #{tpu_custom_call.1} parent=1 // pred_check
      _
    $region19: #{tpu_custom_call.1} parent=1 // pred_check_branch
      %66 = sbr.rel (0) target = $region21
    $region20: #{tpu_custom_call.1} parent=1 // pred_region
      %s68 = ssub.s32 36864, 36864
      %69 = vsyncadd [#allocation9], %s68
      %s70 = sshll.u32 [#allocation10], 4
      %s71 = int_to_ptr.vmem [resolvable:$true] %s70
      %76 = dma.hbm_to_vmem [thread:$0]  %s4, 36864, %s71, [#allocation9], 384, 384, 24
    $region21: #{tpu_custom_call.1} parent=1 // pred_fallthru
      _
    // Predicated region
    $region22: #{tpu_custom_call.1} parent=1 // pred_check
      _
    $region23: #{tpu_custom_call.1} parent=1 // pred_check_branch
      %78 = sbr.rel (0) target = $region25
    $region24: #{tpu_custom_call.1} parent=1 // pred_region
      %s80 = ssub.s32 384, 384
      %81 = vsyncadd [#allocation12], %s80
      %s83 = sshll.u32 [#allocation11], 4
      %s84 = int_to_ptr.vmem [resolvable:$true] %s83
      %86 = dma.hbm_to_vmem [thread:$0]  %s5, 384, %s84, [#allocation12]
    $region25: #{tpu_custom_call.1} parent=1 // pred_fallthru
      _
    // Predicated region
    $region26: #{tpu_custom_call.1} parent=1 // pred_check
      _
    $region27: #{tpu_custom_call.1} parent=1 // pred_check_branch
      %88 = sbr.rel (0) target = $region29
    $region28: #{tpu_custom_call.1} parent=1 // pred_region
      %s90 = ssub.s32 96, 96
      %91 = vsyncadd [#allocation12], %s90
      %s93 = sshll.u32 [#allocation13], 4
      %s94 = int_to_ptr.vmem [resolvable:$true] %s93
      %96 = dma.hbm_to_vmem [thread:$0]  %s6, 96, %s94, [#allocation12]
    $region29: #{tpu_custom_call.1} parent=1 // pred_fallthru
      _
    // Predicated region
    $region30: #{tpu_custom_call.1} parent=1 // pred_check
      _
    $region31: #{tpu_custom_call.1} parent=1 // pred_check_branch
      %98 = sbr.rel (0) target = $region33
    $region32: #{tpu_custom_call.1} parent=1 // pred_region
      %s100 = ssub.s32 24576, 24576
      %101 = vsyncadd [#allocation15], %s100
      %s102 = sshll.u32 [#allocation14], 4
      %s103 = int_to_ptr.vmem [resolvable:$true] %s102
      %108 = dma.hbm_to_vmem [thread:$0]  %s7, 24576, %s103, [#allocation15], 256, 256, 16
    $region33: #{tpu_custom_call.1} parent=1 // pred_fallthru
      _
    // Predicated region
    $region34: #{tpu_custom_call.1} parent=1 // pred_check
      _
    $region35: #{tpu_custom_call.1} parent=1 // pred_check_branch
      %110 = sbr.rel (0) target = $region37
    $region36: #{tpu_custom_call.1} parent=1 // pred_region
      %s112 = ssub.s32 64, 64
      %113 = vsyncadd [#allocation15], %s112
      %s115 = sshll.u32 [#allocation16], 4
      %s116 = int_to_ptr.vmem [resolvable:$true] %s115
      %118 = dma.hbm_to_vmem [thread:$0]  %s8, 64, %s116, [#allocation15]
    $region37: #{tpu_custom_call.1} parent=1 // pred_fallthru
      _
    // Predicated region
    $region38: #{tpu_custom_call.1} parent=1 // pred_check
      _
    $region39: #{tpu_custom_call.1} parent=1 // pred_check_branch
      %120 = sbr.rel (0) target = $region41
    $region40: #{tpu_custom_call.1} parent=1 // pred_region
      %s122 = ssub.s32 4096, 4096
      %123 = vsyncadd [#allocation18], %s122
      %s124 = sshll.u32 [#allocation17], 4
      %s125 = int_to_ptr.vmem [resolvable:$true] %s124
      %130 = dma.hbm_to_vmem [thread:$0]  %s9, 4096, %s125, [#allocation18], 64, 64, 4
    $region41: #{tpu_custom_call.1} parent=1 // pred_fallthru
      _
    // Predicated region
    $region42: #{tpu_custom_call.1} parent=1 // pred_check
      _
    $region43: #{tpu_custom_call.1} parent=1 // pred_check_branch
      %132 = sbr.rel (0) target = $region45
    $region44: #{tpu_custom_call.1} parent=1 // pred_region
      %s134 = ssub.s32 16, 16
      %135 = vsyncadd [#allocation18], %s134
      %s137 = sshll.u32 [#allocation19], 4
      %s138 = int_to_ptr.vmem [resolvable:$true] %s137
      %140 = dma.hbm_to_vmem [thread:$0]  %s10, 16, %s138, [#allocation18]
    $region45: #{tpu_custom_call.1} parent=1 // pred_fallthru
      _
    // Predicated region
    $region46: #{tpu_custom_call.1} parent=1 // pred_check
      _
    $region47: #{tpu_custom_call.1} parent=1 // pred_check_branch
      %142 = sbr.rel (0) target = $region49
    $region48: #{tpu_custom_call.1} parent=1 // pred_region
      %143 = dma.done [#allocation3], 384
    $region49: #{tpu_custom_call.1} parent=1 // pred_fallthru
      _
    // Predicated region
    $region50: #{tpu_custom_call.1} parent=1 // pred_check
      _
    $region51: #{tpu_custom_call.1} parent=1 // pred_check_branch
      %145 = sbr.rel (0) target = $region53
    $region52: #{tpu_custom_call.1} parent=1 // pred_region
      %146 = dma.done [#allocation6], 64
    $region53: #{tpu_custom_call.1} parent=1 // pred_fallthru
      _
    // Predicated region
    $region54: #{tpu_custom_call.1} parent=1 // pred_check
      _
    $region55: #{tpu_custom_call.1} parent=1 // pred_check_branch
      %148 = sbr.rel (0) target = $region57
    $region56: #{tpu_custom_call.1} parent=1 // pred_region
      %149 = dma.done [#allocation6], 36864
    $region57: #{tpu_custom_call.1} parent=1 // pred_fallthru
      _
    // Predicated region
    $region58: #{tpu_custom_call.1} parent=1 // pred_check
      _
    $region59: #{tpu_custom_call.1} parent=1 // pred_check_branch
      %151 = sbr.rel (0) target = $region61
    $region60: #{tpu_custom_call.1} parent=1 // pred_region
      %152 = dma.done [#allocation9], 96
    $region61: #{tpu_custom_call.1} parent=1 // pred_fallthru
      _
    // Predicated region
    $region62: #{tpu_custom_call.1} parent=1 // pred_check
      _
    $region63: #{tpu_custom_call.1} parent=1 // pred_check_branch
      %154 = sbr.rel (0) target = $region65
    $region64: #{tpu_custom_call.1} parent=1 // pred_region
      %155 = dma.done [#allocation9], 36864
    $region65: #{tpu_custom_call.1} parent=1 // pred_fallthru
      _
    // Predicated region
    $region66: #{tpu_custom_call.1} parent=1 // pred_check
      _
    $region67: #{tpu_custom_call.1} parent=1 // pred_check_branch
      %157 = sbr.rel (0) target = $region69
    $region68: #{tpu_custom_call.1} parent=1 // pred_region
      %158 = dma.done [#allocation12], 384
    $region69: #{tpu_custom_call.1} parent=1 // pred_fallthru
      _
    // Predicated region
    $region70: #{tpu_custom_call.1} parent=1 // pred_check
      _
    $region71: #{tpu_custom_call.1} parent=1 // pred_check_branch
      %160 = sbr.rel (0) target = $region73
    $region72: #{tpu_custom_call.1} parent=1 // pred_region
      %161 = dma.done [#allocation12], 96
    $region73: #{tpu_custom_call.1} parent=1 // pred_fallthru
      _
    // Predicated region
    $region74: #{tpu_custom_call.1} parent=1 // pred_check
      _
    $region75: #{tpu_custom_call.1} parent=1 // pred_check_branch
      %163 = sbr.rel (0) target = $region77
    $region76: #{tpu_custom_call.1} parent=1 // pred_region
      %164 = dma.done [#allocation15], 24576
    $region77: #{tpu_custom_call.1} parent=1 // pred_fallthru
      _
    // Predicated region
    $region78: #{tpu_custom_call.1} parent=1 // pred_check
      _
    $region79: #{tpu_custom_call.1} parent=1 // pred_check_branch
      %166 = sbr.rel (0) target = $region81
    $region80: #{tpu_custom_call.1} parent=1 // pred_region
      %167 = dma.done [#allocation15], 64
    $region81: #{tpu_custom_call.1} parent=1 // pred_fallthru
      _
    // Predicated region
    $region82: #{tpu_custom_call.1} parent=1 // pred_check
      _
    $region83: #{tpu_custom_call.1} parent=1 // pred_check_branch
      %169 = sbr.rel (0) target = $region85
    $region84: #{tpu_custom_call.1} parent=1 // pred_region
      %170 = dma.done [#allocation18], 4096
    $region85: #{tpu_custom_call.1} parent=1 // pred_fallthru
      _
    // Predicated region
    $region86: #{tpu_custom_call.1} parent=1 // pred_check
      _
    $region87: #{tpu_custom_call.1} parent=1 // pred_check_branch
      %172 = sbr.rel (0) target = $region89
    $region88: #{tpu_custom_call.1} parent=1 // pred_region
      %173 = dma.done [#allocation18], 16
    $region89: #{tpu_custom_call.1} parent=1 // pred_fallthru
      _
    %v175 = vld [vmem:[#allocation2] sm:$0xff]
    %v176 = vld [vmem:[#allocation2 + $0x8] sm:$0xff]
    %v177 = vld [vmem:[#allocation2 + $0x10] sm:$0xff]
    %v178 = vld [vmem:[#allocation7] sm:$0xff]
    %v179 = vld [vmem:[#allocation7 + $0x8] sm:$0xff]
    %v180 = vld [vmem:[#allocation7 + $0x10] sm:$0xff]
    %v181 = vld [vmem:[#allocation7 + $0x18] sm:$0xff]
    %v182 = vld [vmem:[#allocation7 + $0x20] sm:$0xff]
    %v183 = vld [vmem:[#allocation7 + $0x28] sm:$0xff]
    %v184 = vld [vmem:[#allocation7 + $0x30] sm:$0xff]
    %v185 = vld [vmem:[#allocation7 + $0x38] sm:$0xff]
    %v186 = vld [vmem:[#allocation7 + $0x40] sm:$0xff]
    %v187 = vld [vmem:[#allocation7 + $0x48] sm:$0xff]
    %v188 = vld [vmem:[#allocation7 + $0x50] sm:$0xff]
    %v189 = vld [vmem:[#allocation7 + $0x58] sm:$0xff]
    %v190 = vld [vmem:[#allocation7 + $0x60] sm:$0xff]
    %v191 = vld [vmem:[#allocation7 + $0x68] sm:$0xff]
    %v192 = vld [vmem:[#allocation7 + $0x70] sm:$0xff]
    %v193 = vld [vmem:[#allocation7 + $0x78] sm:$0xff]
    %v194 = vld [vmem:[#allocation7 + $0x80] sm:$0xff]
    %v195 = vld [vmem:[#allocation7 + $0x88] sm:$0xff]
    %v196 = vld [vmem:[#allocation7 + $0x90] sm:$0xff]
    %v197 = vld [vmem:[#allocation7 + $0x98] sm:$0xff]
    %v198 = vld [vmem:[#allocation7 + $0xa0] sm:$0xff]
    %v199 = vld [vmem:[#allocation7 + $0xa8] sm:$0xff]
    %v200 = vld [vmem:[#allocation7 + $0xb0] sm:$0xff]
    %v201 = vld [vmem:[#allocation7 + $0xb8] sm:$0xff]
    %v202 = vld [vmem:[#allocation7 + $0xc0] sm:$0xff]
    %v203 = vld [vmem:[#allocation7 + $0xc8] sm:$0xff]
    %v204 = vld [vmem:[#allocation7 + $0xd0] sm:$0xff]
    %v205 = vld [vmem:[#allocation7 + $0xd8] sm:$0xff]
    %v206 = vld [vmem:[#allocation7 + $0xe0] sm:$0xff]
    %v207 = vld [vmem:[#allocation7 + $0xe8] sm:$0xff]
    %v208 = vld [vmem:[#allocation7 + $0xf0] sm:$0xff]
    %v209 = vld [vmem:[#allocation7 + $0xf8] sm:$0xff]
    %v210 = vld [vmem:[#allocation7 + $0x100] sm:$0xff]
    %v211 = vld [vmem:[#allocation7 + $0x108] sm:$0xff]
    %v212 = vld [vmem:[#allocation7 + $0x110] sm:$0xff]
    %v213 = vld [vmem:[#allocation7 + $0x118] sm:$0xff]
    %v214 = vld [vmem:[#allocation7 + $0x120] sm:$0xff]
    %v215 = vld [vmem:[#allocation7 + $0x128] sm:$0xff]
    %v216 = vld [vmem:[#allocation7 + $0x130] sm:$0xff]
    %v217 = vld [vmem:[#allocation7 + $0x138] sm:$0xff]
    %v218 = vld [vmem:[#allocation7 + $0x140] sm:$0xff]
    %v219 = vld [vmem:[#allocation7 + $0x148] sm:$0xff]
    %v220 = vld [vmem:[#allocation7 + $0x150] sm:$0xff]
    %v221 = vld [vmem:[#allocation7 + $0x158] sm:$0xff]
    %v222 = vld [vmem:[#allocation7 + $0x160] sm:$0xff]
    %v223 = vld [vmem:[#allocation7 + $0x168] sm:$0xff]
    %v224 = vld [vmem:[#allocation7 + $0x170] sm:$0xff]
    %v225 = vld [vmem:[#allocation7 + $0x178] sm:$0xff]
    %v226 = vld [vmem:[#allocation7 + $0x180] sm:$0xff]
    %v227 = vld [vmem:[#allocation7 + $0x188] sm:$0xff]
    %v228 = vld [vmem:[#allocation7 + $0x190] sm:$0xff]
    %v229 = vld [vmem:[#allocation7 + $0x198] sm:$0xff]
    %v230 = vld [vmem:[#allocation7 + $0x1a0] sm:$0xff]
    %v231 = vld [vmem:[#allocation7 + $0x1a8] sm:$0xff]
    %v232 = vld [vmem:[#allocation7 + $0x1b0] sm:$0xff]
    %v233 = vld [vmem:[#allocation7 + $0x1b8] sm:$0xff]
    %v234 = vld [vmem:[#allocation7 + $0x1c0] sm:$0xff]
    %v235 = vld [vmem:[#allocation7 + $0x1c8] sm:$0xff]
    %v236 = vld [vmem:[#allocation7 + $0x1d0] sm:$0xff]
    %v237 = vld [vmem:[#allocation7 + $0x1d8] sm:$0xff]
    %v238 = vld [vmem:[#allocation7 + $0x1e0] sm:$0xff]
    %v239 = vld [vmem:[#allocation7 + $0x1e8] sm:$0xff]
    %v240 = vld [vmem:[#allocation7 + $0x1f0] sm:$0xff]
    %v241 = vld [vmem:[#allocation7 + $0x1f8] sm:$0xff]
    %v242 = vld [vmem:[#allocation7 + $0x200] sm:$0xff]
    %v243 = vld [vmem:[#allocation7 + $0x208] sm:$0xff]
    %v244 = vld [vmem:[#allocation7 + $0x210] sm:$0xff]
    %v245 = vld [vmem:[#allocation7 + $0x218] sm:$0xff]
    %v246 = vld [vmem:[#allocation7 + $0x220] sm:$0xff]
    %v247 = vld [vmem:[#allocation7 + $0x228] sm:$0xff]
    %v248 = vld [vmem:[#allocation7 + $0x230] sm:$0xff]
    %v249 = vld [vmem:[#allocation7 + $0x238] sm:$0xff]
    %v250 = vld [vmem:[#allocation7 + $0x240] sm:$0xff]
    %v251 = vld [vmem:[#allocation7 + $0x248] sm:$0xff]
    %v252 = vld [vmem:[#allocation7 + $0x250] sm:$0xff]
    %v253 = vld [vmem:[#allocation7 + $0x258] sm:$0xff]
    %v254 = vld [vmem:[#allocation7 + $0x260] sm:$0xff]
    %v255 = vld [vmem:[#allocation7 + $0x268] sm:$0xff]
    %v256 = vld [vmem:[#allocation7 + $0x270] sm:$0xff]
    %v257 = vld [vmem:[#allocation7 + $0x278] sm:$0xff]
    %v258 = vld [vmem:[#allocation7 + $0x280] sm:$0xff]
    %v259 = vld [vmem:[#allocation7 + $0x288] sm:$0xff]
    %v260 = vld [vmem:[#allocation7 + $0x290] sm:$0xff]
    %v261 = vld [vmem:[#allocation7 + $0x298] sm:$0xff]
    %v262 = vld [vmem:[#allocation7 + $0x2a0] sm:$0xff]
    %v263 = vld [vmem:[#allocation7 + $0x2a8] sm:$0xff]
    %v264 = vld [vmem:[#allocation7 + $0x2b0] sm:$0xff]
    %v265 = vld [vmem:[#allocation7 + $0x2b8] sm:$0xff]
    %v266 = vld [vmem:[#allocation7 + $0x2c0] sm:$0xff]
    %v267 = vld [vmem:[#allocation7 + $0x2c8] sm:$0xff]
    %v268 = vld [vmem:[#allocation7 + $0x2d0] sm:$0xff]
    %v269 = vld [vmem:[#allocation7 + $0x2d8] sm:$0xff]
    %v270 = vld [vmem:[#allocation7 + $0x2e0] sm:$0xff]
    %v271 = vld [vmem:[#allocation7 + $0x2e8] sm:$0xff]
    %v272 = vld [vmem:[#allocation7 + $0x2f0] sm:$0xff]
    %v273 = vld [vmem:[#allocation7 + $0x2f8] sm:$0xff]
    %v274 = vld [vmem:[#allocation7 + $0x300] sm:$0xff]
    %v275 = vld [vmem:[#allocation7 + $0x308] sm:$0xff]
    %v276 = vld [vmem:[#allocation7 + $0x310] sm:$0xff]
    %v277 = vld [vmem:[#allocation7 + $0x318] sm:$0xff]
    %v278 = vld [vmem:[#allocation7 + $0x320] sm:$0xff]
    %v279 = vld [vmem:[#allocation7 + $0x328] sm:$0xff]
    %v280 = vld [vmem:[#allocation7 + $0x330] sm:$0xff]
    %v281 = vld [vmem:[#allocation7 + $0x338] sm:$0xff]
    %v282 = vld [vmem:[#allocation7 + $0x340] sm:$0xff]
    %v283 = vld [vmem:[#allocation7 + $0x348] sm:$0xff]
    %v284 = vld [vmem:[#allocation7 + $0x350] sm:$0xff]
    %v285 = vld [vmem:[#allocation7 + $0x358] sm:$0xff]
    %v286 = vld [vmem:[#allocation7 + $0x360] sm:$0xff]
    %v287 = vld [vmem:[#allocation7 + $0x368] sm:$0xff]
    %v288 = vld [vmem:[#allocation7 + $0x370] sm:$0xff]
    %v289 = vld [vmem:[#allocation7 + $0x378] sm:$0xff]
    %v290 = vld [vmem:[#allocation7 + $0x380] sm:$0xff]
    %v291 = vld [vmem:[#allocation7 + $0x388] sm:$0xff]
    %v292 = vld [vmem:[#allocation7 + $0x390] sm:$0xff]
    %v293 = vld [vmem:[#allocation7 + $0x398] sm:$0xff]
    %v294 = vld [vmem:[#allocation7 + $0x3a0] sm:$0xff]
    %v295 = vld [vmem:[#allocation7 + $0x3a8] sm:$0xff]
    %v296 = vld [vmem:[#allocation7 + $0x3b0] sm:$0xff]
    %v297 = vld [vmem:[#allocation7 + $0x3b8] sm:$0xff]
    %v298 = vld [vmem:[#allocation7 + $0x3c0] sm:$0xff]
    %v299 = vld [vmem:[#allocation7 + $0x3c8] sm:$0xff]
    %v300 = vld [vmem:[#allocation7 + $0x3d0] sm:$0xff]
    %v301 = vld [vmem:[#allocation7 + $0x3d8] sm:$0xff]
    %v302 = vld [vmem:[#allocation7 + $0x3e0] sm:$0xff]
    %v303 = vld [vmem:[#allocation7 + $0x3e8] sm:$0xff]
    %v304 = vld [vmem:[#allocation7 + $0x3f0] sm:$0xff]
    %v305 = vld [vmem:[#allocation7 + $0x3f8] sm:$0xff]
    %v306 = vld [vmem:[#allocation7 + $0x400] sm:$0xff]
    %v307 = vld [vmem:[#allocation7 + $0x408] sm:$0xff]
    %v308 = vld [vmem:[#allocation7 + $0x410] sm:$0xff]
    %v309 = vld [vmem:[#allocation7 + $0x418] sm:$0xff]
    %v310 = vld [vmem:[#allocation7 + $0x420] sm:$0xff]
    %v311 = vld [vmem:[#allocation7 + $0x428] sm:$0xff]
    %v312 = vld [vmem:[#allocation7 + $0x430] sm:$0xff]
    %v313 = vld [vmem:[#allocation7 + $0x438] sm:$0xff]
    %v314 = vld [vmem:[#allocation7 + $0x440] sm:$0xff]
    %v315 = vld [vmem:[#allocation7 + $0x448] sm:$0xff]
    %v316 = vld [vmem:[#allocation7 + $0x450] sm:$0xff]
    %v317 = vld [vmem:[#allocation7 + $0x458] sm:$0xff]
    %v318 = vld [vmem:[#allocation7 + $0x460] sm:$0xff]
    %v319 = vld [vmem:[#allocation7 + $0x468] sm:$0xff]
    %v320 = vld [vmem:[#allocation7 + $0x470] sm:$0xff]
    %v321 = vld [vmem:[#allocation7 + $0x478] sm:$0xff]
    %v322 = vld [vmem:[#allocation7 + $0x480] sm:$0xff]
    %v323 = vld [vmem:[#allocation7 + $0x488] sm:$0xff]
    %v324 = vld [vmem:[#allocation7 + $0x490] sm:$0xff]
    %v325 = vld [vmem:[#allocation7 + $0x498] sm:$0xff]
    %v326 = vld [vmem:[#allocation7 + $0x4a0] sm:$0xff]
    %v327 = vld [vmem:[#allocation7 + $0x4a8] sm:$0xff]
    %v328 = vld [vmem:[#allocation7 + $0x4b0] sm:$0xff]
    %v329 = vld [vmem:[#allocation7 + $0x4b8] sm:$0xff]
    %v330 = vld [vmem:[#allocation7 + $0x4c0] sm:$0xff]
    %v331 = vld [vmem:[#allocation7 + $0x4c8] sm:$0xff]
    %v332 = vld [vmem:[#allocation7 + $0x4d0] sm:$0xff]
    %v333 = vld [vmem:[#allocation7 + $0x4d8] sm:$0xff]
    %v334 = vld [vmem:[#allocation7 + $0x4e0] sm:$0xff]
    %v335 = vld [vmem:[#allocation7 + $0x4e8] sm:$0xff]
    %v336 = vld [vmem:[#allocation7 + $0x4f0] sm:$0xff]
    %v337 = vld [vmem:[#allocation7 + $0x4f8] sm:$0xff]
    %v338 = vld [vmem:[#allocation7 + $0x500] sm:$0xff]
    %v339 = vld [vmem:[#allocation7 + $0x508] sm:$0xff]
    %v340 = vld [vmem:[#allocation7 + $0x510] sm:$0xff]
    %v341 = vld [vmem:[#allocation7 + $0x518] sm:$0xff]
    %v342 = vld [vmem:[#allocation7 + $0x520] sm:$0xff]
    %v343 = vld [vmem:[#allocation7 + $0x528] sm:$0xff]
    %v344 = vld [vmem:[#allocation7 + $0x530] sm:$0xff]
    %v345 = vld [vmem:[#allocation7 + $0x538] sm:$0xff]
    %v346 = vld [vmem:[#allocation7 + $0x540] sm:$0xff]
    %v347 = vld [vmem:[#allocation7 + $0x548] sm:$0xff]
    %v348 = vld [vmem:[#allocation7 + $0x550] sm:$0xff]
    %v349 = vld [vmem:[#allocation7 + $0x558] sm:$0xff]
    %v350 = vld [vmem:[#allocation7 + $0x560] sm:$0xff]
    %v351 = vld [vmem:[#allocation7 + $0x568] sm:$0xff]
    %v352 = vld [vmem:[#allocation7 + $0x570] sm:$0xff]
    %v353 = vld [vmem:[#allocation7 + $0x578] sm:$0xff]
    %v354 = vld [vmem:[#allocation7 + $0x580] sm:$0xff]
    %v355 = vld [vmem:[#allocation7 + $0x588] sm:$0xff]
    %v356 = vld [vmem:[#allocation7 + $0x590] sm:$0xff]
    %v357 = vld [vmem:[#allocation7 + $0x598] sm:$0xff]
    %v358 = vld [vmem:[#allocation7 + $0x5a0] sm:$0xff]
    %v359 = vld [vmem:[#allocation7 + $0x5a8] sm:$0xff]
    %v360 = vld [vmem:[#allocation7 + $0x5b0] sm:$0xff]
    %v361 = vld [vmem:[#allocation7 + $0x5b8] sm:$0xff]
    %v362 = vld [vmem:[#allocation7 + $0x5c0] sm:$0xff]
    %v363 = vld [vmem:[#allocation7 + $0x5c8] sm:$0xff]
    %v364 = vld [vmem:[#allocation7 + $0x5d0] sm:$0xff]
    %v365 = vld [vmem:[#allocation7 + $0x5d8] sm:$0xff]
    %v366 = vld [vmem:[#allocation7 + $0x5e0] sm:$0xff]
    %v367 = vld [vmem:[#allocation7 + $0x5e8] sm:$0xff]
    %v368 = vld [vmem:[#allocation7 + $0x5f0] sm:$0xff]
    %v369 = vld [vmem:[#allocation7 + $0x5f8] sm:$0xff]
    %v370 = vld [vmem:[#allocation7 + $0x600] sm:$0xff]
    %v371 = vld [vmem:[#allocation7 + $0x608] sm:$0xff]
    %v372 = vld [vmem:[#allocation7 + $0x610] sm:$0xff]
    %v373 = vld [vmem:[#allocation7 + $0x618] sm:$0xff]
    %v374 = vld [vmem:[#allocation7 + $0x620] sm:$0xff]
    %v375 = vld [vmem:[#allocation7 + $0x628] sm:$0xff]
    %v376 = vld [vmem:[#allocation7 + $0x630] sm:$0xff]
    %v377 = vld [vmem:[#allocation7 + $0x638] sm:$0xff]
    %v378 = vld [vmem:[#allocation7 + $0x640] sm:$0xff]
    %v379 = vld [vmem:[#allocation7 + $0x648] sm:$0xff]
    %v380 = vld [vmem:[#allocation7 + $0x650] sm:$0xff]
    %v381 = vld [vmem:[#allocation7 + $0x658] sm:$0xff]
    %v382 = vld [vmem:[#allocation7 + $0x660] sm:$0xff]
    %v383 = vld [vmem:[#allocation7 + $0x668] sm:$0xff]
    %v384 = vld [vmem:[#allocation7 + $0x670] sm:$0xff]
    %v385 = vld [vmem:[#allocation7 + $0x678] sm:$0xff]
    %v386 = vld [vmem:[#allocation7 + $0x680] sm:$0xff]
    %v387 = vld [vmem:[#allocation7 + $0x688] sm:$0xff]
    %v388 = vld [vmem:[#allocation7 + $0x690] sm:$0xff]
    %v389 = vld [vmem:[#allocation7 + $0x698] sm:$0xff]
    %v390 = vld [vmem:[#allocation7 + $0x6a0] sm:$0xff]
    %v391 = vld [vmem:[#allocation7 + $0x6a8] sm:$0xff]
    %v392 = vld [vmem:[#allocation7 + $0x6b0] sm:$0xff]
    %v393 = vld [vmem:[#allocation7 + $0x6b8] sm:$0xff]
    %v394 = vld [vmem:[#allocation7 + $0x6c0] sm:$0xff]
    %v395 = vld [vmem:[#allocation7 + $0x6c8] sm:$0xff]
    %v396 = vld [vmem:[#allocation7 + $0x6d0] sm:$0xff]
    %v397 = vld [vmem:[#allocation7 + $0x6d8] sm:$0xff]
    %v398 = vld [vmem:[#allocation7 + $0x6e0] sm:$0xff]
    %v399 = vld [vmem:[#allocation7 + $0x6e8] sm:$0xff]
    %v400 = vld [vmem:[#allocation7 + $0x6f0] sm:$0xff]
    %v401 = vld [vmem:[#allocation7 + $0x6f8] sm:$0xff]
    %v402 = vld [vmem:[#allocation7 + $0x700] sm:$0xff]
    %v403 = vld [vmem:[#allocation7 + $0x708] sm:$0xff]
    %v404 = vld [vmem:[#allocation7 + $0x710] sm:$0xff]
    %v405 = vld [vmem:[#allocation7 + $0x718] sm:$0xff]
    %v406 = vld [vmem:[#allocation7 + $0x720] sm:$0xff]
    %v407 = vld [vmem:[#allocation7 + $0x728] sm:$0xff]
    %v408 = vld [vmem:[#allocation7 + $0x730] sm:$0xff]
    %v409 = vld [vmem:[#allocation7 + $0x738] sm:$0xff]
    %v410 = vld [vmem:[#allocation7 + $0x740] sm:$0xff]
    %v411 = vld [vmem:[#allocation7 + $0x748] sm:$0xff]
    %v412 = vld [vmem:[#allocation7 + $0x750] sm:$0xff]
    %v413 = vld [vmem:[#allocation7 + $0x758] sm:$0xff]
    %v414 = vld [vmem:[#allocation7 + $0x760] sm:$0xff]
    %v415 = vld [vmem:[#allocation7 + $0x768] sm:$0xff]
    %v416 = vld [vmem:[#allocation7 + $0x770] sm:$0xff]
    %v417 = vld [vmem:[#allocation7 + $0x778] sm:$0xff]
    %v418 = vld [vmem:[#allocation7 + $0x780] sm:$0xff]
    %v419 = vld [vmem:[#allocation7 + $0x788] sm:$0xff]
    %v420 = vld [vmem:[#allocation7 + $0x790] sm:$0xff]
    %v421 = vld [vmem:[#allocation7 + $0x798] sm:$0xff]
    %v422 = vld [vmem:[#allocation7 + $0x7a0] sm:$0xff]
    %v423 = vld [vmem:[#allocation7 + $0x7a8] sm:$0xff]
    %v424 = vld [vmem:[#allocation7 + $0x7b0] sm:$0xff]
    %v425 = vld [vmem:[#allocation7 + $0x7b8] sm:$0xff]
    %v426 = vld [vmem:[#allocation7 + $0x7c0] sm:$0xff]
    %v427 = vld [vmem:[#allocation7 + $0x7c8] sm:$0xff]
    %v428 = vld [vmem:[#allocation7 + $0x7d0] sm:$0xff]
    %v429 = vld [vmem:[#allocation7 + $0x7d8] sm:$0xff]
    %v430 = vld [vmem:[#allocation7 + $0x7e0] sm:$0xff]
    %v431 = vld [vmem:[#allocation7 + $0x7e8] sm:$0xff]
    %v432 = vld [vmem:[#allocation7 + $0x7f0] sm:$0xff]
    %v433 = vld [vmem:[#allocation7 + $0x7f8] sm:$0xff]
    %v434 = vld [vmem:[#allocation7 + $0x800] sm:$0xff]
    %v435 = vld [vmem:[#allocation7 + $0x808] sm:$0xff]
    %v436 = vld [vmem:[#allocation7 + $0x810] sm:$0xff]
    %v437 = vld [vmem:[#allocation7 + $0x818] sm:$0xff]
    %v438 = vld [vmem:[#allocation7 + $0x820] sm:$0xff]
    %v439 = vld [vmem:[#allocation7 + $0x828] sm:$0xff]
    %v440 = vld [vmem:[#allocation7 + $0x830] sm:$0xff]
    %v441 = vld [vmem:[#allocation7 + $0x838] sm:$0xff]
    %v442 = vld [vmem:[#allocation7 + $0x840] sm:$0xff]
    %v443 = vld [vmem:[#allocation7 + $0x848] sm:$0xff]
    %v444 = vld [vmem:[#allocation7 + $0x850] sm:$0xff]
    %v445 = vld [vmem:[#allocation7 + $0x858] sm:$0xff]
    %v446 = vld [vmem:[#allocation7 + $0x860] sm:$0xff]
    %v447 = vld [vmem:[#allocation7 + $0x868] sm:$0xff]
    %v448 = vld [vmem:[#allocation7 + $0x870] sm:$0xff]
    %v449 = vld [vmem:[#allocation7 + $0x878] sm:$0xff]
    %v450 = vld [vmem:[#allocation7 + $0x880] sm:$0xff]
    %v451 = vld [vmem:[#allocation7 + $0x888] sm:$0xff]
    %v452 = vld [vmem:[#allocation7 + $0x890] sm:$0xff]
    %v453 = vld [vmem:[#allocation7 + $0x898] sm:$0xff]
    %v454 = vld [vmem:[#allocation7 + $0x8a0] sm:$0xff]
    %v455 = vld [vmem:[#allocation7 + $0x8a8] sm:$0xff]
    %v456 = vld [vmem:[#allocation7 + $0x8b0] sm:$0xff]
    %v457 = vld [vmem:[#allocation7 + $0x8b8] sm:$0xff]
    %v458 = vld [vmem:[#allocation7 + $0x8c0] sm:$0xff]
    %v459 = vld [vmem:[#allocation7 + $0x8c8] sm:$0xff]
    %v460 = vld [vmem:[#allocation7 + $0x8d0] sm:$0xff]
    %v461 = vld [vmem:[#allocation7 + $0x8d8] sm:$0xff]
    %v462 = vld [vmem:[#allocation7 + $0x8e0] sm:$0xff]
    %v463 = vld [vmem:[#allocation7 + $0x8e8] sm:$0xff]
    %v464 = vld [vmem:[#allocation7 + $0x8f0] sm:$0xff]
    %v465 = vld [vmem:[#allocation7 + $0x8f8] sm:$0xff]
    %v466 = vld [vmem:[#allocation8] sm:$0x3f]
    %v468 = vlaneseq
    %v469 = vshrl.u32 %v468, 7
    %v470 = vsub.s32 0, %v469
    %v471 = vrot.slane %v466, %v470
    %v472 = vlaneseq
    %v473 = vshrl.u32 %v472, 7
    %v474 = vsub.s32 1, %v473
    %v475 = vrot.slane %v466, %v474
    %v476 = vlaneseq
    %v477 = vshrl.u32 %v476, 7
    %v478 = vsub.s32 2, %v477
    %v479 = vrot.slane %v466, %v478
    %v480 = vlaneseq
    %v481 = vshrl.u32 %v480, 7
    %v482 = vsub.s32 3, %v481
    %v483 = vrot.slane %v466, %v482
    %v484 = vlaneseq
    %v485 = vshrl.u32 %v484, 7
    %v486 = vsub.s32 4, %v485
    %v487 = vrot.slane %v466, %v486
    %v488 = vlaneseq
    %v489 = vshrl.u32 %v488, 7
    %v490 = vsub.s32 5, %v489
    %v491 = vrot.slane %v466, %v490
    %v501 = vunpack.c.l.b16 %v175
    %v502 = vunpack.c.h.b16 %v175
    %v503 = vunpack.c.l.b16 %v176
    %v504 = vunpack.c.h.b16 %v176
    %v505 = vunpack.c.l.b16 %v177
    %v506 = vunpack.c.h.b16 %v177
    %v507 = vpack.c.b16 %v501, %v501
    %v508 = vpack.c.b16 %v502, %v502
    %v509 = vpack.c.b16 %v503, %v503
    %v510 = vpack.c.b16 %v504, %v504
    %v511 = vpack.c.b16 %v505, %v505
    %v512 = vpack.c.b16 %v506, %v506
    %v807 = vunpack.c.l.b16 %v178
    %v808 = vunpack.c.h.b16 %v178
    %v809 = vunpack.c.l.b16 %v179
    %v810 = vunpack.c.h.b16 %v179
    %v811 = vunpack.c.l.b16 %v180
    %v812 = vunpack.c.h.b16 %v180
    %v813 = vunpack.c.l.b16 %v181
    %v814 = vunpack.c.h.b16 %v181
    %v815 = vunpack.c.l.b16 %v182
    %v816 = vunpack.c.h.b16 %v182
    %v817 = vunpack.c.l.b16 %v183
    %v818 = vunpack.c.h.b16 %v183
    %v819 = vunpack.c.l.b16 %v184
    %v820 = vunpack.c.h.b16 %v184
    %v821 = vunpack.c.l.b16 %v185
    %v822 = vunpack.c.h.b16 %v185
    %v823 = vunpack.c.l.b16 %v186
    %v824 = vunpack.c.h.b16 %v186
    %v825 = vunpack.c.l.b16 %v187
    %v826 = vunpack.c.h.b16 %v187
    %v827 = vunpack.c.l.b16 %v188
    %v828 = vunpack.c.h.b16 %v188
    %v829 = vunpack.c.l.b16 %v189
    %v830 = vunpack.c.h.b16 %v189
    %v831 = vunpack.c.l.b16 %v190
    %v832 = vunpack.c.h.b16 %v190
    %v833 = vunpack.c.l.b16 %v191
    %v834 = vunpack.c.h.b16 %v191
    %v835 = vunpack.c.l.b16 %v192
    %v836 = vunpack.c.h.b16 %v192
    %v837 = vunpack.c.l.b16 %v193
    %v838 = vunpack.c.h.b16 %v193
    %v839 = vunpack.c.l.b16 %v194
    %v840 = vunpack.c.h.b16 %v194
    %v841 = vunpack.c.l.b16 %v195
    %v842 = vunpack.c.h.b16 %v195
    %v843 = vunpack.c.l.b16 %v196
    %v844 = vunpack.c.h.b16 %v196
    %v845 = vunpack.c.l.b16 %v197
    %v846 = vunpack.c.h.b16 %v197
    %v847 = vunpack.c.l.b16 %v198
    %v848 = vunpack.c.h.b16 %v198
    %v849 = vunpack.c.l.b16 %v199
    %v850 = vunpack.c.h.b16 %v199
    %v851 = vunpack.c.l.b16 %v200
    %v852 = vunpack.c.h.b16 %v200
    %v853 = vunpack.c.l.b16 %v201
    %v854 = vunpack.c.h.b16 %v201
    %v855 = vunpack.c.l.b16 %v202
    %v856 = vunpack.c.h.b16 %v202
    %v857 = vunpack.c.l.b16 %v203
    %v858 = vunpack.c.h.b16 %v203
    %v859 = vunpack.c.l.b16 %v204
    %v860 = vunpack.c.h.b16 %v204
    %v861 = vunpack.c.l.b16 %v205
    %v862 = vunpack.c.h.b16 %v205
    %v863 = vunpack.c.l.b16 %v206
    %v864 = vunpack.c.h.b16 %v206
    %v865 = vunpack.c.l.b16 %v207
    %v866 = vunpack.c.h.b16 %v207
    %v867 = vunpack.c.l.b16 %v208
    %v868 = vunpack.c.h.b16 %v208
    %v869 = vunpack.c.l.b16 %v209
    %v870 = vunpack.c.h.b16 %v209
    %v871 = vunpack.c.l.b16 %v210
    %v872 = vunpack.c.h.b16 %v210
    %v873 = vunpack.c.l.b16 %v211
    %v874 = vunpack.c.h.b16 %v211
    %v875 = vunpack.c.l.b16 %v212
    %v876 = vunpack.c.h.b16 %v212
    %v877 = vunpack.c.l.b16 %v213
    %v878 = vunpack.c.h.b16 %v213
    %v879 = vunpack.c.l.b16 %v214
    %v880 = vunpack.c.h.b16 %v214
    %v881 = vunpack.c.l.b16 %v215
    %v882 = vunpack.c.h.b16 %v215
    %v883 = vunpack.c.l.b16 %v216
    %v884 = vunpack.c.h.b16 %v216
    %v885 = vunpack.c.l.b16 %v217
    %v886 = vunpack.c.h.b16 %v217
    %v887 = vunpack.c.l.b16 %v218
    %v888 = vunpack.c.h.b16 %v218
    %v889 = vunpack.c.l.b16 %v219
    %v890 = vunpack.c.h.b16 %v219
    %v891 = vunpack.c.l.b16 %v220
    %v892 = vunpack.c.h.b16 %v220
    %v893 = vunpack.c.l.b16 %v221
    %v894 = vunpack.c.h.b16 %v221
    %v895 = vunpack.c.l.b16 %v222
    %v896 = vunpack.c.h.b16 %v222
    %v897 = vunpack.c.l.b16 %v223
    %v898 = vunpack.c.h.b16 %v223
    %v899 = vunpack.c.l.b16 %v224
    %v900 = vunpack.c.h.b16 %v224
    %v901 = vunpack.c.l.b16 %v225
    %v902 = vunpack.c.h.b16 %v225
    %v903 = vunpack.c.l.b16 %v226
    %v904 = vunpack.c.h.b16 %v226
    %v905 = vunpack.c.l.b16 %v227
    %v906 = vunpack.c.h.b16 %v227
    %v907 = vunpack.c.l.b16 %v228
    %v908 = vunpack.c.h.b16 %v228
    %v909 = vunpack.c.l.b16 %v229
    %v910 = vunpack.c.h.b16 %v229
    %v911 = vunpack.c.l.b16 %v230
    %v912 = vunpack.c.h.b16 %v230
    %v913 = vunpack.c.l.b16 %v231
    %v914 = vunpack.c.h.b16 %v231
    %v915 = vunpack.c.l.b16 %v232
    %v916 = vunpack.c.h.b16 %v232
    %v917 = vunpack.c.l.b16 %v233
    %v918 = vunpack.c.h.b16 %v233
    %v919 = vunpack.c.l.b16 %v234
    %v920 = vunpack.c.h.b16 %v234
    %v921 = vunpack.c.l.b16 %v235
    %v922 = vunpack.c.h.b16 %v235
    %v923 = vunpack.c.l.b16 %v236
    %v924 = vunpack.c.h.b16 %v236
    %v925 = vunpack.c.l.b16 %v237
    %v926 = vunpack.c.h.b16 %v237
    %v927 = vunpack.c.l.b16 %v238
    %v928 = vunpack.c.h.b16 %v238
    %v929 = vunpack.c.l.b16 %v239
    %v930 = vunpack.c.h.b16 %v239
    %v931 = vunpack.c.l.b16 %v240
    %v932 = vunpack.c.h.b16 %v240
    %v933 = vunpack.c.l.b16 %v241
    %v934 = vunpack.c.h.b16 %v241
    %v935 = vunpack.c.l.b16 %v242
    %v936 = vunpack.c.h.b16 %v242
    %v937 = vunpack.c.l.b16 %v243
    %v938 = vunpack.c.h.b16 %v243
    %v939 = vunpack.c.l.b16 %v244
    %v940 = vunpack.c.h.b16 %v244
    %v941 = vunpack.c.l.b16 %v245
    %v942 = vunpack.c.h.b16 %v245
    %v943 = vunpack.c.l.b16 %v246
    %v944 = vunpack.c.h.b16 %v246
    %v945 = vunpack.c.l.b16 %v247
    %v946 = vunpack.c.h.b16 %v247
    %v947 = vunpack.c.l.b16 %v248
    %v948 = vunpack.c.h.b16 %v248
    %v949 = vunpack.c.l.b16 %v249
    %v950 = vunpack.c.h.b16 %v249
    %v951 = vunpack.c.l.b16 %v250
    %v952 = vunpack.c.h.b16 %v250
    %v953 = vunpack.c.l.b16 %v251
    %v954 = vunpack.c.h.b16 %v251
    %v955 = vunpack.c.l.b16 %v252
    %v956 = vunpack.c.h.b16 %v252
    %v957 = vunpack.c.l.b16 %v253
    %v958 = vunpack.c.h.b16 %v253
    %v959 = vunpack.c.l.b16 %v254
    %v960 = vunpack.c.h.b16 %v254
    %v961 = vunpack.c.l.b16 %v255
    %v962 = vunpack.c.h.b16 %v255
    %v963 = vunpack.c.l.b16 %v256
    %v964 = vunpack.c.h.b16 %v256
    %v965 = vunpack.c.l.b16 %v257
    %v966 = vunpack.c.h.b16 %v257
    %v967 = vunpack.c.l.b16 %v258
    %v968 = vunpack.c.h.b16 %v258
    %v969 = vunpack.c.l.b16 %v259
    %v970 = vunpack.c.h.b16 %v259
    %v971 = vunpack.c.l.b16 %v260
    %v972 = vunpack.c.h.b16 %v260
    %v973 = vunpack.c.l.b16 %v261
    %v974 = vunpack.c.h.b16 %v261
    %v975 = vunpack.c.l.b16 %v262
    %v976 = vunpack.c.h.b16 %v262
    %v977 = vunpack.c.l.b16 %v263
    %v978 = vunpack.c.h.b16 %v263
    %v979 = vunpack.c.l.b16 %v264
    %v980 = vunpack.c.h.b16 %v264
    %v981 = vunpack.c.l.b16 %v265
    %v982 = vunpack.c.h.b16 %v265
    %v983 = vunpack.c.l.b16 %v266
    %v984 = vunpack.c.h.b16 %v266
    %v985 = vunpack.c.l.b16 %v267
    %v986 = vunpack.c.h.b16 %v267
    %v987 = vunpack.c.l.b16 %v268
    %v988 = vunpack.c.h.b16 %v268
    %v989 = vunpack.c.l.b16 %v269
    %v990 = vunpack.c.h.b16 %v269
    %v991 = vunpack.c.l.b16 %v270
    %v992 = vunpack.c.h.b16 %v270
    %v993 = vunpack.c.l.b16 %v271
    %v994 = vunpack.c.h.b16 %v271
    %v995 = vunpack.c.l.b16 %v272
    %v996 = vunpack.c.h.b16 %v272
    %v997 = vunpack.c.l.b16 %v273
    %v998 = vunpack.c.h.b16 %v273
    %v999 = vunpack.c.l.b16 %v274
    %v1000 = vunpack.c.h.b16 %v274
    %v1001 = vunpack.c.l.b16 %v275
    %v1002 = vunpack.c.h.b16 %v275
    %v1003 = vunpack.c.l.b16 %v276
    %v1004 = vunpack.c.h.b16 %v276
    %v1005 = vunpack.c.l.b16 %v277
    %v1006 = vunpack.c.h.b16 %v277
    %v1007 = vunpack.c.l.b16 %v278
    %v1008 = vunpack.c.h.b16 %v278
    %v1009 = vunpack.c.l.b16 %v279
    %v1010 = vunpack.c.h.b16 %v279
    %v1011 = vunpack.c.l.b16 %v280
    %v1012 = vunpack.c.h.b16 %v280
    %v1013 = vunpack.c.l.b16 %v281
    %v1014 = vunpack.c.h.b16 %v281
    %v1015 = vunpack.c.l.b16 %v282
    %v1016 = vunpack.c.h.b16 %v282
    %v1017 = vunpack.c.l.b16 %v283
    %v1018 = vunpack.c.h.b16 %v283
    %v1019 = vunpack.c.l.b16 %v284
    %v1020 = vunpack.c.h.b16 %v284
    %v1021 = vunpack.c.l.b16 %v285
    %v1022 = vunpack.c.h.b16 %v285
    %v1023 = vunpack.c.l.b16 %v286
    %v1024 = vunpack.c.h.b16 %v286
    %v1025 = vunpack.c.l.b16 %v287
    %v1026 = vunpack.c.h.b16 %v287
    %v1027 = vunpack.c.l.b16 %v288
    %v1028 = vunpack.c.h.b16 %v288
    %v1029 = vunpack.c.l.b16 %v289
    %v1030 = vunpack.c.h.b16 %v289
    %v1031 = vunpack.c.l.b16 %v290
    %v1032 = vunpack.c.h.b16 %v290
    %v1033 = vunpack.c.l.b16 %v291
    %v1034 = vunpack.c.h.b16 %v291
    %v1035 = vunpack.c.l.b16 %v292
    %v1036 = vunpack.c.h.b16 %v292
    %v1037 = vunpack.c.l.b16 %v293
    %v1038 = vunpack.c.h.b16 %v293
    %v1039 = vunpack.c.l.b16 %v294
    %v1040 = vunpack.c.h.b16 %v294
    %v1041 = vunpack.c.l.b16 %v295
    %v1042 = vunpack.c.h.b16 %v295
    %v1043 = vunpack.c.l.b16 %v296
    %v1044 = vunpack.c.h.b16 %v296
    %v1045 = vunpack.c.l.b16 %v297
    %v1046 = vunpack.c.h.b16 %v297
    %v1047 = vunpack.c.l.b16 %v298
    %v1048 = vunpack.c.h.b16 %v298
    %v1049 = vunpack.c.l.b16 %v299
    %v1050 = vunpack.c.h.b16 %v299
    %v1051 = vunpack.c.l.b16 %v300
    %v1052 = vunpack.c.h.b16 %v300
    %v1053 = vunpack.c.l.b16 %v301
    %v1054 = vunpack.c.h.b16 %v301
    %v1055 = vunpack.c.l.b16 %v302
    %v1056 = vunpack.c.h.b16 %v302
    %v1057 = vunpack.c.l.b16 %v303
    %v1058 = vunpack.c.h.b16 %v303
    %v1059 = vunpack.c.l.b16 %v304
    %v1060 = vunpack.c.h.b16 %v304
    %v1061 = vunpack.c.l.b16 %v305
    %v1062 = vunpack.c.h.b16 %v305
    %v1063 = vunpack.c.l.b16 %v306
    %v1064 = vunpack.c.h.b16 %v306
    %v1065 = vunpack.c.l.b16 %v307
    %v1066 = vunpack.c.h.b16 %v307
    %v1067 = vunpack.c.l.b16 %v308
    %v1068 = vunpack.c.h.b16 %v308
    %v1069 = vunpack.c.l.b16 %v309
    %v1070 = vunpack.c.h.b16 %v309
    %v1071 = vunpack.c.l.b16 %v310
    %v1072 = vunpack.c.h.b16 %v310
    %v1073 = vunpack.c.l.b16 %v311
    %v1074 = vunpack.c.h.b16 %v311
    %v1075 = vunpack.c.l.b16 %v312
    %v1076 = vunpack.c.h.b16 %v312
    %v1077 = vunpack.c.l.b16 %v313
    %v1078 = vunpack.c.h.b16 %v313
    %v1079 = vunpack.c.l.b16 %v314
    %v1080 = vunpack.c.h.b16 %v314
    %v1081 = vunpack.c.l.b16 %v315
    %v1082 = vunpack.c.h.b16 %v315
    %v1083 = vunpack.c.l.b16 %v316
    %v1084 = vunpack.c.h.b16 %v316
    %v1085 = vunpack.c.l.b16 %v317
    %v1086 = vunpack.c.h.b16 %v317
    %v1087 = vunpack.c.l.b16 %v318
    %v1088 = vunpack.c.h.b16 %v318
    %v1089 = vunpack.c.l.b16 %v319
    %v1090 = vunpack.c.h.b16 %v319
    %v1091 = vunpack.c.l.b16 %v320
    %v1092 = vunpack.c.h.b16 %v320
    %v1093 = vunpack.c.l.b16 %v321
    %v1094 = vunpack.c.h.b16 %v321
    %v1095 = vunpack.c.l.b16 %v322
    %v1096 = vunpack.c.h.b16 %v322
    %v1097 = vunpack.c.l.b16 %v323
    %v1098 = vunpack.c.h.b16 %v323
    %v1099 = vunpack.c.l.b16 %v324
    %v1100 = vunpack.c.h.b16 %v324
    %v1101 = vunpack.c.l.b16 %v325
    %v1102 = vunpack.c.h.b16 %v325
    %v1103 = vunpack.c.l.b16 %v326
    %v1104 = vunpack.c.h.b16 %v326
    %v1105 = vunpack.c.l.b16 %v327
    %v1106 = vunpack.c.h.b16 %v327
    %v1107 = vunpack.c.l.b16 %v328
    %v1108 = vunpack.c.h.b16 %v328
    %v1109 = vunpack.c.l.b16 %v329
    %v1110 = vunpack.c.h.b16 %v329
    %v1111 = vunpack.c.l.b16 %v330
    %v1112 = vunpack.c.h.b16 %v330
    %v1113 = vunpack.c.l.b16 %v331
    %v1114 = vunpack.c.h.b16 %v331
    %v1115 = vunpack.c.l.b16 %v332
    %v1116 = vunpack.c.h.b16 %v332
    %v1117 = vunpack.c.l.b16 %v333
    %v1118 = vunpack.c.h.b16 %v333
    %v1119 = vunpack.c.l.b16 %v334
    %v1120 = vunpack.c.h.b16 %v334
    %v1121 = vunpack.c.l.b16 %v335
    %v1122 = vunpack.c.h.b16 %v335
    %v1123 = vunpack.c.l.b16 %v336
    %v1124 = vunpack.c.h.b16 %v336
    %v1125 = vunpack.c.l.b16 %v337
    %v1126 = vunpack.c.h.b16 %v337
    %v1127 = vunpack.c.l.b16 %v338
    %v1128 = vunpack.c.h.b16 %v338
    %v1129 = vunpack.c.l.b16 %v339
    %v1130 = vunpack.c.h.b16 %v339
    %v1131 = vunpack.c.l.b16 %v340
    %v1132 = vunpack.c.h.b16 %v340
    %v1133 = vunpack.c.l.b16 %v341
    %v1134 = vunpack.c.h.b16 %v341
    %v1135 = vunpack.c.l.b16 %v342
    %v1136 = vunpack.c.h.b16 %v342
    %v1137 = vunpack.c.l.b16 %v343
    %v1138 = vunpack.c.h.b16 %v343
    %v1139 = vunpack.c.l.b16 %v344
    %v1140 = vunpack.c.h.b16 %v344
    %v1141 = vunpack.c.l.b16 %v345
    %v1142 = vunpack.c.h.b16 %v345
    %v1143 = vunpack.c.l.b16 %v346
    %v1144 = vunpack.c.h.b16 %v346
    %v1145 = vunpack.c.l.b16 %v347
    %v1146 = vunpack.c.h.b16 %v347
    %v1147 = vunpack.c.l.b16 %v348
    %v1148 = vunpack.c.h.b16 %v348
    %v1149 = vunpack.c.l.b16 %v349
    %v1150 = vunpack.c.h.b16 %v349
    %v1151 = vunpack.c.l.b16 %v350
    %v1152 = vunpack.c.h.b16 %v350
    %v1153 = vunpack.c.l.b16 %v351
    %v1154 = vunpack.c.h.b16 %v351
    %v1155 = vunpack.c.l.b16 %v352
    %v1156 = vunpack.c.h.b16 %v352
    %v1157 = vunpack.c.l.b16 %v353
    %v1158 = vunpack.c.h.b16 %v353
    %v1159 = vunpack.c.l.b16 %v354
    %v1160 = vunpack.c.h.b16 %v354
    %v1161 = vunpack.c.l.b16 %v355
    %v1162 = vunpack.c.h.b16 %v355
    %v1163 = vunpack.c.l.b16 %v356
    %v1164 = vunpack.c.h.b16 %v356
    %v1165 = vunpack.c.l.b16 %v357
    %v1166 = vunpack.c.h.b16 %v357
    %v1167 = vunpack.c.l.b16 %v358
    %v1168 = vunpack.c.h.b16 %v358
    %v1169 = vunpack.c.l.b16 %v359
    %v1170 = vunpack.c.h.b16 %v359
    %v1171 = vunpack.c.l.b16 %v360
    %v1172 = vunpack.c.h.b16 %v360
    %v1173 = vunpack.c.l.b16 %v361
    %v1174 = vunpack.c.h.b16 %v361
    %v1175 = vunpack.c.l.b16 %v362
    %v1176 = vunpack.c.h.b16 %v362
    %v1177 = vunpack.c.l.b16 %v363
    %v1178 = vunpack.c.h.b16 %v363
    %v1179 = vunpack.c.l.b16 %v364
    %v1180 = vunpack.c.h.b16 %v364
    %v1181 = vunpack.c.l.b16 %v365
    %v1182 = vunpack.c.h.b16 %v365
    %v1183 = vunpack.c.l.b16 %v366
    %v1184 = vunpack.c.h.b16 %v366
    %v1185 = vunpack.c.l.b16 %v367
    %v1186 = vunpack.c.h.b16 %v367
    %v1187 = vunpack.c.l.b16 %v368
    %v1188 = vunpack.c.h.b16 %v368
    %v1189 = vunpack.c.l.b16 %v369
    %v1190 = vunpack.c.h.b16 %v369
    %v1191 = vunpack.c.l.b16 %v370
    %v1192 = vunpack.c.h.b16 %v370
    %v1193 = vunpack.c.l.b16 %v371
    %v1194 = vunpack.c.h.b16 %v371
    %v1195 = vunpack.c.l.b16 %v372
    %v1196 = vunpack.c.h.b16 %v372
    %v1197 = vunpack.c.l.b16 %v373
    %v1198 = vunpack.c.h.b16 %v373
    %v1199 = vunpack.c.l.b16 %v374
    %v1200 = vunpack.c.h.b16 %v374
    %v1201 = vunpack.c.l.b16 %v375
    %v1202 = vunpack.c.h.b16 %v375
    %v1203 = vunpack.c.l.b16 %v376
    %v1204 = vunpack.c.h.b16 %v376
    %v1205 = vunpack.c.l.b16 %v377
    %v1206 = vunpack.c.h.b16 %v377
    %v1207 = vunpack.c.l.b16 %v378
    %v1208 = vunpack.c.h.b16 %v378
    %v1209 = vunpack.c.l.b16 %v379
    %v1210 = vunpack.c.h.b16 %v379
    %v1211 = vunpack.c.l.b16 %v380
    %v1212 = vunpack.c.h.b16 %v380
    %v1213 = vunpack.c.l.b16 %v381
    %v1214 = vunpack.c.h.b16 %v381
    %v1215 = vunpack.c.l.b16 %v382
    %v1216 = vunpack.c.h.b16 %v382
    %v1217 = vunpack.c.l.b16 %v383
    %v1218 = vunpack.c.h.b16 %v383
    %v1219 = vunpack.c.l.b16 %v384
    %v1220 = vunpack.c.h.b16 %v384
    %v1221 = vunpack.c.l.b16 %v385
    %v1222 = vunpack.c.h.b16 %v385
    %v1223 = vunpack.c.l.b16 %v386
    %v1224 = vunpack.c.h.b16 %v386
    %v1225 = vunpack.c.l.b16 %v387
    %v1226 = vunpack.c.h.b16 %v387
    %v1227 = vunpack.c.l.b16 %v388
    %v1228 = vunpack.c.h.b16 %v388
    %v1229 = vunpack.c.l.b16 %v389
    %v1230 = vunpack.c.h.b16 %v389
    %v1231 = vunpack.c.l.b16 %v390
    %v1232 = vunpack.c.h.b16 %v390
    %v1233 = vunpack.c.l.b16 %v391
    %v1234 = vunpack.c.h.b16 %v391
    %v1235 = vunpack.c.l.b16 %v392
    %v1236 = vunpack.c.h.b16 %v392
    %v1237 = vunpack.c.l.b16 %v393
    %v1238 = vunpack.c.h.b16 %v393
    %v1239 = vunpack.c.l.b16 %v394
    %v1240 = vunpack.c.h.b16 %v394
    %v1241 = vunpack.c.l.b16 %v395
    %v1242 = vunpack.c.h.b16 %v395
    %v1243 = vunpack.c.l.b16 %v396
    %v1244 = vunpack.c.h.b16 %v396
    %v1245 = vunpack.c.l.b16 %v397
    %v1246 = vunpack.c.h.b16 %v397
    %v1247 = vunpack.c.l.b16 %v398
    %v1248 = vunpack.c.h.b16 %v398
    %v1249 = vunpack.c.l.b16 %v399
    %v1250 = vunpack.c.h.b16 %v399
    %v1251 = vunpack.c.l.b16 %v400
    %v1252 = vunpack.c.h.b16 %v400
    %v1253 = vunpack.c.l.b16 %v401
    %v1254 = vunpack.c.h.b16 %v401
    %v1255 = vunpack.c.l.b16 %v402
    %v1256 = vunpack.c.h.b16 %v402
    %v1257 = vunpack.c.l.b16 %v403
    %v1258 = vunpack.c.h.b16 %v403
    %v1259 = vunpack.c.l.b16 %v404
    %v1260 = vunpack.c.h.b16 %v404
    %v1261 = vunpack.c.l.b16 %v405
    %v1262 = vunpack.c.h.b16 %v405
    %v1263 = vunpack.c.l.b16 %v406
    %v1264 = vunpack.c.h.b16 %v406
    %v1265 = vunpack.c.l.b16 %v407
    %v1266 = vunpack.c.h.b16 %v407
    %v1267 = vunpack.c.l.b16 %v408
    %v1268 = vunpack.c.h.b16 %v408
    %v1269 = vunpack.c.l.b16 %v409
    %v1270 = vunpack.c.h.b16 %v409
    %v1271 = vunpack.c.l.b16 %v410
    %v1272 = vunpack.c.h.b16 %v410
    %v1273 = vunpack.c.l.b16 %v411
    %v1274 = vunpack.c.h.b16 %v411
    %v1275 = vunpack.c.l.b16 %v412
    %v1276 = vunpack.c.h.b16 %v412
    %v1277 = vunpack.c.l.b16 %v413
    %v1278 = vunpack.c.h.b16 %v413
    %v1279 = vunpack.c.l.b16 %v414
    %v1280 = vunpack.c.h.b16 %v414
    %v1281 = vunpack.c.l.b16 %v415
    %v1282 = vunpack.c.h.b16 %v415
    %v1283 = vunpack.c.l.b16 %v416
    %v1284 = vunpack.c.h.b16 %v416
    %v1285 = vunpack.c.l.b16 %v417
    %v1286 = vunpack.c.h.b16 %v417
    %v1287 = vunpack.c.l.b16 %v418
    %v1288 = vunpack.c.h.b16 %v418
    %v1289 = vunpack.c.l.b16 %v419
    %v1290 = vunpack.c.h.b16 %v419
    %v1291 = vunpack.c.l.b16 %v420
    %v1292 = vunpack.c.h.b16 %v420
    %v1293 = vunpack.c.l.b16 %v421
    %v1294 = vunpack.c.h.b16 %v421
    %v1295 = vunpack.c.l.b16 %v422
    %v1296 = vunpack.c.h.b16 %v422
    %v1297 = vunpack.c.l.b16 %v423
    %v1298 = vunpack.c.h.b16 %v423
    %v1299 = vunpack.c.l.b16 %v424
    %v1300 = vunpack.c.h.b16 %v424
    %v1301 = vunpack.c.l.b16 %v425
    %v1302 = vunpack.c.h.b16 %v425
    %v1303 = vunpack.c.l.b16 %v426
    %v1304 = vunpack.c.h.b16 %v426
    %v1305 = vunpack.c.l.b16 %v427
    %v1306 = vunpack.c.h.b16 %v427
    %v1307 = vunpack.c.l.b16 %v428
    %v1308 = vunpack.c.h.b16 %v428
    %v1309 = vunpack.c.l.b16 %v429
    %v1310 = vunpack.c.h.b16 %v429
    %v1311 = vunpack.c.l.b16 %v430
    %v1312 = vunpack.c.h.b16 %v430
    %v1313 = vunpack.c.l.b16 %v431
    %v1314 = vunpack.c.h.b16 %v431
    %v1315 = vunpack.c.l.b16 %v432
    %v1316 = vunpack.c.h.b16 %v432
    %v1317 = vunpack.c.l.b16 %v433
    %v1318 = vunpack.c.h.b16 %v433
    %v1319 = vunpack.c.l.b16 %v434
    %v1320 = vunpack.c.h.b16 %v434
    %v1321 = vunpack.c.l.b16 %v435
    %v1322 = vunpack.c.h.b16 %v435
    %v1323 = vunpack.c.l.b16 %v436
    %v1324 = vunpack.c.h.b16 %v436
    %v1325 = vunpack.c.l.b16 %v437
    %v1326 = vunpack.c.h.b16 %v437
    %v1327 = vunpack.c.l.b16 %v438
    %v1328 = vunpack.c.h.b16 %v438
    %v1329 = vunpack.c.l.b16 %v439
    %v1330 = vunpack.c.h.b16 %v439
    %v1331 = vunpack.c.l.b16 %v440
    %v1332 = vunpack.c.h.b16 %v440
    %v1333 = vunpack.c.l.b16 %v441
    %v1334 = vunpack.c.h.b16 %v441
    %v1335 = vunpack.c.l.b16 %v442
    %v1336 = vunpack.c.h.b16 %v442
    %v1337 = vunpack.c.l.b16 %v443
    %v1338 = vunpack.c.h.b16 %v443
    %v1339 = vunpack.c.l.b16 %v444
    %v1340 = vunpack.c.h.b16 %v444
    %v1341 = vunpack.c.l.b16 %v445
    %v1342 = vunpack.c.h.b16 %v445
    %v1343 = vunpack.c.l.b16 %v446
    %v1344 = vunpack.c.h.b16 %v446
    %v1345 = vunpack.c.l.b16 %v447
    %v1346 = vunpack.c.h.b16 %v447
    %v1347 = vunpack.c.l.b16 %v448
    %v1348 = vunpack.c.h.b16 %v448
    %v1349 = vunpack.c.l.b16 %v449
    %v1350 = vunpack.c.h.b16 %v449
    %v1351 = vunpack.c.l.b16 %v450
    %v1352 = vunpack.c.h.b16 %v450
    %v1353 = vunpack.c.l.b16 %v451
    %v1354 = vunpack.c.h.b16 %v451
    %v1355 = vunpack.c.l.b16 %v452
    %v1356 = vunpack.c.h.b16 %v452
    %v1357 = vunpack.c.l.b16 %v453
    %v1358 = vunpack.c.h.b16 %v453
    %v1359 = vunpack.c.l.b16 %v454
    %v1360 = vunpack.c.h.b16 %v454
    %v1361 = vunpack.c.l.b16 %v455
    %v1362 = vunpack.c.h.b16 %v455
    %v1363 = vunpack.c.l.b16 %v456
    %v1364 = vunpack.c.h.b16 %v456
    %v1365 = vunpack.c.l.b16 %v457
    %v1366 = vunpack.c.h.b16 %v457
    %v1367 = vunpack.c.l.b16 %v458
    %v1368 = vunpack.c.h.b16 %v458
    %v1369 = vunpack.c.l.b16 %v459
    %v1370 = vunpack.c.h.b16 %v459
    %v1371 = vunpack.c.l.b16 %v460
    %v1372 = vunpack.c.h.b16 %v460
    %v1373 = vunpack.c.l.b16 %v461
    %v1374 = vunpack.c.h.b16 %v461
    %v1375 = vunpack.c.l.b16 %v462
    %v1376 = vunpack.c.h.b16 %v462
    %v1377 = vunpack.c.l.b16 %v463
    %v1378 = vunpack.c.h.b16 %v463
    %v1379 = vunpack.c.l.b16 %v464
    %v1380 = vunpack.c.h.b16 %v464
    %v1381 = vunpack.c.l.b16 %v465
    %v1382 = vunpack.c.h.b16 %v465
    %v1383 = vpack.c.b16 %v813, %v807
    %v1384 = vpack.c.b16 %v814, %v808
    %v1385 = vpack.c.b16 %v815, %v809
    %v1386 = vpack.c.b16 %v816, %v810
    %v1387 = vpack.c.b16 %v817, %v811
    %v1388 = vpack.c.b16 %v818, %v812
    %v1389 = vpack.c.b16 %v825, %v819
    %v1390 = vpack.c.b16 %v826, %v820
    %v1391 = vpack.c.b16 %v827, %v821
    %v1392 = vpack.c.b16 %v828, %v822
    %v1393 = vpack.c.b16 %v829, %v823
    %v1394 = vpack.c.b16 %v830, %v824
    %v1395 = vpack.c.b16 %v837, %v831
    %v1396 = vpack.c.b16 %v838, %v832
    %v1397 = vpack.c.b16 %v839, %v833
    %v1398 = vpack.c.b16 %v840, %v834
    %v1399 = vpack.c.b16 %v841, %v835
    %v1400 = vpack.c.b16 %v842, %v836
    %v1401 = vpack.c.b16 %v849, %v843
    %v1402 = vpack.c.b16 %v850, %v844
    %v1403 = vpack.c.b16 %v851, %v845
    %v1404 = vpack.c.b16 %v852, %v846
    %v1405 = vpack.c.b16 %v853, %v847
    %v1406 = vpack.c.b16 %v854, %v848
    %v1407 = vpack.c.b16 %v861, %v855
    %v1408 = vpack.c.b16 %v862, %v856
    %v1409 = vpack.c.b16 %v863, %v857
    %v1410 = vpack.c.b16 %v864, %v858
    %v1411 = vpack.c.b16 %v865, %v859
    %v1412 = vpack.c.b16 %v866, %v860
    %v1413 = vpack.c.b16 %v873, %v867
    %v1414 = vpack.c.b16 %v874, %v868
    %v1415 = vpack.c.b16 %v875, %v869
    %v1416 = vpack.c.b16 %v876, %v870
    %v1417 = vpack.c.b16 %v877, %v871
    %v1418 = vpack.c.b16 %v878, %v872
    %v1419 = vpack.c.b16 %v885, %v879
    %v1420 = vpack.c.b16 %v886, %v880
    %v1421 = vpack.c.b16 %v887, %v881
    %v1422 = vpack.c.b16 %v888, %v882
    %v1423 = vpack.c.b16 %v889, %v883
    %v1424 = vpack.c.b16 %v890, %v884
    %v1425 = vpack.c.b16 %v897, %v891
    %v1426 = vpack.c.b16 %v898, %v892
    %v1427 = vpack.c.b16 %v899, %v893
    %v1428 = vpack.c.b16 %v900, %v894
    %v1429 = vpack.c.b16 %v901, %v895
    %v1430 = vpack.c.b16 %v902, %v896
    %v1431 = vpack.c.b16 %v909, %v903
    %v1432 = vpack.c.b16 %v910, %v904
    %v1433 = vpack.c.b16 %v911, %v905
    %v1434 = vpack.c.b16 %v912, %v906
    %v1435 = vpack.c.b16 %v913, %v907
    %v1436 = vpack.c.b16 %v914, %v908
    %v1437 = vpack.c.b16 %v921, %v915
    %v1438 = vpack.c.b16 %v922, %v916
    %v1439 = vpack.c.b16 %v923, %v917
    %v1440 = vpack.c.b16 %v924, %v918
    %v1441 = vpack.c.b16 %v925, %v919
    %v1442 = vpack.c.b16 %v926, %v920
    %v1443 = vpack.c.b16 %v933, %v927
    %v1444 = vpack.c.b16 %v934, %v928
    %v1445 = vpack.c.b16 %v935, %v929
    %v1446 = vpack.c.b16 %v936, %v930
    %v1447 = vpack.c.b16 %v937, %v931
    %v1448 = vpack.c.b16 %v938, %v932
    %v1449 = vpack.c.b16 %v945, %v939
    %v1450 = vpack.c.b16 %v946, %v940
    %v1451 = vpack.c.b16 %v947, %v941
    %v1452 = vpack.c.b16 %v948, %v942
    %v1453 = vpack.c.b16 %v949, %v943
    %v1454 = vpack.c.b16 %v950, %v944
    %v1455 = vpack.c.b16 %v957, %v951
    %v1456 = vpack.c.b16 %v958, %v952
    %v1457 = vpack.c.b16 %v959, %v953
    %v1458 = vpack.c.b16 %v960, %v954
    %v1459 = vpack.c.b16 %v961, %v955
    %v1460 = vpack.c.b16 %v962, %v956
    %v1461 = vpack.c.b16 %v969, %v963
    %v1462 = vpack.c.b16 %v970, %v964
    %v1463 = vpack.c.b16 %v971, %v965
    %v1464 = vpack.c.b16 %v972, %v966
    %v1465 = vpack.c.b16 %v973, %v967
    %v1466 = vpack.c.b16 %v974, %v968
    %v1467 = vpack.c.b16 %v981, %v975
    %v1468 = vpack.c.b16 %v982, %v976
    %v1469 = vpack.c.b16 %v983, %v977
    %v1470 = vpack.c.b16 %v984, %v978
    %v1471 = vpack.c.b16 %v985, %v979
    %v1472 = vpack.c.b16 %v986, %v980
    %v1473 = vpack.c.b16 %v993, %v987
    %v1474 = vpack.c.b16 %v994, %v988
    %v1475 = vpack.c.b16 %v995, %v989
    %v1476 = vpack.c.b16 %v996, %v990
    %v1477 = vpack.c.b16 %v997, %v991
    %v1478 = vpack.c.b16 %v998, %v992
    %v1479 = vpack.c.b16 %v1005, %v999
    %v1480 = vpack.c.b16 %v1006, %v1000
    %v1481 = vpack.c.b16 %v1007, %v1001
    %v1482 = vpack.c.b16 %v1008, %v1002
    %v1483 = vpack.c.b16 %v1009, %v1003
    %v1484 = vpack.c.b16 %v1010, %v1004
    %v1485 = vpack.c.b16 %v1017, %v1011
    %v1486 = vpack.c.b16 %v1018, %v1012
    %v1487 = vpack.c.b16 %v1019, %v1013
    %v1488 = vpack.c.b16 %v1020, %v1014
    %v1489 = vpack.c.b16 %v1021, %v1015
    %v1490 = vpack.c.b16 %v1022, %v1016
    %v1491 = vpack.c.b16 %v1029, %v1023
    %v1492 = vpack.c.b16 %v1030, %v1024
    %v1493 = vpack.c.b16 %v1031, %v1025
    %v1494 = vpack.c.b16 %v1032, %v1026
    %v1495 = vpack.c.b16 %v1033, %v1027
    %v1496 = vpack.c.b16 %v1034, %v1028
    %v1497 = vpack.c.b16 %v1041, %v1035
    %v1498 = vpack.c.b16 %v1042, %v1036
    %v1499 = vpack.c.b16 %v1043, %v1037
    %v1500 = vpack.c.b16 %v1044, %v1038
    %v1501 = vpack.c.b16 %v1045, %v1039
    %v1502 = vpack.c.b16 %v1046, %v1040
    %v1503 = vpack.c.b16 %v1053, %v1047
    %v1504 = vpack.c.b16 %v1054, %v1048
    %v1505 = vpack.c.b16 %v1055, %v1049
    %v1506 = vpack.c.b16 %v1056, %v1050
    %v1507 = vpack.c.b16 %v1057, %v1051
    %v1508 = vpack.c.b16 %v1058, %v1052
    %v1509 = vpack.c.b16 %v1065, %v1059
    %v1510 = vpack.c.b16 %v1066, %v1060
    %v1511 = vpack.c.b16 %v1067, %v1061
    %v1512 = vpack.c.b16 %v1068, %v1062
    %v1513 = vpack.c.b16 %v1069, %v1063
    %v1514 = vpack.c.b16 %v1070, %v1064
    %v1515 = vpack.c.b16 %v1077, %v1071
    %v1516 = vpack.c.b16 %v1078, %v1072
    %v1517 = vpack.c.b16 %v1079, %v1073
    %v1518 = vpack.c.b16 %v1080, %v1074
    %v1519 = vpack.c.b16 %v1081, %v1075
    %v1520 = vpack.c.b16 %v1082, %v1076
    %v1521 = vpack.c.b16 %v1089, %v1083
    %v1522 = vpack.c.b16 %v1090, %v1084
    %v1523 = vpack.c.b16 %v1091, %v1085
    %v1524 = vpack.c.b16 %v1092, %v1086
    %v1525 = vpack.c.b16 %v1093, %v1087
    %v1526 = vpack.c.b16 %v1094, %v1088
    %v1527 = vpack.c.b16 %v1101, %v1095
    %v1528 = vpack.c.b16 %v1102, %v1096
    %v1529 = vpack.c.b16 %v1103, %v1097
    %v1530 = vpack.c.b16 %v1104, %v1098
    %v1531 = vpack.c.b16 %v1105, %v1099
    %v1532 = vpack.c.b16 %v1106, %v1100
    %v1533 = vpack.c.b16 %v1113, %v1107
    %v1534 = vpack.c.b16 %v1114, %v1108
    %v1535 = vpack.c.b16 %v1115, %v1109
    %v1536 = vpack.c.b16 %v1116, %v1110
    %v1537 = vpack.c.b16 %v1117, %v1111
    %v1538 = vpack.c.b16 %v1118, %v1112
    %v1539 = vpack.c.b16 %v1125, %v1119
    %v1540 = vpack.c.b16 %v1126, %v1120
    %v1541 = vpack.c.b16 %v1127, %v1121
    %v1542 = vpack.c.b16 %v1128, %v1122
    %v1543 = vpack.c.b16 %v1129, %v1123
    %v1544 = vpack.c.b16 %v1130, %v1124
    %v1545 = vpack.c.b16 %v1137, %v1131
    %v1546 = vpack.c.b16 %v1138, %v1132
    %v1547 = vpack.c.b16 %v1139, %v1133
    %v1548 = vpack.c.b16 %v1140, %v1134
    %v1549 = vpack.c.b16 %v1141, %v1135
    %v1550 = vpack.c.b16 %v1142, %v1136
    %v1551 = vpack.c.b16 %v1149, %v1143
    %v1552 = vpack.c.b16 %v1150, %v1144
    %v1553 = vpack.c.b16 %v1151, %v1145
    %v1554 = vpack.c.b16 %v1152, %v1146
    %v1555 = vpack.c.b16 %v1153, %v1147
    %v1556 = vpack.c.b16 %v1154, %v1148
    %v1557 = vpack.c.b16 %v1161, %v1155
    %v1558 = vpack.c.b16 %v1162, %v1156
    %v1559 = vpack.c.b16 %v1163, %v1157
    %v1560 = vpack.c.b16 %v1164, %v1158
    %v1561 = vpack.c.b16 %v1165, %v1159
    %v1562 = vpack.c.b16 %v1166, %v1160
    %v1563 = vpack.c.b16 %v1173, %v1167
    %v1564 = vpack.c.b16 %v1174, %v1168
    %v1565 = vpack.c.b16 %v1175, %v1169
    %v1566 = vpack.c.b16 %v1176, %v1170
    %v1567 = vpack.c.b16 %v1177, %v1171
    %v1568 = vpack.c.b16 %v1178, %v1172
    %v1569 = vpack.c.b16 %v1185, %v1179
    %v1570 = vpack.c.b16 %v1186, %v1180
    %v1571 = vpack.c.b16 %v1187, %v1181
    %v1572 = vpack.c.b16 %v1188, %v1182
    %v1573 = vpack.c.b16 %v1189, %v1183
    %v1574 = vpack.c.b16 %v1190, %v1184
    %v1575 = vpack.c.b16 %v1197, %v1191
    %v1576 = vpack.c.b16 %v1198, %v1192
    %v1577 = vpack.c.b16 %v1199, %v1193
    %v1578 = vpack.c.b16 %v1200, %v1194
    %v1579 = vpack.c.b16 %v1201, %v1195
    %v1580 = vpack.c.b16 %v1202, %v1196
    %v1581 = vpack.c.b16 %v1209, %v1203
    %v1582 = vpack.c.b16 %v1210, %v1204
    %v1583 = vpack.c.b16 %v1211, %v1205
    %v1584 = vpack.c.b16 %v1212, %v1206
    %v1585 = vpack.c.b16 %v1213, %v1207
    %v1586 = vpack.c.b16 %v1214, %v1208
    %v1587 = vpack.c.b16 %v1221, %v1215
    %v1588 = vpack.c.b16 %v1222, %v1216
    %v1589 = vpack.c.b16 %v1223, %v1217
    %v1590 = vpack.c.b16 %v1224, %v1218
    %v1591 = vpack.c.b16 %v1225, %v1219
    %v1592 = vpack.c.b16 %v1226, %v1220
    %v1593 = vpack.c.b16 %v1233, %v1227
    %v1594 = vpack.c.b16 %v1234, %v1228
    %v1595 = vpack.c.b16 %v1235, %v1229
    %v1596 = vpack.c.b16 %v1236, %v1230
    %v1597 = vpack.c.b16 %v1237, %v1231
    %v1598 = vpack.c.b16 %v1238, %v1232
    %v1599 = vpack.c.b16 %v1245, %v1239
    %v1600 = vpack.c.b16 %v1246, %v1240
    %v1601 = vpack.c.b16 %v1247, %v1241
    %v1602 = vpack.c.b16 %v1248, %v1242
    %v1603 = vpack.c.b16 %v1249, %v1243
    %v1604 = vpack.c.b16 %v1250, %v1244
    %v1605 = vpack.c.b16 %v1257, %v1251
    %v1606 = vpack.c.b16 %v1258, %v1252
    %v1607 = vpack.c.b16 %v1259, %v1253
    %v1608 = vpack.c.b16 %v1260, %v1254
    %v1609 = vpack.c.b16 %v1261, %v1255
    %v1610 = vpack.c.b16 %v1262, %v1256
    %v1611 = vpack.c.b16 %v1269, %v1263
    %v1612 = vpack.c.b16 %v1270, %v1264
    %v1613 = vpack.c.b16 %v1271, %v1265
    %v1614 = vpack.c.b16 %v1272, %v1266
    %v1615 = vpack.c.b16 %v1273, %v1267
    %v1616 = vpack.c.b16 %v1274, %v1268
    %v1617 = vpack.c.b16 %v1281, %v1275
    %v1618 = vpack.c.b16 %v1282, %v1276
    %v1619 = vpack.c.b16 %v1283, %v1277
    %v1620 = vpack.c.b16 %v1284, %v1278
    %v1621 = vpack.c.b16 %v1285, %v1279
    %v1622 = vpack.c.b16 %v1286, %v1280
    %v1623 = vpack.c.b16 %v1293, %v1287
    %v1624 = vpack.c.b16 %v1294, %v1288
    %v1625 = vpack.c.b16 %v1295, %v1289
    %v1626 = vpack.c.b16 %v1296, %v1290
    %v1627 = vpack.c.b16 %v1297, %v1291
    %v1628 = vpack.c.b16 %v1298, %v1292
    %v1629 = vpack.c.b16 %v1305, %v1299
    %v1630 = vpack.c.b16 %v1306, %v1300
    %v1631 = vpack.c.b16 %v1307, %v1301
    %v1632 = vpack.c.b16 %v1308, %v1302
    %v1633 = vpack.c.b16 %v1309, %v1303
    %v1634 = vpack.c.b16 %v1310, %v1304
    %v1635 = vpack.c.b16 %v1317, %v1311
    %v1636 = vpack.c.b16 %v1318, %v1312
    %v1637 = vpack.c.b16 %v1319, %v1313
    %v1638 = vpack.c.b16 %v1320, %v1314
    %v1639 = vpack.c.b16 %v1321, %v1315
    %v1640 = vpack.c.b16 %v1322, %v1316
    %v1641 = vpack.c.b16 %v1329, %v1323
    %v1642 = vpack.c.b16 %v1330, %v1324
    %v1643 = vpack.c.b16 %v1331, %v1325
    %v1644 = vpack.c.b16 %v1332, %v1326
    %v1645 = vpack.c.b16 %v1333, %v1327
    %v1646 = vpack.c.b16 %v1334, %v1328
    %v1647 = vpack.c.b16 %v1341, %v1335
    %v1648 = vpack.c.b16 %v1342, %v1336
    %v1649 = vpack.c.b16 %v1343, %v1337
    %v1650 = vpack.c.b16 %v1344, %v1338
    %v1651 = vpack.c.b16 %v1345, %v1339
    %v1652 = vpack.c.b16 %v1346, %v1340
    %v1653 = vpack.c.b16 %v1353, %v1347
    %v1654 = vpack.c.b16 %v1354, %v1348
    %v1655 = vpack.c.b16 %v1355, %v1349
    %v1656 = vpack.c.b16 %v1356, %v1350
    %v1657 = vpack.c.b16 %v1357, %v1351
    %v1658 = vpack.c.b16 %v1358, %v1352
    %v1659 = vpack.c.b16 %v1365, %v1359
    %v1660 = vpack.c.b16 %v1366, %v1360
    %v1661 = vpack.c.b16 %v1367, %v1361
    %v1662 = vpack.c.b16 %v1368, %v1362
    %v1663 = vpack.c.b16 %v1369, %v1363
    %v1664 = vpack.c.b16 %v1370, %v1364
    %v1665 = vpack.c.b16 %v1377, %v1371
    %v1666 = vpack.c.b16 %v1378, %v1372
    %v1667 = vpack.c.b16 %v1379, %v1373
    %v1668 = vpack.c.b16 %v1380, %v1374
    %v1669 = vpack.c.b16 %v1381, %v1375
    %v1670 = vpack.c.b16 %v1382, %v1376
    %1959 = vmatprep.subr.bf16.mxu0 %v1384
    %1960 = vmatpush1.bf16.msra.mxu0 %v1383
    %1961 = vmatprep.subr.bf16.mxu0 %v1390
    %1962 = vmatpush1.bf16.msra.mxu0 %v1389
    %1963 = vmatprep.subr.bf16.mxu0 %v1396
    %1964 = vmatpush1.bf16.msra.mxu0 %v1395
    %1965 = vmatprep.subr.bf16.mxu0 %v1402
    %1966 = vmatpush1.bf16.msra.mxu0 %v1401
    %1967 = vmatprep.subr.bf16.mxu0 %v1408
    %1968 = vmatpush1.bf16.msra.mxu0 %v1407
    %1969 = vmatprep.subr.bf16.mxu0 %v1414
    %1970 = vmatpush1.bf16.msra.mxu0 %v1413
    %1971 = vmatprep.subr.bf16.mxu0 %v1420
    %1972 = vmatpush1.bf16.msra.mxu0 %v1419
    %1973 = vmatprep.subr.bf16.mxu0 %v1426
    %1974 = vmatpush1.bf16.msra.mxu0 %v1425
    %1975 = vmatprep.subr.bf16.mxu0 %v1432
    %1976 = vmatpush1.bf16.msra.mxu0 %v1431
    %1977 = vmatprep.subr.bf16.mxu0 %v1438
    %1978 = vmatpush1.bf16.msra.mxu0 %v1437
    %1979 = vmatprep.subr.bf16.mxu0 %v1444
    %1980 = vmatpush1.bf16.msra.mxu0 %v1443
    %1981 = vmatprep.subr.bf16.mxu0 %v1450
    %1982 = vmatpush1.bf16.msra.mxu0 %v1449
    %1983 = vmatprep.subr.bf16.mxu0 %v1456
    %1984 = vmatpush1.bf16.msra.mxu0 %v1455
    %1985 = vmatprep.subr.bf16.mxu0 %v1462
    %1986 = vmatpush1.bf16.msra.mxu0 %v1461
    %1987 = vmatprep.subr.bf16.mxu0 %v1468
    %1988 = vmatpush1.bf16.msra.mxu0 %v1467
    %1989 = vmatprep.subr.bf16.mxu0 %v1474
    %1990 = vmatpush1.bf16.msra.mxu0 %v1473
    %1991 = vmatprep.mubr.bf16.mxu0 %v508
    %1992 = vmatmul.mubr.bf16.gmra.mrb[0].mxu0 %v507
    %v1993 = vpop.f32.mrb[0].mxu0
    %v1994 = vadd.f32 %v471, %v1993
    %v1995 = vpop.f32.mrb[0].mxu0
    %v1996 = vadd.f32 %v475, %v1995
    %v1997 = vpop.f32.mrb[0].mxu0
    %v1998 = vpop.f32.mrb[0].mxu0
    %1999 = vdwg.mxu0
    %2000 = vmatprep.subr.bf16.mxu0 %v1480
    %2001 = vmatpush1.bf16.msra.mxu0 %v1479
    %2002 = vmatprep.subr.bf16.mxu0 %v1486
    %2003 = vmatpush1.bf16.msra.mxu0 %v1485
    %2004 = vmatprep.subr.bf16.mxu0 %v1492
    %2005 = vmatpush1.bf16.msra.mxu0 %v1491
    %2006 = vmatprep.subr.bf16.mxu0 %v1498
    %2007 = vmatpush1.bf16.msra.mxu0 %v1497
    %2008 = vmatprep.subr.bf16.mxu0 %v1504
    %2009 = vmatpush1.bf16.msra.mxu0 %v1503
    %2010 = vmatprep.subr.bf16.mxu0 %v1510
    %2011 = vmatpush1.bf16.msra.mxu0 %v1509
    %2012 = vmatprep.subr.bf16.mxu0 %v1516
    %2013 = vmatpush1.bf16.msra.mxu0 %v1515
    %2014 = vmatprep.subr.bf16.mxu0 %v1522
    %2015 = vmatpush1.bf16.msra.mxu0 %v1521
    %2016 = vmatprep.subr.bf16.mxu0 %v1528
    %2017 = vmatpush1.bf16.msra.mxu0 %v1527
    %2018 = vmatprep.subr.bf16.mxu0 %v1534
    %2019 = vmatpush1.bf16.msra.mxu0 %v1533
    %2020 = vmatprep.subr.bf16.mxu0 %v1540
    %2021 = vmatpush1.bf16.msra.mxu0 %v1539
    %2022 = vmatprep.subr.bf16.mxu0 %v1546
    %2023 = vmatpush1.bf16.msra.mxu0 %v1545
    %2024 = vmatprep.subr.bf16.mxu0 %v1552
    %2025 = vmatpush1.bf16.msra.mxu0 %v1551
    %2026 = vmatprep.subr.bf16.mxu0 %v1558
    %2027 = vmatpush1.bf16.msra.mxu0 %v1557
    %2028 = vmatprep.subr.bf16.mxu0 %v1564
    %2029 = vmatpush1.bf16.msra.mxu0 %v1563
    %2030 = vmatprep.subr.bf16.mxu0 %v1570
    %2031 = vmatpush1.bf16.msra.mxu0 %v1569
    %2032 = vmatprep.mubr.bf16.mxu0 %v510
    %2033 = vmatmul.mubr.bf16.gmra.mrb[0].mxu0 %v509
    %v2034 = vpop.f32.mrb[0].mxu0
    %v2035 = vadd.f32 %v1994, %v2034
    %v2036 = vpop.f32.mrb[0].mxu0
    %v2037 = vadd.f32 %v1996, %v2036
    %v2038 = vpop.f32.mrb[0].mxu0
    %v2039 = vpop.f32.mrb[0].mxu0
    %2040 = vdwg.mxu0
    %2041 = vmatprep.subr.bf16.mxu0 %v1576
    %2042 = vmatpush1.bf16.msra.mxu0 %v1575
    %2043 = vmatprep.subr.bf16.mxu0 %v1582
    %2044 = vmatpush1.bf16.msra.mxu0 %v1581
    %2045 = vmatprep.subr.bf16.mxu0 %v1588
    %2046 = vmatpush1.bf16.msra.mxu0 %v1587
    %2047 = vmatprep.subr.bf16.mxu0 %v1594
    %2048 = vmatpush1.bf16.msra.mxu0 %v1593
    %2049 = vmatprep.subr.bf16.mxu0 %v1600
    %2050 = vmatpush1.bf16.msra.mxu0 %v1599
    %2051 = vmatprep.subr.bf16.mxu0 %v1606
    %2052 = vmatpush1.bf16.msra.mxu0 %v1605
    %2053 = vmatprep.subr.bf16.mxu0 %v1612
    %2054 = vmatpush1.bf16.msra.mxu0 %v1611
    %2055 = vmatprep.subr.bf16.mxu0 %v1618
    %2056 = vmatpush1.bf16.msra.mxu0 %v1617
    %2057 = vmatprep.subr.bf16.mxu0 %v1624
    %2058 = vmatpush1.bf16.msra.mxu0 %v1623
    %2059 = vmatprep.subr.bf16.mxu0 %v1630
    %2060 = vmatpush1.bf16.msra.mxu0 %v1629
    %2061 = vmatprep.subr.bf16.mxu0 %v1636
    %2062 = vmatpush1.bf16.msra.mxu0 %v1635
    %2063 = vmatprep.subr.bf16.mxu0 %v1642
    %2064 = vmatpush1.bf16.msra.mxu0 %v1641
    %2065 = vmatprep.subr.bf16.mxu0 %v1648
    %2066 = vmatpush1.bf16.msra.mxu0 %v1647
    %2067 = vmatprep.subr.bf16.mxu0 %v1654
    %2068 = vmatpush1.bf16.msra.mxu0 %v1653
    %2069 = vmatprep.subr.bf16.mxu0 %v1660
    %2070 = vmatpush1.bf16.msra.mxu0 %v1659
    %2071 = vmatprep.subr.bf16.mxu0 %v1666
    %2072 = vmatpush1.bf16.msra.mxu0 %v1665
    %2073 = vmatprep.mubr.bf16.mxu0 %v512
    %2074 = vmatmul.mubr.bf16.gmra.mrb[0].mxu0 %v511
    %v2075 = vpop.f32.mrb[0].mxu0
    %v2076 = vadd.f32 %v2035, %v2075
    %v2077 = vpop.f32.mrb[0].mxu0
    %v2078 = vadd.f32 %v2037, %v2077
    %v2079 = vpop.f32.mrb[0].mxu0
    %v2080 = vpop.f32.mrb[0].mxu0
    %2081 = vdwg.mxu0
    %2082 = vmatprep.subr.bf16.mxu0 %v1386
    %2083 = vmatpush1.bf16.msra.mxu0 %v1385
    %2084 = vmatprep.subr.bf16.mxu0 %v1392
    %2085 = vmatpush1.bf16.msra.mxu0 %v1391
    %2086 = vmatprep.subr.bf16.mxu0 %v1398
    %2087 = vmatpush1.bf16.msra.mxu0 %v1397
    %2088 = vmatprep.subr.bf16.mxu0 %v1404
    %2089 = vmatpush1.bf16.msra.mxu0 %v1403
    %2090 = vmatprep.subr.bf16.mxu0 %v1410
    %2091 = vmatpush1.bf16.msra.mxu0 %v1409
    %2092 = vmatprep.subr.bf16.mxu0 %v1416
    %2093 = vmatpush1.bf16.msra.mxu0 %v1415
    %2094 = vmatprep.subr.bf16.mxu0 %v1422
    %2095 = vmatpush1.bf16.msra.mxu0 %v1421
    %2096 = vmatprep.subr.bf16.mxu0 %v1428
    %2097 = vmatpush1.bf16.msra.mxu0 %v1427
    %2098 = vmatprep.subr.bf16.mxu0 %v1434
    %2099 = vmatpush1.bf16.msra.mxu0 %v1433
    %2100 = vmatprep.subr.bf16.mxu0 %v1440
    %2101 = vmatpush1.bf16.msra.mxu0 %v1439
    %2102 = vmatprep.subr.bf16.mxu0 %v1446
    %2103 = vmatpush1.bf16.msra.mxu0 %v1445
    %2104 = vmatprep.subr.bf16.mxu0 %v1452
    %2105 = vmatpush1.bf16.msra.mxu0 %v1451
    %2106 = vmatprep.subr.bf16.mxu0 %v1458
    %2107 = vmatpush1.bf16.msra.mxu0 %v1457
    %2108 = vmatprep.subr.bf16.mxu0 %v1464
    %2109 = vmatpush1.bf16.msra.mxu0 %v1463
    %2110 = vmatprep.subr.bf16.mxu0 %v1470
    %2111 = vmatpush1.bf16.msra.mxu0 %v1469
    %2112 = vmatprep.subr.bf16.mxu0 %v1476
    %2113 = vmatpush1.bf16.msra.mxu0 %v1475
    %2114 = vmatprep.mubr.bf16.mxu0 %v508
    %2115 = vmatmul.mubr.bf16.gmra.mrb[0].mxu0 %v507
    %v2116 = vpop.f32.mrb[0].mxu0
    %v2117 = vadd.f32 %v479, %v2116
    %v2118 = vpop.f32.mrb[0].mxu0
    %v2119 = vadd.f32 %v483, %v2118
    %v2120 = vpop.f32.mrb[0].mxu0
    %v2121 = vpop.f32.mrb[0].mxu0
    %2122 = vdwg.mxu0
    %2123 = vmatprep.subr.bf16.mxu0 %v1482
    %2124 = vmatpush1.bf16.msra.mxu0 %v1481
    %2125 = vmatprep.subr.bf16.mxu0 %v1488
    %2126 = vmatpush1.bf16.msra.mxu0 %v1487
    %2127 = vmatprep.subr.bf16.mxu0 %v1494
    %2128 = vmatpush1.bf16.msra.mxu0 %v1493
    %2129 = vmatprep.subr.bf16.mxu0 %v1500
    %2130 = vmatpush1.bf16.msra.mxu0 %v1499
    %2131 = vmatprep.subr.bf16.mxu0 %v1506
    %2132 = vmatpush1.bf16.msra.mxu0 %v1505
    %2133 = vmatprep.subr.bf16.mxu0 %v1512
    %2134 = vmatpush1.bf16.msra.mxu0 %v1511
    %2135 = vmatprep.subr.bf16.mxu0 %v1518
    %2136 = vmatpush1.bf16.msra.mxu0 %v1517
    %2137 = vmatprep.subr.bf16.mxu0 %v1524
    %2138 = vmatpush1.bf16.msra.mxu0 %v1523
    %2139 = vmatprep.subr.bf16.mxu0 %v1530
    %2140 = vmatpush1.bf16.msra.mxu0 %v1529
    %2141 = vmatprep.subr.bf16.mxu0 %v1536
    %2142 = vmatpush1.bf16.msra.mxu0 %v1535
    %2143 = vmatprep.subr.bf16.mxu0 %v1542
    %2144 = vmatpush1.bf16.msra.mxu0 %v1541
    %2145 = vmatprep.subr.bf16.mxu0 %v1548
    %2146 = vmatpush1.bf16.msra.mxu0 %v1547
    %2147 = vmatprep.subr.bf16.mxu0 %v1554
    %2148 = vmatpush1.bf16.msra.mxu0 %v1553
    %2149 = vmatprep.subr.bf16.mxu0 %v1560
    %2150 = vmatpush1.bf16.msra.mxu0 %v1559
    %2151 = vmatprep.subr.bf16.mxu0 %v1566
    %2152 = vmatpush1.bf16.msra.mxu0 %v1565
    %2153 = vmatprep.subr.bf16.mxu0 %v1572
    %2154 = vmatpush1.bf16.msra.mxu0 %v1571
    %2155 = vmatprep.mubr.bf16.mxu0 %v510
    %2156 = vmatmul.mubr.bf16.gmra.mrb[0].mxu0 %v509
    %v2157 = vpop.f32.mrb[0].mxu0
    %v2158 = vadd.f32 %v2117, %v2157
    %v2159 = vpop.f32.mrb[0].mxu0
    %v2160 = vadd.f32 %v2119, %v2159
    %v2161 = vpop.f32.mrb[0].mxu0
    %v2162 = vpop.f32.mrb[0].mxu0
    %2163 = vdwg.mxu0
    %2164 = vmatprep.subr.bf16.mxu0 %v1578
    %2165 = vmatpush1.bf16.msra.mxu0 %v1577
    %2166 = vmatprep.subr.bf16.mxu0 %v1584
    %2167 = vmatpush1.bf16.msra.mxu0 %v1583
    %2168 = vmatprep.subr.bf16.mxu0 %v1590
    %2169 = vmatpush1.bf16.msra.mxu0 %v1589
    %2170 = vmatprep.subr.bf16.mxu0 %v1596
    %2171 = vmatpush1.bf16.msra.mxu0 %v1595
    %2172 = vmatprep.subr.bf16.mxu0 %v1602
    %2173 = vmatpush1.bf16.msra.mxu0 %v1601
    %2174 = vmatprep.subr.bf16.mxu0 %v1608
    %2175 = vmatpush1.bf16.msra.mxu0 %v1607
    %2176 = vmatprep.subr.bf16.mxu0 %v1614
    %2177 = vmatpush1.bf16.msra.mxu0 %v1613
    %2178 = vmatprep.subr.bf16.mxu0 %v1620
    %2179 = vmatpush1.bf16.msra.mxu0 %v1619
    %2180 = vmatprep.subr.bf16.mxu0 %v1626
    %2181 = vmatpush1.bf16.msra.mxu0 %v1625
    %2182 = vmatprep.subr.bf16.mxu0 %v1632
    %2183 = vmatpush1.bf16.msra.mxu0 %v1631
    %2184 = vmatprep.subr.bf16.mxu0 %v1638
    %2185 = vmatpush1.bf16.msra.mxu0 %v1637
    %2186 = vmatprep.subr.bf16.mxu0 %v1644
    %2187 = vmatpush1.bf16.msra.mxu0 %v1643
    %2188 = vmatprep.subr.bf16.mxu0 %v1650
    %2189 = vmatpush1.bf16.msra.mxu0 %v1649
    %2190 = vmatprep.subr.bf16.mxu0 %v1656
    %2191 = vmatpush1.bf16.msra.mxu0 %v1655
    %2192 = vmatprep.subr.bf16.mxu0 %v1662
    %2193 = vmatpush1.bf16.msra.mxu0 %v1661
    %2194 = vmatprep.subr.bf16.mxu0 %v1668
    %2195 = vmatpush1.bf16.msra.mxu0 %v1667
    %2196 = vmatprep.mubr.bf16.mxu0 %v512
    %2197 = vmatmul.mubr.bf16.gmra.mrb[0].mxu0 %v511
    %v2198 = vpop.f32.mrb[0].mxu0
    %v2199 = vadd.f32 %v2158, %v2198
    %v2200 = vpop.f32.mrb[0].mxu0
    %v2201 = vadd.f32 %v2160, %v2200
    %v2202 = vpop.f32.mrb[0].mxu0
    %v2203 = vpop.f32.mrb[0].mxu0
    %2204 = vdwg.mxu0
    %2205 = vmatprep.subr.bf16.mxu0 %v1388
    %2206 = vmatpush1.bf16.msra.mxu0 %v1387
    %2207 = vmatprep.subr.bf16.mxu0 %v1394
    %2208 = vmatpush1.bf16.msra.mxu0 %v1393
    %2209 = vmatprep.subr.bf16.mxu0 %v1400
    %2210 = vmatpush1.bf16.msra.mxu0 %v1399
    %2211 = vmatprep.subr.bf16.mxu0 %v1406
    %2212 = vmatpush1.bf16.msra.mxu0 %v1405
    %2213 = vmatprep.subr.bf16.mxu0 %v1412
    %2214 = vmatpush1.bf16.msra.mxu0 %v1411
    %2215 = vmatprep.subr.bf16.mxu0 %v1418
    %2216 = vmatpush1.bf16.msra.mxu0 %v1417
    %2217 = vmatprep.subr.bf16.mxu0 %v1424
    %2218 = vmatpush1.bf16.msra.mxu0 %v1423
    %2219 = vmatprep.subr.bf16.mxu0 %v1430
    %2220 = vmatpush1.bf16.msra.mxu0 %v1429
    %2221 = vmatprep.subr.bf16.mxu0 %v1436
    %2222 = vmatpush1.bf16.msra.mxu0 %v1435
    %2223 = vmatprep.subr.bf16.mxu0 %v1442
    %2224 = vmatpush1.bf16.msra.mxu0 %v1441
    %2225 = vmatprep.subr.bf16.mxu0 %v1448
    %2226 = vmatpush1.bf16.msra.mxu0 %v1447
    %2227 = vmatprep.subr.bf16.mxu0 %v1454
    %2228 = vmatpush1.bf16.msra.mxu0 %v1453
    %2229 = vmatprep.subr.bf16.mxu0 %v1460
    %2230 = vmatpush1.bf16.msra.mxu0 %v1459
    %2231 = vmatprep.subr.bf16.mxu0 %v1466
    %2232 = vmatpush1.bf16.msra.mxu0 %v1465
    %2233 = vmatprep.subr.bf16.mxu0 %v1472
    %2234 = vmatpush1.bf16.msra.mxu0 %v1471
    %2235 = vmatprep.subr.bf16.mxu0 %v1478
    %2236 = vmatpush1.bf16.msra.mxu0 %v1477
    %2237 = vmatprep.mubr.bf16.mxu0 %v508
    %2238 = vmatmul.mubr.bf16.gmra.mrb[0].mxu0 %v507
    %v2239 = vpop.f32.mrb[0].mxu0
    %v2240 = vadd.f32 %v487, %v2239
    %v2241 = vpop.f32.mrb[0].mxu0
    %v2242 = vadd.f32 %v491, %v2241
    %v2243 = vpop.f32.mrb[0].mxu0
    %v2244 = vpop.f32.mrb[0].mxu0
    %2245 = vdwg.mxu0
    %2246 = vmatprep.subr.bf16.mxu0 %v1484
    %2247 = vmatpush1.bf16.msra.mxu0 %v1483
    %2248 = vmatprep.subr.bf16.mxu0 %v1490
    %2249 = vmatpush1.bf16.msra.mxu0 %v1489
    %2250 = vmatprep.subr.bf16.mxu0 %v1496
    %2251 = vmatpush1.bf16.msra.mxu0 %v1495
    %2252 = vmatprep.subr.bf16.mxu0 %v1502
    %2253 = vmatpush1.bf16.msra.mxu0 %v1501
    %2254 = vmatprep.subr.bf16.mxu0 %v1508
    %2255 = vmatpush1.bf16.msra.mxu0 %v1507
    %2256 = vmatprep.subr.bf16.mxu0 %v1514
    %2257 = vmatpush1.bf16.msra.mxu0 %v1513
    %2258 = vmatprep.subr.bf16.mxu0 %v1520
    %2259 = vmatpush1.bf16.msra.mxu0 %v1519
    %2260 = vmatprep.subr.bf16.mxu0 %v1526
    %2261 = vmatpush1.bf16.msra.mxu0 %v1525
    %2262 = vmatprep.subr.bf16.mxu0 %v1532
    %2263 = vmatpush1.bf16.msra.mxu0 %v1531
    %2264 = vmatprep.subr.bf16.mxu0 %v1538
    %2265 = vmatpush1.bf16.msra.mxu0 %v1537
    %2266 = vmatprep.subr.bf16.mxu0 %v1544
    %2267 = vmatpush1.bf16.msra.mxu0 %v1543
    %2268 = vmatprep.subr.bf16.mxu0 %v1550
    %2269 = vmatpush1.bf16.msra.mxu0 %v1549
    %2270 = vmatprep.subr.bf16.mxu0 %v1556
    %2271 = vmatpush1.bf16.msra.mxu0 %v1555
    %2272 = vmatprep.subr.bf16.mxu0 %v1562
    %2273 = vmatpush1.bf16.msra.mxu0 %v1561
    %2274 = vmatprep.subr.bf16.mxu0 %v1568
    %2275 = vmatpush1.bf16.msra.mxu0 %v1567
    %2276 = vmatprep.subr.bf16.mxu0 %v1574
    %2277 = vmatpush1.bf16.msra.mxu0 %v1573
    %2278 = vmatprep.mubr.bf16.mxu0 %v510
    %2279 = vmatmul.mubr.bf16.gmra.mrb[0].mxu0 %v509
    %v2280 = vpop.f32.mrb[0].mxu0
    %v2281 = vadd.f32 %v2240, %v2280
    %v2282 = vpop.f32.mrb[0].mxu0
    %v2283 = vadd.f32 %v2242, %v2282
    %v2284 = vpop.f32.mrb[0].mxu0
    %v2285 = vpop.f32.mrb[0].mxu0
    %2286 = vdwg.mxu0
    %2287 = vmatprep.subr.bf16.mxu0 %v1580
    %2288 = vmatpush1.bf16.msra.mxu0 %v1579
    %2289 = vmatprep.subr.bf16.mxu0 %v1586
    %2290 = vmatpush1.bf16.msra.mxu0 %v1585
    %2291 = vmatprep.subr.bf16.mxu0 %v1592
    %2292 = vmatpush1.bf16.msra.mxu0 %v1591
    %2293 = vmatprep.subr.bf16.mxu0 %v1598
    %2294 = vmatpush1.bf16.msra.mxu0 %v1597
    %2295 = vmatprep.subr.bf16.mxu0 %v1604
    %2296 = vmatpush1.bf16.msra.mxu0 %v1603
    %2297 = vmatprep.subr.bf16.mxu0 %v1610
    %2298 = vmatpush1.bf16.msra.mxu0 %v1609
    %2299 = vmatprep.subr.bf16.mxu0 %v1616
    %2300 = vmatpush1.bf16.msra.mxu0 %v1615
    %2301 = vmatprep.subr.bf16.mxu0 %v1622
    %2302 = vmatpush1.bf16.msra.mxu0 %v1621
    %2303 = vmatprep.subr.bf16.mxu0 %v1628
    %2304 = vmatpush1.bf16.msra.mxu0 %v1627
    %2305 = vmatprep.subr.bf16.mxu0 %v1634
    %2306 = vmatpush1.bf16.msra.mxu0 %v1633
    %2307 = vmatprep.subr.bf16.mxu0 %v1640
    %2308 = vmatpush1.bf16.msra.mxu0 %v1639
    %2309 = vmatprep.subr.bf16.mxu0 %v1646
    %2310 = vmatpush1.bf16.msra.mxu0 %v1645
    %2311 = vmatprep.subr.bf16.mxu0 %v1652
    %2312 = vmatpush1.bf16.msra.mxu0 %v1651
    %2313 = vmatprep.subr.bf16.mxu0 %v1658
    %2314 = vmatpush1.bf16.msra.mxu0 %v1657
    %2315 = vmatprep.subr.bf16.mxu0 %v1664
    %2316 = vmatpush1.bf16.msra.mxu0 %v1663
    %2317 = vmatprep.subr.bf16.mxu0 %v1670
    %2318 = vmatpush1.bf16.msra.mxu0 %v1669
    %2319 = vmatprep.mubr.bf16.mxu0 %v512
    %2320 = vmatmul.mubr.bf16.gmra.mrb[0].mxu0 %v511
    %v2321 = vpop.f32.mrb[0].mxu0
    %v2322 = vadd.f32 %v2281, %v2321
    %v2323 = vpop.f32.mrb[0].mxu0
    %v2324 = vadd.f32 %v2283, %v2323
    %v2325 = vpop.f32.mrb[0].mxu0
    %v2326 = vpop.f32.mrb[0].mxu0
    %2327 = vdwg.mxu0
    %v2328 = vpack.c.bf16 %v2076, %v2076
    %v2329 = vpack.c.bf16 %v2078, %v2078
    %v2330 = vpack.c.bf16 %v2199, %v2199
    %v2331 = vpack.c.bf16 %v2201, %v2201
    %v2332 = vpack.c.bf16 %v2322, %v2322
    %v2333 = vpack.c.bf16 %v2324, %v2324
    %v2334 = vtanh.bf16.pop %v2328
    %v2335 = vtanh.bf16.pop %v2329
    %v2336 = vtanh.bf16.pop %v2330
    %v2337 = vtanh.bf16.pop %v2331
    %v2338 = vtanh.bf16.pop %v2332
    %v2339 = vtanh.bf16.pop %v2333
    %v2340 = vld [vmem:[#allocation10] sm:$0xff]
    %v2341 = vld [vmem:[#allocation10 + $0x8] sm:$0xff]
    %v2342 = vld [vmem:[#allocation10 + $0x10] sm:$0xff]
    %v2343 = vld [vmem:[#allocation10 + $0x18] sm:$0xff]
    %v2344 = vld [vmem:[#allocation10 + $0x20] sm:$0xff]
    %v2345 = vld [vmem:[#allocation10 + $0x28] sm:$0xff]
    %v2346 = vld [vmem:[#allocation10 + $0x30] sm:$0xff]
    %v2347 = vld [vmem:[#allocation10 + $0x38] sm:$0xff]
    %v2348 = vld [vmem:[#allocation10 + $0x40] sm:$0xff]
    %v2349 = vld [vmem:[#allocation10 + $0x48] sm:$0xff]
    %v2350 = vld [vmem:[#allocation10 + $0x50] sm:$0xff]
    %v2351 = vld [vmem:[#allocation10 + $0x58] sm:$0xff]
    %v2352 = vld [vmem:[#allocation10 + $0x60] sm:$0xff]
    %v2353 = vld [vmem:[#allocation10 + $0x68] sm:$0xff]
    %v2354 = vld [vmem:[#allocation10 + $0x70] sm:$0xff]
    %v2355 = vld [vmem:[#allocation10 + $0x78] sm:$0xff]
    %v2356 = vld [vmem:[#allocation10 + $0x80] sm:$0xff]
    %v2357 = vld [vmem:[#allocation10 + $0x88] sm:$0xff]
    %v2358 = vld [vmem:[#allocation10 + $0x90] sm:$0xff]
    %v2359 = vld [vmem:[#allocation10 + $0x98] sm:$0xff]
    %v2360 = vld [vmem:[#allocation10 + $0xa0] sm:$0xff]
    %v2361 = vld [vmem:[#allocation10 + $0xa8] sm:$0xff]
    %v2362 = vld [vmem:[#allocation10 + $0xb0] sm:$0xff]
    %v2363 = vld [vmem:[#allocation10 + $0xb8] sm:$0xff]
    %v2364 = vld [vmem:[#allocation10 + $0xc0] sm:$0xff]
    %v2365 = vld [vmem:[#allocation10 + $0xc8] sm:$0xff]
    %v2366 = vld [vmem:[#allocation10 + $0xd0] sm:$0xff]
    %v2367 = vld [vmem:[#allocation10 + $0xd8] sm:$0xff]
    %v2368 = vld [vmem:[#allocation10 + $0xe0] sm:$0xff]
    %v2369 = vld [vmem:[#allocation10 + $0xe8] sm:$0xff]
    %v2370 = vld [vmem:[#allocation10 + $0xf0] sm:$0xff]
    %v2371 = vld [vmem:[#allocation10 + $0xf8] sm:$0xff]
    %v2372 = vld [vmem:[#allocation10 + $0x100] sm:$0xff]
    %v2373 = vld [vmem:[#allocation10 + $0x108] sm:$0xff]
    %v2374 = vld [vmem:[#allocation10 + $0x110] sm:$0xff]
    %v2375 = vld [vmem:[#allocation10 + $0x118] sm:$0xff]
    %v2376 = vld [vmem:[#allocation10 + $0x120] sm:$0xff]
    %v2377 = vld [vmem:[#allocation10 + $0x128] sm:$0xff]
    %v2378 = vld [vmem:[#allocation10 + $0x130] sm:$0xff]
    %v2379 = vld [vmem:[#allocation10 + $0x138] sm:$0xff]
    %v2380 = vld [vmem:[#allocation10 + $0x140] sm:$0xff]
    %v2381 = vld [vmem:[#allocation10 + $0x148] sm:$0xff]
    %v2382 = vld [vmem:[#allocation10 + $0x150] sm:$0xff]
    %v2383 = vld [vmem:[#allocation10 + $0x158] sm:$0xff]
    %v2384 = vld [vmem:[#allocation10 + $0x160] sm:$0xff]
    %v2385 = vld [vmem:[#allocation10 + $0x168] sm:$0xff]
    %v2386 = vld [vmem:[#allocation10 + $0x170] sm:$0xff]
    %v2387 = vld [vmem:[#allocation10 + $0x178] sm:$0xff]
    %v2388 = vld [vmem:[#allocation10 + $0x180] sm:$0xff]
    %v2389 = vld [vmem:[#allocation10 + $0x188] sm:$0xff]
    %v2390 = vld [vmem:[#allocation10 + $0x190] sm:$0xff]
    %v2391 = vld [vmem:[#allocation10 + $0x198] sm:$0xff]
    %v2392 = vld [vmem:[#allocation10 + $0x1a0] sm:$0xff]
    %v2393 = vld [vmem:[#allocation10 + $0x1a8] sm:$0xff]
    %v2394 = vld [vmem:[#allocation10 + $0x1b0] sm:$0xff]
    %v2395 = vld [vmem:[#allocation10 + $0x1b8] sm:$0xff]
    %v2396 = vld [vmem:[#allocation10 + $0x1c0] sm:$0xff]
    %v2397 = vld [vmem:[#allocation10 + $0x1c8] sm:$0xff]
    %v2398 = vld [vmem:[#allocation10 + $0x1d0] sm:$0xff]
    %v2399 = vld [vmem:[#allocation10 + $0x1d8] sm:$0xff]
    %v2400 = vld [vmem:[#allocation10 + $0x1e0] sm:$0xff]
    %v2401 = vld [vmem:[#allocation10 + $0x1e8] sm:$0xff]
    %v2402 = vld [vmem:[#allocation10 + $0x1f0] sm:$0xff]
    %v2403 = vld [vmem:[#allocation10 + $0x1f8] sm:$0xff]
    %v2404 = vld [vmem:[#allocation10 + $0x200] sm:$0xff]
    %v2405 = vld [vmem:[#allocation10 + $0x208] sm:$0xff]
    %v2406 = vld [vmem:[#allocation10 + $0x210] sm:$0xff]
    %v2407 = vld [vmem:[#allocation10 + $0x218] sm:$0xff]
    %v2408 = vld [vmem:[#allocation10 + $0x220] sm:$0xff]
    %v2409 = vld [vmem:[#allocation10 + $0x228] sm:$0xff]
    %v2410 = vld [vmem:[#allocation10 + $0x230] sm:$0xff]
    %v2411 = vld [vmem:[#allocation10 + $0x238] sm:$0xff]
    %v2412 = vld [vmem:[#allocation10 + $0x240] sm:$0xff]
    %v2413 = vld [vmem:[#allocation10 + $0x248] sm:$0xff]
    %v2414 = vld [vmem:[#allocation10 + $0x250] sm:$0xff]
    %v2415 = vld [vmem:[#allocation10 + $0x258] sm:$0xff]
    %v2416 = vld [vmem:[#allocation10 + $0x260] sm:$0xff]
    %v2417 = vld [vmem:[#allocation10 + $0x268] sm:$0xff]
    %v2418 = vld [vmem:[#allocation10 + $0x270] sm:$0xff]
    %v2419 = vld [vmem:[#allocation10 + $0x278] sm:$0xff]
    %v2420 = vld [vmem:[#allocation10 + $0x280] sm:$0xff]
    %v2421 = vld [vmem:[#allocation10 + $0x288] sm:$0xff]
    %v2422 = vld [vmem:[#allocation10 + $0x290] sm:$0xff]
    %v2423 = vld [vmem:[#allocation10 + $0x298] sm:$0xff]
    %v2424 = vld [vmem:[#allocation10 + $0x2a0] sm:$0xff]
    %v2425 = vld [vmem:[#allocation10 + $0x2a8] sm:$0xff]
    %v2426 = vld [vmem:[#allocation10 + $0x2b0] sm:$0xff]
    %v2427 = vld [vmem:[#allocation10 + $0x2b8] sm:$0xff]
    %v2428 = vld [vmem:[#allocation10 + $0x2c0] sm:$0xff]
    %v2429 = vld [vmem:[#allocation10 + $0x2c8] sm:$0xff]
    %v2430 = vld [vmem:[#allocation10 + $0x2d0] sm:$0xff]
    %v2431 = vld [vmem:[#allocation10 + $0x2d8] sm:$0xff]
    %v2432 = vld [vmem:[#allocation10 + $0x2e0] sm:$0xff]
    %v2433 = vld [vmem:[#allocation10 + $0x2e8] sm:$0xff]
    %v2434 = vld [vmem:[#allocation10 + $0x2f0] sm:$0xff]
    %v2435 = vld [vmem:[#allocation10 + $0x2f8] sm:$0xff]
    %v2436 = vld [vmem:[#allocation10 + $0x300] sm:$0xff]
    %v2437 = vld [vmem:[#allocation10 + $0x308] sm:$0xff]
    %v2438 = vld [vmem:[#allocation10 + $0x310] sm:$0xff]
    %v2439 = vld [vmem:[#allocation10 + $0x318] sm:$0xff]
    %v2440 = vld [vmem:[#allocation10 + $0x320] sm:$0xff]
    %v2441 = vld [vmem:[#allocation10 + $0x328] sm:$0xff]
    %v2442 = vld [vmem:[#allocation10 + $0x330] sm:$0xff]
    %v2443 = vld [vmem:[#allocation10 + $0x338] sm:$0xff]
    %v2444 = vld [vmem:[#allocation10 + $0x340] sm:$0xff]
    %v2445 = vld [vmem:[#allocation10 + $0x348] sm:$0xff]
    %v2446 = vld [vmem:[#allocation10 + $0x350] sm:$0xff]
    %v2447 = vld [vmem:[#allocation10 + $0x358] sm:$0xff]
    %v2448 = vld [vmem:[#allocation10 + $0x360] sm:$0xff]
    %v2449 = vld [vmem:[#allocation10 + $0x368] sm:$0xff]
    %v2450 = vld [vmem:[#allocation10 + $0x370] sm:$0xff]
    %v2451 = vld [vmem:[#allocation10 + $0x378] sm:$0xff]
    %v2452 = vld [vmem:[#allocation10 + $0x380] sm:$0xff]
    %v2453 = vld [vmem:[#allocation10 + $0x388] sm:$0xff]
    %v2454 = vld [vmem:[#allocation10 + $0x390] sm:$0xff]
    %v2455 = vld [vmem:[#allocation10 + $0x398] sm:$0xff]
    %v2456 = vld [vmem:[#allocation10 + $0x3a0] sm:$0xff]
    %v2457 = vld [vmem:[#allocation10 + $0x3a8] sm:$0xff]
    %v2458 = vld [vmem:[#allocation10 + $0x3b0] sm:$0xff]
    %v2459 = vld [vmem:[#allocation10 + $0x3b8] sm:$0xff]
    %v2460 = vld [vmem:[#allocation10 + $0x3c0] sm:$0xff]
    %v2461 = vld [vmem:[#allocation10 + $0x3c8] sm:$0xff]
    %v2462 = vld [vmem:[#allocation10 + $0x3d0] sm:$0xff]
    %v2463 = vld [vmem:[#allocation10 + $0x3d8] sm:$0xff]
    %v2464 = vld [vmem:[#allocation10 + $0x3e0] sm:$0xff]
    %v2465 = vld [vmem:[#allocation10 + $0x3e8] sm:$0xff]
    %v2466 = vld [vmem:[#allocation10 + $0x3f0] sm:$0xff]
    %v2467 = vld [vmem:[#allocation10 + $0x3f8] sm:$0xff]
    %v2468 = vld [vmem:[#allocation10 + $0x400] sm:$0xff]
    %v2469 = vld [vmem:[#allocation10 + $0x408] sm:$0xff]
    %v2470 = vld [vmem:[#allocation10 + $0x410] sm:$0xff]
    %v2471 = vld [vmem:[#allocation10 + $0x418] sm:$0xff]
    %v2472 = vld [vmem:[#allocation10 + $0x420] sm:$0xff]
    %v2473 = vld [vmem:[#allocation10 + $0x428] sm:$0xff]
    %v2474 = vld [vmem:[#allocation10 + $0x430] sm:$0xff]
    %v2475 = vld [vmem:[#allocation10 + $0x438] sm:$0xff]
    %v2476 = vld [vmem:[#allocation10 + $0x440] sm:$0xff]
    %v2477 = vld [vmem:[#allocation10 + $0x448] sm:$0xff]
    %v2478 = vld [vmem:[#allocation10 + $0x450] sm:$0xff]
    %v2479 = vld [vmem:[#allocation10 + $0x458] sm:$0xff]
    %v2480 = vld [vmem:[#allocation10 + $0x460] sm:$0xff]
    %v2481 = vld [vmem:[#allocation10 + $0x468] sm:$0xff]
    %v2482 = vld [vmem:[#allocation10 + $0x470] sm:$0xff]
    %v2483 = vld [vmem:[#allocation10 + $0x478] sm:$0xff]
    %v2484 = vld [vmem:[#allocation10 + $0x480] sm:$0xff]
    %v2485 = vld [vmem:[#allocation10 + $0x488] sm:$0xff]
    %v2486 = vld [vmem:[#allocation10 + $0x490] sm:$0xff]
    %v2487 = vld [vmem:[#allocation10 + $0x498] sm:$0xff]
    %v2488 = vld [vmem:[#allocation10 + $0x4a0] sm:$0xff]
    %v2489 = vld [vmem:[#allocation10 + $0x4a8] sm:$0xff]
    %v2490 = vld [vmem:[#allocation10 + $0x4b0] sm:$0xff]
    %v2491 = vld [vmem:[#allocation10 + $0x4b8] sm:$0xff]
    %v2492 = vld [vmem:[#allocation10 + $0x4c0] sm:$0xff]
    %v2493 = vld [vmem:[#allocation10 + $0x4c8] sm:$0xff]
    %v2494 = vld [vmem:[#allocation10 + $0x4d0] sm:$0xff]
    %v2495 = vld [vmem:[#allocation10 + $0x4d8] sm:$0xff]
    %v2496 = vld [vmem:[#allocation10 + $0x4e0] sm:$0xff]
    %v2497 = vld [vmem:[#allocation10 + $0x4e8] sm:$0xff]
    %v2498 = vld [vmem:[#allocation10 + $0x4f0] sm:$0xff]
    %v2499 = vld [vmem:[#allocation10 + $0x4f8] sm:$0xff]
    %v2500 = vld [vmem:[#allocation10 + $0x500] sm:$0xff]
    %v2501 = vld [vmem:[#allocation10 + $0x508] sm:$0xff]
    %v2502 = vld [vmem:[#allocation10 + $0x510] sm:$0xff]
    %v2503 = vld [vmem:[#allocation10 + $0x518] sm:$0xff]
    %v2504 = vld [vmem:[#allocation10 + $0x520] sm:$0xff]
    %v2505 = vld [vmem:[#allocation10 + $0x528] sm:$0xff]
    %v2506 = vld [vmem:[#allocation10 + $0x530] sm:$0xff]
    %v2507 = vld [vmem:[#allocation10 + $0x538] sm:$0xff]
    %v2508 = vld [vmem:[#allocation10 + $0x540] sm:$0xff]
    %v2509 = vld [vmem:[#allocation10 + $0x548] sm:$0xff]
    %v2510 = vld [vmem:[#allocation10 + $0x550] sm:$0xff]
    %v2511 = vld [vmem:[#allocation10 + $0x558] sm:$0xff]
    %v2512 = vld [vmem:[#allocation10 + $0x560] sm:$0xff]
    %v2513 = vld [vmem:[#allocation10 + $0x568] sm:$0xff]
    %v2514 = vld [vmem:[#allocation10 + $0x570] sm:$0xff]
    %v2515 = vld [vmem:[#allocation10 + $0x578] sm:$0xff]
    %v2516 = vld [vmem:[#allocation10 + $0x580] sm:$0xff]
    %v2517 = vld [vmem:[#allocation10 + $0x588] sm:$0xff]
    %v2518 = vld [vmem:[#allocation10 + $0x590] sm:$0xff]
    %v2519 = vld [vmem:[#allocation10 + $0x598] sm:$0xff]
    %v2520 = vld [vmem:[#allocation10 + $0x5a0] sm:$0xff]
    %v2521 = vld [vmem:[#allocation10 + $0x5a8] sm:$0xff]
    %v2522 = vld [vmem:[#allocation10 + $0x5b0] sm:$0xff]
    %v2523 = vld [vmem:[#allocation10 + $0x5b8] sm:$0xff]
    %v2524 = vld [vmem:[#allocation10 + $0x5c0] sm:$0xff]
    %v2525 = vld [vmem:[#allocation10 + $0x5c8] sm:$0xff]
    %v2526 = vld [vmem:[#allocation10 + $0x5d0] sm:$0xff]
    %v2527 = vld [vmem:[#allocation10 + $0x5d8] sm:$0xff]
    %v2528 = vld [vmem:[#allocation10 + $0x5e0] sm:$0xff]
    %v2529 = vld [vmem:[#allocation10 + $0x5e8] sm:$0xff]
    %v2530 = vld [vmem:[#allocation10 + $0x5f0] sm:$0xff]
    %v2531 = vld [vmem:[#allocation10 + $0x5f8] sm:$0xff]
    %v2532 = vld [vmem:[#allocation10 + $0x600] sm:$0xff]
    %v2533 = vld [vmem:[#allocation10 + $0x608] sm:$0xff]
    %v2534 = vld [vmem:[#allocation10 + $0x610] sm:$0xff]
    %v2535 = vld [vmem:[#allocation10 + $0x618] sm:$0xff]
    %v2536 = vld [vmem:[#allocation10 + $0x620] sm:$0xff]
    %v2537 = vld [vmem:[#allocation10 + $0x628] sm:$0xff]
    %v2538 = vld [vmem:[#allocation10 + $0x630] sm:$0xff]
    %v2539 = vld [vmem:[#allocation10 + $0x638] sm:$0xff]
    %v2540 = vld [vmem:[#allocation10 + $0x640] sm:$0xff]
    %v2541 = vld [vmem:[#allocation10 + $0x648] sm:$0xff]
    %v2542 = vld [vmem:[#allocation10 + $0x650] sm:$0xff]
    %v2543 = vld [vmem:[#allocation10 + $0x658] sm:$0xff]
    %v2544 = vld [vmem:[#allocation10 + $0x660] sm:$0xff]
    %v2545 = vld [vmem:[#allocation10 + $0x668] sm:$0xff]
    %v2546 = vld [vmem:[#allocation10 + $0x670] sm:$0xff]
    %v2547 = vld [vmem:[#allocation10 + $0x678] sm:$0xff]
    %v2548 = vld [vmem:[#allocation10 + $0x680] sm:$0xff]
    %v2549 = vld [vmem:[#allocation10 + $0x688] sm:$0xff]
    %v2550 = vld [vmem:[#allocation10 + $0x690] sm:$0xff]
    %v2551 = vld [vmem:[#allocation10 + $0x698] sm:$0xff]
    %v2552 = vld [vmem:[#allocation10 + $0x6a0] sm:$0xff]
    %v2553 = vld [vmem:[#allocation10 + $0x6a8] sm:$0xff]
    %v2554 = vld [vmem:[#allocation10 + $0x6b0] sm:$0xff]
    %v2555 = vld [vmem:[#allocation10 + $0x6b8] sm:$0xff]
    %v2556 = vld [vmem:[#allocation10 + $0x6c0] sm:$0xff]
    %v2557 = vld [vmem:[#allocation10 + $0x6c8] sm:$0xff]
    %v2558 = vld [vmem:[#allocation10 + $0x6d0] sm:$0xff]
    %v2559 = vld [vmem:[#allocation10 + $0x6d8] sm:$0xff]
    %v2560 = vld [vmem:[#allocation10 + $0x6e0] sm:$0xff]
    %v2561 = vld [vmem:[#allocation10 + $0x6e8] sm:$0xff]
    %v2562 = vld [vmem:[#allocation10 + $0x6f0] sm:$0xff]
    %v2563 = vld [vmem:[#allocation10 + $0x6f8] sm:$0xff]
    %v2564 = vld [vmem:[#allocation10 + $0x700] sm:$0xff]
    %v2565 = vld [vmem:[#allocation10 + $0x708] sm:$0xff]
    %v2566 = vld [vmem:[#allocation10 + $0x710] sm:$0xff]
    %v2567 = vld [vmem:[#allocation10 + $0x718] sm:$0xff]
    %v2568 = vld [vmem:[#allocation10 + $0x720] sm:$0xff]
    %v2569 = vld [vmem:[#allocation10 + $0x728] sm:$0xff]
    %v2570 = vld [vmem:[#allocation10 + $0x730] sm:$0xff]
    %v2571 = vld [vmem:[#allocation10 + $0x738] sm:$0xff]
    %v2572 = vld [vmem:[#allocation10 + $0x740] sm:$0xff]
    %v2573 = vld [vmem:[#allocation10 + $0x748] sm:$0xff]
    %v2574 = vld [vmem:[#allocation10 + $0x750] sm:$0xff]
    %v2575 = vld [vmem:[#allocation10 + $0x758] sm:$0xff]
    %v2576 = vld [vmem:[#allocation10 + $0x760] sm:$0xff]
    %v2577 = vld [vmem:[#allocation10 + $0x768] sm:$0xff]
    %v2578 = vld [vmem:[#allocation10 + $0x770] sm:$0xff]
    %v2579 = vld [vmem:[#allocation10 + $0x778] sm:$0xff]
    %v2580 = vld [vmem:[#allocation10 + $0x780] sm:$0xff]
    %v2581 = vld [vmem:[#allocation10 + $0x788] sm:$0xff]
    %v2582 = vld [vmem:[#allocation10 + $0x790] sm:$0xff]
    %v2583 = vld [vmem:[#allocation10 + $0x798] sm:$0xff]
    %v2584 = vld [vmem:[#allocation10 + $0x7a0] sm:$0xff]
    %v2585 = vld [vmem:[#allocation10 + $0x7a8] sm:$0xff]
    %v2586 = vld [vmem:[#allocation10 + $0x7b0] sm:$0xff]
    %v2587 = vld [vmem:[#allocation10 + $0x7b8] sm:$0xff]
    %v2588 = vld [vmem:[#allocation10 + $0x7c0] sm:$0xff]
    %v2589 = vld [vmem:[#allocation10 + $0x7c8] sm:$0xff]
    %v2590 = vld [vmem:[#allocation10 + $0x7d0] sm:$0xff]
    %v2591 = vld [vmem:[#allocation10 + $0x7d8] sm:$0xff]
    %v2592 = vld [vmem:[#allocation10 + $0x7e0] sm:$0xff]
    %v2593 = vld [vmem:[#allocation10 + $0x7e8] sm:$0xff]
    %v2594 = vld [vmem:[#allocation10 + $0x7f0] sm:$0xff]
    %v2595 = vld [vmem:[#allocation10 + $0x7f8] sm:$0xff]
    %v2596 = vld [vmem:[#allocation10 + $0x800] sm:$0xff]
    %v2597 = vld [vmem:[#allocation10 + $0x808] sm:$0xff]
    %v2598 = vld [vmem:[#allocation10 + $0x810] sm:$0xff]
    %v2599 = vld [vmem:[#allocation10 + $0x818] sm:$0xff]
    %v2600 = vld [vmem:[#allocation10 + $0x820] sm:$0xff]
    %v2601 = vld [vmem:[#allocation10 + $0x828] sm:$0xff]
    %v2602 = vld [vmem:[#allocation10 + $0x830] sm:$0xff]
    %v2603 = vld [vmem:[#allocation10 + $0x838] sm:$0xff]
    %v2604 = vld [vmem:[#allocation10 + $0x840] sm:$0xff]
    %v2605 = vld [vmem:[#allocation10 + $0x848] sm:$0xff]
    %v2606 = vld [vmem:[#allocation10 + $0x850] sm:$0xff]
    %v2607 = vld [vmem:[#allocation10 + $0x858] sm:$0xff]
    %v2608 = vld [vmem:[#allocation10 + $0x860] sm:$0xff]
    %v2609 = vld [vmem:[#allocation10 + $0x868] sm:$0xff]
    %v2610 = vld [vmem:[#allocation10 + $0x870] sm:$0xff]
    %v2611 = vld [vmem:[#allocation10 + $0x878] sm:$0xff]
    %v2612 = vld [vmem:[#allocation10 + $0x880] sm:$0xff]
    %v2613 = vld [vmem:[#allocation10 + $0x888] sm:$0xff]
    %v2614 = vld [vmem:[#allocation10 + $0x890] sm:$0xff]
    %v2615 = vld [vmem:[#allocation10 + $0x898] sm:$0xff]
    %v2616 = vld [vmem:[#allocation10 + $0x8a0] sm:$0xff]
    %v2617 = vld [vmem:[#allocation10 + $0x8a8] sm:$0xff]
    %v2618 = vld [vmem:[#allocation10 + $0x8b0] sm:$0xff]
    %v2619 = vld [vmem:[#allocation10 + $0x8b8] sm:$0xff]
    %v2620 = vld [vmem:[#allocation10 + $0x8c0] sm:$0xff]
    %v2621 = vld [vmem:[#allocation10 + $0x8c8] sm:$0xff]
    %v2622 = vld [vmem:[#allocation10 + $0x8d0] sm:$0xff]
    %v2623 = vld [vmem:[#allocation10 + $0x8d8] sm:$0xff]
    %v2624 = vld [vmem:[#allocation10 + $0x8e0] sm:$0xff]
    %v2625 = vld [vmem:[#allocation10 + $0x8e8] sm:$0xff]
    %v2626 = vld [vmem:[#allocation10 + $0x8f0] sm:$0xff]
    %v2627 = vld [vmem:[#allocation10 + $0x8f8] sm:$0xff]
    %v2628 = vld [vmem:[#allocation5] sm:$0xf]
    %v2629 = vld [vmem:[#allocation11] sm:$0xff]
    %v2630 = vld [vmem:[#allocation11 + $0x8] sm:$0xff]
    %v2631 = vld [vmem:[#allocation11 + $0x10] sm:$0xff]
    %v2635 = vunpack.c.l.b16 %v2629
    %v2636 = vunpack.c.h.b16 %v2629
    %v2637 = vunpack.c.l.b16 %v2630
    %v2638 = vunpack.c.h.b16 %v2630
    %v2639 = vunpack.c.l.b16 %v2631
    %v2640 = vunpack.c.h.b16 %v2631
    %v2641 = vpack.c.b16 %v2635, %v2635
    %v2642 = vpack.c.b16 %v2636, %v2636
    %v2643 = vpack.c.b16 %v2637, %v2637
    %v2644 = vpack.c.b16 %v2638, %v2638
    %v2645 = vpack.c.b16 %v2639, %v2639
    %v2646 = vpack.c.b16 %v2640, %v2640
    %vm2647 = vcmask 64512
    %v2649 = vsel %vm2647, %v2628, 0
    %vm2651 = vcmask 1043456
    %v2653 = vsel %vm2651, %v2641, 0
    %v2656 = vsel %vm2651, %v2642, 0
    %v2659 = vsel %vm2651, %v2643, 0
    %v2662 = vsel %vm2651, %v2644, 0
    %v2665 = vsel %vm2651, %v2645, 0
    %v2668 = vsel %vm2651, %v2646, 0
    %2670 = vmatprep.subr.bf16.mxu0 %v2656
    %2671 = vmatpush1.bf16.msra.mxu0 %v2653
    %2672 = vmatprep.subr.bf16.mxu0 0
    %2673 = vmatpush1.bf16.msra.mxu0 0
    %2674 = vmatprep.subr.bf16.mxu0 0
    %2675 = vmatpush1.bf16.msra.mxu0 0
    %2676 = vmatprep.subr.bf16.mxu0 0
    %2677 = vmatpush1.bf16.msra.mxu0 0
    %2678 = vmatprep.subr.bf16.mxu0 0
    %2679 = vmatpush1.bf16.msra.mxu0 0
    %2680 = vmatprep.subr.bf16.mxu0 0
    %2681 = vmatpush1.bf16.msra.mxu0 0
    %2682 = vmatprep.subr.bf16.mxu0 0
    %2683 = vmatpush1.bf16.msra.mxu0 0
    %2684 = vmatprep.subr.bf16.mxu0 0
    %2685 = vmatpush1.bf16.msra.mxu0 0
    %2686 = vmatprep.subr.bf16.mxu0 0
    %2687 = vmatpush1.bf16.msra.mxu0 0
    %2688 = vmatprep.subr.bf16.mxu0 0
    %2689 = vmatpush1.bf16.msra.mxu0 0
    %2690 = vmatprep.subr.bf16.mxu0 0
    %2691 = vmatpush1.bf16.msra.mxu0 0
    %2692 = vmatprep.subr.bf16.mxu0 0
    %2693 = vmatpush1.bf16.msra.mxu0 0
    %2694 = vmatprep.subr.bf16.mxu0 0
    %2695 = vmatpush1.bf16.msra.mxu0 0
    %2696 = vmatprep.subr.bf16.mxu0 0
    %2697 = vmatpush1.bf16.msra.mxu0 0
    %2698 = vmatprep.subr.bf16.mxu0 0
    %2699 = vmatpush1.bf16.msra.mxu0 0
    %2700 = vmatprep.subr.bf16.mxu0 0
    %2701 = vmatpush1.bf16.msra.mxu0 0
    %2702 = vmatprep.mubr.bf16.mxu0 0
    %2703 = vmatmul.mubr.bf16.gmra.mrb[0].mxu0 %v2649
    %v2704 = vpop.f32.mrb[0].mxu0
    %v2705 = vadd.f32 0.0, %v2704
    %v2706 = vpop.f32.mrb[0].mxu0
    %v2707 = vadd.f32 0.0, %v2706
    %v2708 = vpop.f32.mrb[0].mxu0
    %v2709 = vpop.f32.mrb[0].mxu0
    %2710 = vdwg.mxu0
    %2711 = vmatprep.subr.bf16.mxu0 %v2662
    %2712 = vmatpush1.bf16.msra.mxu0 %v2659
    %2713 = vmatprep.subr.bf16.mxu0 0
    %2714 = vmatpush1.bf16.msra.mxu0 0
    %2715 = vmatprep.subr.bf16.mxu0 0
    %2716 = vmatpush1.bf16.msra.mxu0 0
    %2717 = vmatprep.subr.bf16.mxu0 0
    %2718 = vmatpush1.bf16.msra.mxu0 0
    %2719 = vmatprep.subr.bf16.mxu0 0
    %2720 = vmatpush1.bf16.msra.mxu0 0
    %2721 = vmatprep.subr.bf16.mxu0 0
    %2722 = vmatpush1.bf16.msra.mxu0 0
    %2723 = vmatprep.subr.bf16.mxu0 0
    %2724 = vmatpush1.bf16.msra.mxu0 0
    %2725 = vmatprep.subr.bf16.mxu0 0
    %2726 = vmatpush1.bf16.msra.mxu0 0
    %2727 = vmatprep.subr.bf16.mxu0 0
    %2728 = vmatpush1.bf16.msra.mxu0 0
    %2729 = vmatprep.subr.bf16.mxu0 0
    %2730 = vmatpush1.bf16.msra.mxu0 0
    %2731 = vmatprep.subr.bf16.mxu0 0
    %2732 = vmatpush1.bf16.msra.mxu0 0
    %2733 = vmatprep.subr.bf16.mxu0 0
    %2734 = vmatpush1.bf16.msra.mxu0 0
    %2735 = vmatprep.subr.bf16.mxu0 0
    %2736 = vmatpush1.bf16.msra.mxu0 0
    %2737 = vmatprep.subr.bf16.mxu0 0
    %2738 = vmatpush1.bf16.msra.mxu0 0
    %2739 = vmatprep.subr.bf16.mxu0 0
    %2740 = vmatpush1.bf16.msra.mxu0 0
    %2741 = vmatprep.subr.bf16.mxu0 0
    %2742 = vmatpush1.bf16.msra.mxu0 0
    %2743 = vmatprep.mubr.bf16.mxu0 0
    %2744 = vmatmul.mubr.bf16.gmra.mrb[0].mxu0 %v2649
    %v2745 = vpop.f32.mrb[0].mxu0
    %v2746 = vadd.f32 0.0, %v2745
    %v2747 = vpop.f32.mrb[0].mxu0
    %v2748 = vadd.f32 0.0, %v2747
    %v2749 = vpop.f32.mrb[0].mxu0
    %v2750 = vpop.f32.mrb[0].mxu0
    %2751 = vdwg.mxu0
    %2752 = vmatprep.subr.bf16.mxu0 %v2668
    %2753 = vmatpush1.bf16.msra.mxu0 %v2665
    %2754 = vmatprep.subr.bf16.mxu0 0
    %2755 = vmatpush1.bf16.msra.mxu0 0
    %2756 = vmatprep.subr.bf16.mxu0 0
    %2757 = vmatpush1.bf16.msra.mxu0 0
    %2758 = vmatprep.subr.bf16.mxu0 0
    %2759 = vmatpush1.bf16.msra.mxu0 0
    %2760 = vmatprep.subr.bf16.mxu0 0
    %2761 = vmatpush1.bf16.msra.mxu0 0
    %2762 = vmatprep.subr.bf16.mxu0 0
    %2763 = vmatpush1.bf16.msra.mxu0 0
    %2764 = vmatprep.subr.bf16.mxu0 0
    %2765 = vmatpush1.bf16.msra.mxu0 0
    %2766 = vmatprep.subr.bf16.mxu0 0
    %2767 = vmatpush1.bf16.msra.mxu0 0
    %2768 = vmatprep.subr.bf16.mxu0 0
    %2769 = vmatpush1.bf16.msra.mxu0 0
    %2770 = vmatprep.subr.bf16.mxu0 0
    %2771 = vmatpush1.bf16.msra.mxu0 0
    %2772 = vmatprep.subr.bf16.mxu0 0
    %2773 = vmatpush1.bf16.msra.mxu0 0
    %2774 = vmatprep.subr.bf16.mxu0 0
    %2775 = vmatpush1.bf16.msra.mxu0 0
    %2776 = vmatprep.subr.bf16.mxu0 0
    %2777 = vmatpush1.bf16.msra.mxu0 0
    %2778 = vmatprep.subr.bf16.mxu0 0
    %2779 = vmatpush1.bf16.msra.mxu0 0
    %2780 = vmatprep.subr.bf16.mxu0 0
    %2781 = vmatpush1.bf16.msra.mxu0 0
    %2782 = vmatprep.subr.bf16.mxu0 0
    %2783 = vmatpush1.bf16.msra.mxu0 0
    %2784 = vmatprep.mubr.bf16.mxu0 0
    %2785 = vmatmul.mubr.bf16.gmra.mrb[0].mxu0 %v2649
    %v2786 = vpop.f32.mrb[0].mxu0
    %v2787 = vadd.f32 0.0, %v2786
    %v2788 = vpop.f32.mrb[0].mxu0
    %v2789 = vadd.f32 0.0, %v2788
    %v2790 = vpop.f32.mrb[0].mxu0
    %v2791 = vpop.f32.mrb[0].mxu0
    %2792 = vdwg.mxu0
    %v3081 = vunpack.c.l.b16 %v2340
    %v3082 = vunpack.c.h.b16 %v2340
    %v3083 = vunpack.c.l.b16 %v2341
    %v3084 = vunpack.c.h.b16 %v2341
    %v3085 = vunpack.c.l.b16 %v2342
    %v3086 = vunpack.c.h.b16 %v2342
    %v3087 = vunpack.c.l.b16 %v2343
    %v3088 = vunpack.c.h.b16 %v2343
    %v3089 = vunpack.c.l.b16 %v2344
    %v3090 = vunpack.c.h.b16 %v2344
    %v3091 = vunpack.c.l.b16 %v2345
    %v3092 = vunpack.c.h.b16 %v2345
    %v3093 = vunpack.c.l.b16 %v2346
    %v3094 = vunpack.c.h.b16 %v2346
    %v3095 = vunpack.c.l.b16 %v2347
    %v3096 = vunpack.c.h.b16 %v2347
    %v3097 = vunpack.c.l.b16 %v2348
    %v3098 = vunpack.c.h.b16 %v2348
    %v3099 = vunpack.c.l.b16 %v2349
    %v3100 = vunpack.c.h.b16 %v2349
    %v3101 = vunpack.c.l.b16 %v2350
    %v3102 = vunpack.c.h.b16 %v2350
    %v3103 = vunpack.c.l.b16 %v2351
    %v3104 = vunpack.c.h.b16 %v2351
    %v3105 = vunpack.c.l.b16 %v2352
    %v3106 = vunpack.c.h.b16 %v2352
    %v3107 = vunpack.c.l.b16 %v2353
    %v3108 = vunpack.c.h.b16 %v2353
    %v3109 = vunpack.c.l.b16 %v2354
    %v3110 = vunpack.c.h.b16 %v2354
    %v3111 = vunpack.c.l.b16 %v2355
    %v3112 = vunpack.c.h.b16 %v2355
    %v3113 = vunpack.c.l.b16 %v2356
    %v3114 = vunpack.c.h.b16 %v2356
    %v3115 = vunpack.c.l.b16 %v2357
    %v3116 = vunpack.c.h.b16 %v2357
    %v3117 = vunpack.c.l.b16 %v2358
    %v3118 = vunpack.c.h.b16 %v2358
    %v3119 = vunpack.c.l.b16 %v2359
    %v3120 = vunpack.c.h.b16 %v2359
    %v3121 = vunpack.c.l.b16 %v2360
    %v3122 = vunpack.c.h.b16 %v2360
    %v3123 = vunpack.c.l.b16 %v2361
    %v3124 = vunpack.c.h.b16 %v2361
    %v3125 = vunpack.c.l.b16 %v2362
    %v3126 = vunpack.c.h.b16 %v2362
    %v3127 = vunpack.c.l.b16 %v2363
    %v3128 = vunpack.c.h.b16 %v2363
    %v3129 = vunpack.c.l.b16 %v2364
    %v3130 = vunpack.c.h.b16 %v2364
    %v3131 = vunpack.c.l.b16 %v2365
    %v3132 = vunpack.c.h.b16 %v2365
    %v3133 = vunpack.c.l.b16 %v2366
    %v3134 = vunpack.c.h.b16 %v2366
    %v3135 = vunpack.c.l.b16 %v2367
    %v3136 = vunpack.c.h.b16 %v2367
    %v3137 = vunpack.c.l.b16 %v2368
    %v3138 = vunpack.c.h.b16 %v2368
    %v3139 = vunpack.c.l.b16 %v2369
    %v3140 = vunpack.c.h.b16 %v2369
    %v3141 = vunpack.c.l.b16 %v2370
    %v3142 = vunpack.c.h.b16 %v2370
    %v3143 = vunpack.c.l.b16 %v2371
    %v3144 = vunpack.c.h.b16 %v2371
    %v3145 = vunpack.c.l.b16 %v2372
    %v3146 = vunpack.c.h.b16 %v2372
    %v3147 = vunpack.c.l.b16 %v2373
    %v3148 = vunpack.c.h.b16 %v2373
    %v3149 = vunpack.c.l.b16 %v2374
    %v3150 = vunpack.c.h.b16 %v2374
    %v3151 = vunpack.c.l.b16 %v2375
    %v3152 = vunpack.c.h.b16 %v2375
    %v3153 = vunpack.c.l.b16 %v2376
    %v3154 = vunpack.c.h.b16 %v2376
    %v3155 = vunpack.c.l.b16 %v2377
    %v3156 = vunpack.c.h.b16 %v2377
    %v3157 = vunpack.c.l.b16 %v2378
    %v3158 = vunpack.c.h.b16 %v2378
    %v3159 = vunpack.c.l.b16 %v2379
    %v3160 = vunpack.c.h.b16 %v2379
    %v3161 = vunpack.c.l.b16 %v2380
    %v3162 = vunpack.c.h.b16 %v2380
    %v3163 = vunpack.c.l.b16 %v2381
    %v3164 = vunpack.c.h.b16 %v2381
    %v3165 = vunpack.c.l.b16 %v2382
    %v3166 = vunpack.c.h.b16 %v2382
    %v3167 = vunpack.c.l.b16 %v2383
    %v3168 = vunpack.c.h.b16 %v2383
    %v3169 = vunpack.c.l.b16 %v2384
    %v3170 = vunpack.c.h.b16 %v2384
    %v3171 = vunpack.c.l.b16 %v2385
    %v3172 = vunpack.c.h.b16 %v2385
    %v3173 = vunpack.c.l.b16 %v2386
    %v3174 = vunpack.c.h.b16 %v2386
    %v3175 = vunpack.c.l.b16 %v2387
    %v3176 = vunpack.c.h.b16 %v2387
    %v3177 = vunpack.c.l.b16 %v2388
    %v3178 = vunpack.c.h.b16 %v2388
    %v3179 = vunpack.c.l.b16 %v2389
    %v3180 = vunpack.c.h.b16 %v2389
    %v3181 = vunpack.c.l.b16 %v2390
    %v3182 = vunpack.c.h.b16 %v2390
    %v3183 = vunpack.c.l.b16 %v2391
    %v3184 = vunpack.c.h.b16 %v2391
    %v3185 = vunpack.c.l.b16 %v2392
    %v3186 = vunpack.c.h.b16 %v2392
    %v3187 = vunpack.c.l.b16 %v2393
    %v3188 = vunpack.c.h.b16 %v2393
    %v3189 = vunpack.c.l.b16 %v2394
    %v3190 = vunpack.c.h.b16 %v2394
    %v3191 = vunpack.c.l.b16 %v2395
    %v3192 = vunpack.c.h.b16 %v2395
    %v3193 = vunpack.c.l.b16 %v2396
    %v3194 = vunpack.c.h.b16 %v2396
    %v3195 = vunpack.c.l.b16 %v2397
    %v3196 = vunpack.c.h.b16 %v2397
    %v3197 = vunpack.c.l.b16 %v2398
    %v3198 = vunpack.c.h.b16 %v2398
    %v3199 = vunpack.c.l.b16 %v2399
    %v3200 = vunpack.c.h.b16 %v2399
    %v3201 = vunpack.c.l.b16 %v2400
    %v3202 = vunpack.c.h.b16 %v2400
    %v3203 = vunpack.c.l.b16 %v2401
    %v3204 = vunpack.c.h.b16 %v2401
    %v3205 = vunpack.c.l.b16 %v2402
    %v3206 = vunpack.c.h.b16 %v2402
    %v3207 = vunpack.c.l.b16 %v2403
    %v3208 = vunpack.c.h.b16 %v2403
    %v3209 = vunpack.c.l.b16 %v2404
    %v3210 = vunpack.c.h.b16 %v2404
    %v3211 = vunpack.c.l.b16 %v2405
    %v3212 = vunpack.c.h.b16 %v2405
    %v3213 = vunpack.c.l.b16 %v2406
    %v3214 = vunpack.c.h.b16 %v2406
    %v3215 = vunpack.c.l.b16 %v2407
    %v3216 = vunpack.c.h.b16 %v2407
    %v3217 = vunpack.c.l.b16 %v2408
    %v3218 = vunpack.c.h.b16 %v2408
    %v3219 = vunpack.c.l.b16 %v2409
    %v3220 = vunpack.c.h.b16 %v2409
    %v3221 = vunpack.c.l.b16 %v2410
    %v3222 = vunpack.c.h.b16 %v2410
    %v3223 = vunpack.c.l.b16 %v2411
    %v3224 = vunpack.c.h.b16 %v2411
    %v3225 = vunpack.c.l.b16 %v2412
    %v3226 = vunpack.c.h.b16 %v2412
    %v3227 = vunpack.c.l.b16 %v2413
    %v3228 = vunpack.c.h.b16 %v2413
    %v3229 = vunpack.c.l.b16 %v2414
    %v3230 = vunpack.c.h.b16 %v2414
    %v3231 = vunpack.c.l.b16 %v2415
    %v3232 = vunpack.c.h.b16 %v2415
    %v3233 = vunpack.c.l.b16 %v2416
    %v3234 = vunpack.c.h.b16 %v2416
    %v3235 = vunpack.c.l.b16 %v2417
    %v3236 = vunpack.c.h.b16 %v2417
    %v3237 = vunpack.c.l.b16 %v2418
    %v3238 = vunpack.c.h.b16 %v2418
    %v3239 = vunpack.c.l.b16 %v2419
    %v3240 = vunpack.c.h.b16 %v2419
    %v3241 = vunpack.c.l.b16 %v2420
    %v3242 = vunpack.c.h.b16 %v2420
    %v3243 = vunpack.c.l.b16 %v2421
    %v3244 = vunpack.c.h.b16 %v2421
    %v3245 = vunpack.c.l.b16 %v2422
    %v3246 = vunpack.c.h.b16 %v2422
    %v3247 = vunpack.c.l.b16 %v2423
    %v3248 = vunpack.c.h.b16 %v2423
    %v3249 = vunpack.c.l.b16 %v2424
    %v3250 = vunpack.c.h.b16 %v2424
    %v3251 = vunpack.c.l.b16 %v2425
    %v3252 = vunpack.c.h.b16 %v2425
    %v3253 = vunpack.c.l.b16 %v2426
    %v3254 = vunpack.c.h.b16 %v2426
    %v3255 = vunpack.c.l.b16 %v2427
    %v3256 = vunpack.c.h.b16 %v2427
    %v3257 = vunpack.c.l.b16 %v2428
    %v3258 = vunpack.c.h.b16 %v2428
    %v3259 = vunpack.c.l.b16 %v2429
    %v3260 = vunpack.c.h.b16 %v2429
    %v3261 = vunpack.c.l.b16 %v2430
    %v3262 = vunpack.c.h.b16 %v2430
    %v3263 = vunpack.c.l.b16 %v2431
    %v3264 = vunpack.c.h.b16 %v2431
    %v3265 = vunpack.c.l.b16 %v2432
    %v3266 = vunpack.c.h.b16 %v2432
    %v3267 = vunpack.c.l.b16 %v2433
    %v3268 = vunpack.c.h.b16 %v2433
    %v3269 = vunpack.c.l.b16 %v2434
    %v3270 = vunpack.c.h.b16 %v2434
    %v3271 = vunpack.c.l.b16 %v2435
    %v3272 = vunpack.c.h.b16 %v2435
    %v3273 = vunpack.c.l.b16 %v2436
    %v3274 = vunpack.c.h.b16 %v2436
    %v3275 = vunpack.c.l.b16 %v2437
    %v3276 = vunpack.c.h.b16 %v2437
    %v3277 = vunpack.c.l.b16 %v2438
    %v3278 = vunpack.c.h.b16 %v2438
    %v3279 = vunpack.c.l.b16 %v2439
    %v3280 = vunpack.c.h.b16 %v2439
    %v3281 = vunpack.c.l.b16 %v2440
    %v3282 = vunpack.c.h.b16 %v2440
    %v3283 = vunpack.c.l.b16 %v2441
    %v3284 = vunpack.c.h.b16 %v2441
    %v3285 = vunpack.c.l.b16 %v2442
    %v3286 = vunpack.c.h.b16 %v2442
    %v3287 = vunpack.c.l.b16 %v2443
    %v3288 = vunpack.c.h.b16 %v2443
    %v3289 = vunpack.c.l.b16 %v2444
    %v3290 = vunpack.c.h.b16 %v2444
    %v3291 = vunpack.c.l.b16 %v2445
    %v3292 = vunpack.c.h.b16 %v2445
    %v3293 = vunpack.c.l.b16 %v2446
    %v3294 = vunpack.c.h.b16 %v2446
    %v3295 = vunpack.c.l.b16 %v2447
    %v3296 = vunpack.c.h.b16 %v2447
    %v3297 = vunpack.c.l.b16 %v2448
    %v3298 = vunpack.c.h.b16 %v2448
    %v3299 = vunpack.c.l.b16 %v2449
    %v3300 = vunpack.c.h.b16 %v2449
    %v3301 = vunpack.c.l.b16 %v2450
    %v3302 = vunpack.c.h.b16 %v2450
    %v3303 = vunpack.c.l.b16 %v2451
    %v3304 = vunpack.c.h.b16 %v2451
    %v3305 = vunpack.c.l.b16 %v2452
    %v3306 = vunpack.c.h.b16 %v2452
    %v3307 = vunpack.c.l.b16 %v2453
    %v3308 = vunpack.c.h.b16 %v2453
    %v3309 = vunpack.c.l.b16 %v2454
    %v3310 = vunpack.c.h.b16 %v2454
    %v3311 = vunpack.c.l.b16 %v2455
    %v3312 = vunpack.c.h.b16 %v2455
    %v3313 = vunpack.c.l.b16 %v2456
    %v3314 = vunpack.c.h.b16 %v2456
    %v3315 = vunpack.c.l.b16 %v2457
    %v3316 = vunpack.c.h.b16 %v2457
    %v3317 = vunpack.c.l.b16 %v2458
    %v3318 = vunpack.c.h.b16 %v2458
    %v3319 = vunpack.c.l.b16 %v2459
    %v3320 = vunpack.c.h.b16 %v2459
    %v3321 = vunpack.c.l.b16 %v2460
    %v3322 = vunpack.c.h.b16 %v2460
    %v3323 = vunpack.c.l.b16 %v2461
    %v3324 = vunpack.c.h.b16 %v2461
    %v3325 = vunpack.c.l.b16 %v2462
    %v3326 = vunpack.c.h.b16 %v2462
    %v3327 = vunpack.c.l.b16 %v2463
    %v3328 = vunpack.c.h.b16 %v2463
    %v3329 = vunpack.c.l.b16 %v2464
    %v3330 = vunpack.c.h.b16 %v2464
    %v3331 = vunpack.c.l.b16 %v2465
    %v3332 = vunpack.c.h.b16 %v2465
    %v3333 = vunpack.c.l.b16 %v2466
    %v3334 = vunpack.c.h.b16 %v2466
    %v3335 = vunpack.c.l.b16 %v2467
    %v3336 = vunpack.c.h.b16 %v2467
    %v3337 = vunpack.c.l.b16 %v2468
    %v3338 = vunpack.c.h.b16 %v2468
    %v3339 = vunpack.c.l.b16 %v2469
    %v3340 = vunpack.c.h.b16 %v2469
    %v3341 = vunpack.c.l.b16 %v2470
    %v3342 = vunpack.c.h.b16 %v2470
    %v3343 = vunpack.c.l.b16 %v2471
    %v3344 = vunpack.c.h.b16 %v2471
    %v3345 = vunpack.c.l.b16 %v2472
    %v3346 = vunpack.c.h.b16 %v2472
    %v3347 = vunpack.c.l.b16 %v2473
    %v3348 = vunpack.c.h.b16 %v2473
    %v3349 = vunpack.c.l.b16 %v2474
    %v3350 = vunpack.c.h.b16 %v2474
    %v3351 = vunpack.c.l.b16 %v2475
    %v3352 = vunpack.c.h.b16 %v2475
    %v3353 = vunpack.c.l.b16 %v2476
    %v3354 = vunpack.c.h.b16 %v2476
    %v3355 = vunpack.c.l.b16 %v2477
    %v3356 = vunpack.c.h.b16 %v2477
    %v3357 = vunpack.c.l.b16 %v2478
    %v3358 = vunpack.c.h.b16 %v2478
    %v3359 = vunpack.c.l.b16 %v2479
    %v3360 = vunpack.c.h.b16 %v2479
    %v3361 = vunpack.c.l.b16 %v2480
    %v3362 = vunpack.c.h.b16 %v2480
    %v3363 = vunpack.c.l.b16 %v2481
    %v3364 = vunpack.c.h.b16 %v2481
    %v3365 = vunpack.c.l.b16 %v2482
    %v3366 = vunpack.c.h.b16 %v2482
    %v3367 = vunpack.c.l.b16 %v2483
    %v3368 = vunpack.c.h.b16 %v2483
    %v3369 = vunpack.c.l.b16 %v2484
    %v3370 = vunpack.c.h.b16 %v2484
    %v3371 = vunpack.c.l.b16 %v2485
    %v3372 = vunpack.c.h.b16 %v2485
    %v3373 = vunpack.c.l.b16 %v2486
    %v3374 = vunpack.c.h.b16 %v2486
    %v3375 = vunpack.c.l.b16 %v2487
    %v3376 = vunpack.c.h.b16 %v2487
    %v3377 = vunpack.c.l.b16 %v2488
    %v3378 = vunpack.c.h.b16 %v2488
    %v3379 = vunpack.c.l.b16 %v2489
    %v3380 = vunpack.c.h.b16 %v2489
    %v3381 = vunpack.c.l.b16 %v2490
    %v3382 = vunpack.c.h.b16 %v2490
    %v3383 = vunpack.c.l.b16 %v2491
    %v3384 = vunpack.c.h.b16 %v2491
    %v3385 = vunpack.c.l.b16 %v2492
    %v3386 = vunpack.c.h.b16 %v2492
    %v3387 = vunpack.c.l.b16 %v2493
    %v3388 = vunpack.c.h.b16 %v2493
    %v3389 = vunpack.c.l.b16 %v2494
    %v3390 = vunpack.c.h.b16 %v2494
    %v3391 = vunpack.c.l.b16 %v2495
    %v3392 = vunpack.c.h.b16 %v2495
    %v3393 = vunpack.c.l.b16 %v2496
    %v3394 = vunpack.c.h.b16 %v2496
    %v3395 = vunpack.c.l.b16 %v2497
    %v3396 = vunpack.c.h.b16 %v2497
    %v3397 = vunpack.c.l.b16 %v2498
    %v3398 = vunpack.c.h.b16 %v2498
    %v3399 = vunpack.c.l.b16 %v2499
    %v3400 = vunpack.c.h.b16 %v2499
    %v3401 = vunpack.c.l.b16 %v2500
    %v3402 = vunpack.c.h.b16 %v2500
    %v3403 = vunpack.c.l.b16 %v2501
    %v3404 = vunpack.c.h.b16 %v2501
    %v3405 = vunpack.c.l.b16 %v2502
    %v3406 = vunpack.c.h.b16 %v2502
    %v3407 = vunpack.c.l.b16 %v2503
    %v3408 = vunpack.c.h.b16 %v2503
    %v3409 = vunpack.c.l.b16 %v2504
    %v3410 = vunpack.c.h.b16 %v2504
    %v3411 = vunpack.c.l.b16 %v2505
    %v3412 = vunpack.c.h.b16 %v2505
    %v3413 = vunpack.c.l.b16 %v2506
    %v3414 = vunpack.c.h.b16 %v2506
    %v3415 = vunpack.c.l.b16 %v2507
    %v3416 = vunpack.c.h.b16 %v2507
    %v3417 = vunpack.c.l.b16 %v2508
    %v3418 = vunpack.c.h.b16 %v2508
    %v3419 = vunpack.c.l.b16 %v2509
    %v3420 = vunpack.c.h.b16 %v2509
    %v3421 = vunpack.c.l.b16 %v2510
    %v3422 = vunpack.c.h.b16 %v2510
    %v3423 = vunpack.c.l.b16 %v2511
    %v3424 = vunpack.c.h.b16 %v2511
    %v3425 = vunpack.c.l.b16 %v2512
    %v3426 = vunpack.c.h.b16 %v2512
    %v3427 = vunpack.c.l.b16 %v2513
    %v3428 = vunpack.c.h.b16 %v2513
    %v3429 = vunpack.c.l.b16 %v2514
    %v3430 = vunpack.c.h.b16 %v2514
    %v3431 = vunpack.c.l.b16 %v2515
    %v3432 = vunpack.c.h.b16 %v2515
    %v3433 = vunpack.c.l.b16 %v2516
    %v3434 = vunpack.c.h.b16 %v2516
    %v3435 = vunpack.c.l.b16 %v2517
    %v3436 = vunpack.c.h.b16 %v2517
    %v3437 = vunpack.c.l.b16 %v2518
    %v3438 = vunpack.c.h.b16 %v2518
    %v3439 = vunpack.c.l.b16 %v2519
    %v3440 = vunpack.c.h.b16 %v2519
    %v3441 = vunpack.c.l.b16 %v2520
    %v3442 = vunpack.c.h.b16 %v2520
    %v3443 = vunpack.c.l.b16 %v2521
    %v3444 = vunpack.c.h.b16 %v2521
    %v3445 = vunpack.c.l.b16 %v2522
    %v3446 = vunpack.c.h.b16 %v2522
    %v3447 = vunpack.c.l.b16 %v2523
    %v3448 = vunpack.c.h.b16 %v2523
    %v3449 = vunpack.c.l.b16 %v2524
    %v3450 = vunpack.c.h.b16 %v2524
    %v3451 = vunpack.c.l.b16 %v2525
    %v3452 = vunpack.c.h.b16 %v2525
    %v3453 = vunpack.c.l.b16 %v2526
    %v3454 = vunpack.c.h.b16 %v2526
    %v3455 = vunpack.c.l.b16 %v2527
    %v3456 = vunpack.c.h.b16 %v2527
    %v3457 = vunpack.c.l.b16 %v2528
    %v3458 = vunpack.c.h.b16 %v2528
    %v3459 = vunpack.c.l.b16 %v2529
    %v3460 = vunpack.c.h.b16 %v2529
    %v3461 = vunpack.c.l.b16 %v2530
    %v3462 = vunpack.c.h.b16 %v2530
    %v3463 = vunpack.c.l.b16 %v2531
    %v3464 = vunpack.c.h.b16 %v2531
    %v3465 = vunpack.c.l.b16 %v2532
    %v3466 = vunpack.c.h.b16 %v2532
    %v3467 = vunpack.c.l.b16 %v2533
    %v3468 = vunpack.c.h.b16 %v2533
    %v3469 = vunpack.c.l.b16 %v2534
    %v3470 = vunpack.c.h.b16 %v2534
    %v3471 = vunpack.c.l.b16 %v2535
    %v3472 = vunpack.c.h.b16 %v2535
    %v3473 = vunpack.c.l.b16 %v2536
    %v3474 = vunpack.c.h.b16 %v2536
    %v3475 = vunpack.c.l.b16 %v2537
    %v3476 = vunpack.c.h.b16 %v2537
    %v3477 = vunpack.c.l.b16 %v2538
    %v3478 = vunpack.c.h.b16 %v2538
    %v3479 = vunpack.c.l.b16 %v2539
    %v3480 = vunpack.c.h.b16 %v2539
    %v3481 = vunpack.c.l.b16 %v2540
    %v3482 = vunpack.c.h.b16 %v2540
    %v3483 = vunpack.c.l.b16 %v2541
    %v3484 = vunpack.c.h.b16 %v2541
    %v3485 = vunpack.c.l.b16 %v2542
    %v3486 = vunpack.c.h.b16 %v2542
    %v3487 = vunpack.c.l.b16 %v2543
    %v3488 = vunpack.c.h.b16 %v2543
    %v3489 = vunpack.c.l.b16 %v2544
    %v3490 = vunpack.c.h.b16 %v2544
    %v3491 = vunpack.c.l.b16 %v2545
    %v3492 = vunpack.c.h.b16 %v2545
    %v3493 = vunpack.c.l.b16 %v2546
    %v3494 = vunpack.c.h.b16 %v2546
    %v3495 = vunpack.c.l.b16 %v2547
    %v3496 = vunpack.c.h.b16 %v2547
    %v3497 = vunpack.c.l.b16 %v2548
    %v3498 = vunpack.c.h.b16 %v2548
    %v3499 = vunpack.c.l.b16 %v2549
    %v3500 = vunpack.c.h.b16 %v2549
    %v3501 = vunpack.c.l.b16 %v2550
    %v3502 = vunpack.c.h.b16 %v2550
    %v3503 = vunpack.c.l.b16 %v2551
    %v3504 = vunpack.c.h.b16 %v2551
    %v3505 = vunpack.c.l.b16 %v2552
    %v3506 = vunpack.c.h.b16 %v2552
    %v3507 = vunpack.c.l.b16 %v2553
    %v3508 = vunpack.c.h.b16 %v2553
    %v3509 = vunpack.c.l.b16 %v2554
    %v3510 = vunpack.c.h.b16 %v2554
    %v3511 = vunpack.c.l.b16 %v2555
    %v3512 = vunpack.c.h.b16 %v2555
    %v3513 = vunpack.c.l.b16 %v2556
    %v3514 = vunpack.c.h.b16 %v2556
    %v3515 = vunpack.c.l.b16 %v2557
    %v3516 = vunpack.c.h.b16 %v2557
    %v3517 = vunpack.c.l.b16 %v2558
    %v3518 = vunpack.c.h.b16 %v2558
    %v3519 = vunpack.c.l.b16 %v2559
    %v3520 = vunpack.c.h.b16 %v2559
    %v3521 = vunpack.c.l.b16 %v2560
    %v3522 = vunpack.c.h.b16 %v2560
    %v3523 = vunpack.c.l.b16 %v2561
    %v3524 = vunpack.c.h.b16 %v2561
    %v3525 = vunpack.c.l.b16 %v2562
    %v3526 = vunpack.c.h.b16 %v2562
    %v3527 = vunpack.c.l.b16 %v2563
    %v3528 = vunpack.c.h.b16 %v2563
    %v3529 = vunpack.c.l.b16 %v2564
    %v3530 = vunpack.c.h.b16 %v2564
    %v3531 = vunpack.c.l.b16 %v2565
    %v3532 = vunpack.c.h.b16 %v2565
    %v3533 = vunpack.c.l.b16 %v2566
    %v3534 = vunpack.c.h.b16 %v2566
    %v3535 = vunpack.c.l.b16 %v2567
    %v3536 = vunpack.c.h.b16 %v2567
    %v3537 = vunpack.c.l.b16 %v2568
    %v3538 = vunpack.c.h.b16 %v2568
    %v3539 = vunpack.c.l.b16 %v2569
    %v3540 = vunpack.c.h.b16 %v2569
    %v3541 = vunpack.c.l.b16 %v2570
    %v3542 = vunpack.c.h.b16 %v2570
    %v3543 = vunpack.c.l.b16 %v2571
    %v3544 = vunpack.c.h.b16 %v2571
    %v3545 = vunpack.c.l.b16 %v2572
    %v3546 = vunpack.c.h.b16 %v2572
    %v3547 = vunpack.c.l.b16 %v2573
    %v3548 = vunpack.c.h.b16 %v2573
    %v3549 = vunpack.c.l.b16 %v2574
    %v3550 = vunpack.c.h.b16 %v2574
    %v3551 = vunpack.c.l.b16 %v2575
    %v3552 = vunpack.c.h.b16 %v2575
    %v3553 = vunpack.c.l.b16 %v2576
    %v3554 = vunpack.c.h.b16 %v2576
    %v3555 = vunpack.c.l.b16 %v2577
    %v3556 = vunpack.c.h.b16 %v2577
    %v3557 = vunpack.c.l.b16 %v2578
    %v3558 = vunpack.c.h.b16 %v2578
    %v3559 = vunpack.c.l.b16 %v2579
    %v3560 = vunpack.c.h.b16 %v2579
    %v3561 = vunpack.c.l.b16 %v2580
    %v3562 = vunpack.c.h.b16 %v2580
    %v3563 = vunpack.c.l.b16 %v2581
    %v3564 = vunpack.c.h.b16 %v2581
    %v3565 = vunpack.c.l.b16 %v2582
    %v3566 = vunpack.c.h.b16 %v2582
    %v3567 = vunpack.c.l.b16 %v2583
    %v3568 = vunpack.c.h.b16 %v2583
    %v3569 = vunpack.c.l.b16 %v2584
    %v3570 = vunpack.c.h.b16 %v2584
    %v3571 = vunpack.c.l.b16 %v2585
    %v3572 = vunpack.c.h.b16 %v2585
    %v3573 = vunpack.c.l.b16 %v2586
    %v3574 = vunpack.c.h.b16 %v2586
    %v3575 = vunpack.c.l.b16 %v2587
    %v3576 = vunpack.c.h.b16 %v2587
    %v3577 = vunpack.c.l.b16 %v2588
    %v3578 = vunpack.c.h.b16 %v2588
    %v3579 = vunpack.c.l.b16 %v2589
    %v3580 = vunpack.c.h.b16 %v2589
    %v3581 = vunpack.c.l.b16 %v2590
    %v3582 = vunpack.c.h.b16 %v2590
    %v3583 = vunpack.c.l.b16 %v2591
    %v3584 = vunpack.c.h.b16 %v2591
    %v3585 = vunpack.c.l.b16 %v2592
    %v3586 = vunpack.c.h.b16 %v2592
    %v3587 = vunpack.c.l.b16 %v2593
    %v3588 = vunpack.c.h.b16 %v2593
    %v3589 = vunpack.c.l.b16 %v2594
    %v3590 = vunpack.c.h.b16 %v2594
    %v3591 = vunpack.c.l.b16 %v2595
    %v3592 = vunpack.c.h.b16 %v2595
    %v3593 = vunpack.c.l.b16 %v2596
    %v3594 = vunpack.c.h.b16 %v2596
    %v3595 = vunpack.c.l.b16 %v2597
    %v3596 = vunpack.c.h.b16 %v2597
    %v3597 = vunpack.c.l.b16 %v2598
    %v3598 = vunpack.c.h.b16 %v2598
    %v3599 = vunpack.c.l.b16 %v2599
    %v3600 = vunpack.c.h.b16 %v2599
    %v3601 = vunpack.c.l.b16 %v2600
    %v3602 = vunpack.c.h.b16 %v2600
    %v3603 = vunpack.c.l.b16 %v2601
    %v3604 = vunpack.c.h.b16 %v2601
    %v3605 = vunpack.c.l.b16 %v2602
    %v3606 = vunpack.c.h.b16 %v2602
    %v3607 = vunpack.c.l.b16 %v2603
    %v3608 = vunpack.c.h.b16 %v2603
    %v3609 = vunpack.c.l.b16 %v2604
    %v3610 = vunpack.c.h.b16 %v2604
    %v3611 = vunpack.c.l.b16 %v2605
    %v3612 = vunpack.c.h.b16 %v2605
    %v3613 = vunpack.c.l.b16 %v2606
    %v3614 = vunpack.c.h.b16 %v2606
    %v3615 = vunpack.c.l.b16 %v2607
    %v3616 = vunpack.c.h.b16 %v2607
    %v3617 = vunpack.c.l.b16 %v2608
    %v3618 = vunpack.c.h.b16 %v2608
    %v3619 = vunpack.c.l.b16 %v2609
    %v3620 = vunpack.c.h.b16 %v2609
    %v3621 = vunpack.c.l.b16 %v2610
    %v3622 = vunpack.c.h.b16 %v2610
    %v3623 = vunpack.c.l.b16 %v2611
    %v3624 = vunpack.c.h.b16 %v2611
    %v3625 = vunpack.c.l.b16 %v2612
    %v3626 = vunpack.c.h.b16 %v2612
    %v3627 = vunpack.c.l.b16 %v2613
    %v3628 = vunpack.c.h.b16 %v2613
    %v3629 = vunpack.c.l.b16 %v2614
    %v3630 = vunpack.c.h.b16 %v2614
    %v3631 = vunpack.c.l.b16 %v2615
    %v3632 = vunpack.c.h.b16 %v2615
    %v3633 = vunpack.c.l.b16 %v2616
    %v3634 = vunpack.c.h.b16 %v2616
    %v3635 = vunpack.c.l.b16 %v2617
    %v3636 = vunpack.c.h.b16 %v2617
    %v3637 = vunpack.c.l.b16 %v2618
    %v3638 = vunpack.c.h.b16 %v2618
    %v3639 = vunpack.c.l.b16 %v2619
    %v3640 = vunpack.c.h.b16 %v2619
    %v3641 = vunpack.c.l.b16 %v2620
    %v3642 = vunpack.c.h.b16 %v2620
    %v3643 = vunpack.c.l.b16 %v2621
    %v3644 = vunpack.c.h.b16 %v2621
    %v3645 = vunpack.c.l.b16 %v2622
    %v3646 = vunpack.c.h.b16 %v2622
    %v3647 = vunpack.c.l.b16 %v2623
    %v3648 = vunpack.c.h.b16 %v2623
    %v3649 = vunpack.c.l.b16 %v2624
    %v3650 = vunpack.c.h.b16 %v2624
    %v3651 = vunpack.c.l.b16 %v2625
    %v3652 = vunpack.c.h.b16 %v2625
    %v3653 = vunpack.c.l.b16 %v2626
    %v3654 = vunpack.c.h.b16 %v2626
    %v3655 = vunpack.c.l.b16 %v2627
    %v3656 = vunpack.c.h.b16 %v2627
    %v3657 = vpack.c.b16 %v3087, %v3081
    %v3658 = vpack.c.b16 %v3088, %v3082
    %v3659 = vpack.c.b16 %v3089, %v3083
    %v3660 = vpack.c.b16 %v3090, %v3084
    %v3661 = vpack.c.b16 %v3091, %v3085
    %v3662 = vpack.c.b16 %v3092, %v3086
    %v3663 = vpack.c.b16 %v3099, %v3093
    %v3664 = vpack.c.b16 %v3100, %v3094
    %v3665 = vpack.c.b16 %v3101, %v3095
    %v3666 = vpack.c.b16 %v3102, %v3096
    %v3667 = vpack.c.b16 %v3103, %v3097
    %v3668 = vpack.c.b16 %v3104, %v3098
    %v3669 = vpack.c.b16 %v3111, %v3105
    %v3670 = vpack.c.b16 %v3112, %v3106
    %v3671 = vpack.c.b16 %v3113, %v3107
    %v3672 = vpack.c.b16 %v3114, %v3108
    %v3673 = vpack.c.b16 %v3115, %v3109
    %v3674 = vpack.c.b16 %v3116, %v3110
    %v3675 = vpack.c.b16 %v3123, %v3117
    %v3676 = vpack.c.b16 %v3124, %v3118
    %v3677 = vpack.c.b16 %v3125, %v3119
    %v3678 = vpack.c.b16 %v3126, %v3120
    %v3679 = vpack.c.b16 %v3127, %v3121
    %v3680 = vpack.c.b16 %v3128, %v3122
    %v3681 = vpack.c.b16 %v3135, %v3129
    %v3682 = vpack.c.b16 %v3136, %v3130
    %v3683 = vpack.c.b16 %v3137, %v3131
    %v3684 = vpack.c.b16 %v3138, %v3132
    %v3685 = vpack.c.b16 %v3139, %v3133
    %v3686 = vpack.c.b16 %v3140, %v3134
    %v3687 = vpack.c.b16 %v3147, %v3141
    %v3688 = vpack.c.b16 %v3148, %v3142
    %v3689 = vpack.c.b16 %v3149, %v3143
    %v3690 = vpack.c.b16 %v3150, %v3144
    %v3691 = vpack.c.b16 %v3151, %v3145
    %v3692 = vpack.c.b16 %v3152, %v3146
    %v3693 = vpack.c.b16 %v3159, %v3153
    %v3694 = vpack.c.b16 %v3160, %v3154
    %v3695 = vpack.c.b16 %v3161, %v3155
    %v3696 = vpack.c.b16 %v3162, %v3156
    %v3697 = vpack.c.b16 %v3163, %v3157
    %v3698 = vpack.c.b16 %v3164, %v3158
    %v3699 = vpack.c.b16 %v3171, %v3165
    %v3700 = vpack.c.b16 %v3172, %v3166
    %v3701 = vpack.c.b16 %v3173, %v3167
    %v3702 = vpack.c.b16 %v3174, %v3168
    %v3703 = vpack.c.b16 %v3175, %v3169
    %v3704 = vpack.c.b16 %v3176, %v3170
    %v3705 = vpack.c.b16 %v3183, %v3177
    %v3706 = vpack.c.b16 %v3184, %v3178
    %v3707 = vpack.c.b16 %v3185, %v3179
    %v3708 = vpack.c.b16 %v3186, %v3180
    %v3709 = vpack.c.b16 %v3187, %v3181
    %v3710 = vpack.c.b16 %v3188, %v3182
    %v3711 = vpack.c.b16 %v3195, %v3189
    %v3712 = vpack.c.b16 %v3196, %v3190
    %v3713 = vpack.c.b16 %v3197, %v3191
    %v3714 = vpack.c.b16 %v3198, %v3192
    %v3715 = vpack.c.b16 %v3199, %v3193
    %v3716 = vpack.c.b16 %v3200, %v3194
    %v3717 = vpack.c.b16 %v3207, %v3201
    %v3718 = vpack.c.b16 %v3208, %v3202
    %v3719 = vpack.c.b16 %v3209, %v3203
    %v3720 = vpack.c.b16 %v3210, %v3204
    %v3721 = vpack.c.b16 %v3211, %v3205
    %v3722 = vpack.c.b16 %v3212, %v3206
    %v3723 = vpack.c.b16 %v3219, %v3213
    %v3724 = vpack.c.b16 %v3220, %v3214
    %v3725 = vpack.c.b16 %v3221, %v3215
    %v3726 = vpack.c.b16 %v3222, %v3216
    %v3727 = vpack.c.b16 %v3223, %v3217
    %v3728 = vpack.c.b16 %v3224, %v3218
    %v3729 = vpack.c.b16 %v3231, %v3225
    %v3730 = vpack.c.b16 %v3232, %v3226
    %v3731 = vpack.c.b16 %v3233, %v3227
    %v3732 = vpack.c.b16 %v3234, %v3228
    %v3733 = vpack.c.b16 %v3235, %v3229
    %v3734 = vpack.c.b16 %v3236, %v3230
    %v3735 = vpack.c.b16 %v3243, %v3237
    %v3736 = vpack.c.b16 %v3244, %v3238
    %v3737 = vpack.c.b16 %v3245, %v3239
    %v3738 = vpack.c.b16 %v3246, %v3240
    %v3739 = vpack.c.b16 %v3247, %v3241
    %v3740 = vpack.c.b16 %v3248, %v3242
    %v3741 = vpack.c.b16 %v3255, %v3249
    %v3742 = vpack.c.b16 %v3256, %v3250
    %v3743 = vpack.c.b16 %v3257, %v3251
    %v3744 = vpack.c.b16 %v3258, %v3252
    %v3745 = vpack.c.b16 %v3259, %v3253
    %v3746 = vpack.c.b16 %v3260, %v3254
    %v3747 = vpack.c.b16 %v3267, %v3261
    %v3748 = vpack.c.b16 %v3268, %v3262
    %v3749 = vpack.c.b16 %v3269, %v3263
    %v3750 = vpack.c.b16 %v3270, %v3264
    %v3751 = vpack.c.b16 %v3271, %v3265
    %v3752 = vpack.c.b16 %v3272, %v3266
    %v3753 = vpack.c.b16 %v3279, %v3273
    %v3754 = vpack.c.b16 %v3280, %v3274
    %v3755 = vpack.c.b16 %v3281, %v3275
    %v3756 = vpack.c.b16 %v3282, %v3276
    %v3757 = vpack.c.b16 %v3283, %v3277
    %v3758 = vpack.c.b16 %v3284, %v3278
    %v3759 = vpack.c.b16 %v3291, %v3285
    %v3760 = vpack.c.b16 %v3292, %v3286
    %v3761 = vpack.c.b16 %v3293, %v3287
    %v3762 = vpack.c.b16 %v3294, %v3288
    %v3763 = vpack.c.b16 %v3295, %v3289
    %v3764 = vpack.c.b16 %v3296, %v3290
    %v3765 = vpack.c.b16 %v3303, %v3297
    %v3766 = vpack.c.b16 %v3304, %v3298
    %v3767 = vpack.c.b16 %v3305, %v3299
    %v3768 = vpack.c.b16 %v3306, %v3300
    %v3769 = vpack.c.b16 %v3307, %v3301
    %v3770 = vpack.c.b16 %v3308, %v3302
    %v3771 = vpack.c.b16 %v3315, %v3309
    %v3772 = vpack.c.b16 %v3316, %v3310
    %v3773 = vpack.c.b16 %v3317, %v3311
    %v3774 = vpack.c.b16 %v3318, %v3312
    %v3775 = vpack.c.b16 %v3319, %v3313
    %v3776 = vpack.c.b16 %v3320, %v3314
    %v3777 = vpack.c.b16 %v3327, %v3321
    %v3778 = vpack.c.b16 %v3328, %v3322
    %v3779 = vpack.c.b16 %v3329, %v3323
    %v3780 = vpack.c.b16 %v3330, %v3324
    %v3781 = vpack.c.b16 %v3331, %v3325
    %v3782 = vpack.c.b16 %v3332, %v3326
    %v3783 = vpack.c.b16 %v3339, %v3333
    %v3784 = vpack.c.b16 %v3340, %v3334
    %v3785 = vpack.c.b16 %v3341, %v3335
    %v3786 = vpack.c.b16 %v3342, %v3336
    %v3787 = vpack.c.b16 %v3343, %v3337
    %v3788 = vpack.c.b16 %v3344, %v3338
    %v3789 = vpack.c.b16 %v3351, %v3345
    %v3790 = vpack.c.b16 %v3352, %v3346
    %v3791 = vpack.c.b16 %v3353, %v3347
    %v3792 = vpack.c.b16 %v3354, %v3348
    %v3793 = vpack.c.b16 %v3355, %v3349
    %v3794 = vpack.c.b16 %v3356, %v3350
    %v3795 = vpack.c.b16 %v3363, %v3357
    %v3796 = vpack.c.b16 %v3364, %v3358
    %v3797 = vpack.c.b16 %v3365, %v3359
    %v3798 = vpack.c.b16 %v3366, %v3360
    %v3799 = vpack.c.b16 %v3367, %v3361
    %v3800 = vpack.c.b16 %v3368, %v3362
    %v3801 = vpack.c.b16 %v3375, %v3369
    %v3802 = vpack.c.b16 %v3376, %v3370
    %v3803 = vpack.c.b16 %v3377, %v3371
    %v3804 = vpack.c.b16 %v3378, %v3372
    %v3805 = vpack.c.b16 %v3379, %v3373
    %v3806 = vpack.c.b16 %v3380, %v3374
    %v3807 = vpack.c.b16 %v3387, %v3381
    %v3808 = vpack.c.b16 %v3388, %v3382
    %v3809 = vpack.c.b16 %v3389, %v3383
    %v3810 = vpack.c.b16 %v3390, %v3384
    %v3811 = vpack.c.b16 %v3391, %v3385
    %v3812 = vpack.c.b16 %v3392, %v3386
    %v3813 = vpack.c.b16 %v3399, %v3393
    %v3814 = vpack.c.b16 %v3400, %v3394
    %v3815 = vpack.c.b16 %v3401, %v3395
    %v3816 = vpack.c.b16 %v3402, %v3396
    %v3817 = vpack.c.b16 %v3403, %v3397
    %v3818 = vpack.c.b16 %v3404, %v3398
    %v3819 = vpack.c.b16 %v3411, %v3405
    %v3820 = vpack.c.b16 %v3412, %v3406
    %v3821 = vpack.c.b16 %v3413, %v3407
    %v3822 = vpack.c.b16 %v3414, %v3408
    %v3823 = vpack.c.b16 %v3415, %v3409
    %v3824 = vpack.c.b16 %v3416, %v3410
    %v3825 = vpack.c.b16 %v3423, %v3417
    %v3826 = vpack.c.b16 %v3424, %v3418
    %v3827 = vpack.c.b16 %v3425, %v3419
    %v3828 = vpack.c.b16 %v3426, %v3420
    %v3829 = vpack.c.b16 %v3427, %v3421
    %v3830 = vpack.c.b16 %v3428, %v3422
    %v3831 = vpack.c.b16 %v3435, %v3429
    %v3832 = vpack.c.b16 %v3436, %v3430
    %v3833 = vpack.c.b16 %v3437, %v3431
    %v3834 = vpack.c.b16 %v3438, %v3432
    %v3835 = vpack.c.b16 %v3439, %v3433
    %v3836 = vpack.c.b16 %v3440, %v3434
    %v3837 = vpack.c.b16 %v3447, %v3441
    %v3838 = vpack.c.b16 %v3448, %v3442
    %v3839 = vpack.c.b16 %v3449, %v3443
    %v3840 = vpack.c.b16 %v3450, %v3444
    %v3841 = vpack.c.b16 %v3451, %v3445
    %v3842 = vpack.c.b16 %v3452, %v3446
    %v3843 = vpack.c.b16 %v3459, %v3453
    %v3844 = vpack.c.b16 %v3460, %v3454
    %v3845 = vpack.c.b16 %v3461, %v3455
    %v3846 = vpack.c.b16 %v3462, %v3456
    %v3847 = vpack.c.b16 %v3463, %v3457
    %v3848 = vpack.c.b16 %v3464, %v3458
    %v3849 = vpack.c.b16 %v3471, %v3465
    %v3850 = vpack.c.b16 %v3472, %v3466
    %v3851 = vpack.c.b16 %v3473, %v3467
    %v3852 = vpack.c.b16 %v3474, %v3468
    %v3853 = vpack.c.b16 %v3475, %v3469
    %v3854 = vpack.c.b16 %v3476, %v3470
    %v3855 = vpack.c.b16 %v3483, %v3477
    %v3856 = vpack.c.b16 %v3484, %v3478
    %v3857 = vpack.c.b16 %v3485, %v3479
    %v3858 = vpack.c.b16 %v3486, %v3480
    %v3859 = vpack.c.b16 %v3487, %v3481
    %v3860 = vpack.c.b16 %v3488, %v3482
    %v3861 = vpack.c.b16 %v3495, %v3489
    %v3862 = vpack.c.b16 %v3496, %v3490
    %v3863 = vpack.c.b16 %v3497, %v3491
    %v3864 = vpack.c.b16 %v3498, %v3492
    %v3865 = vpack.c.b16 %v3499, %v3493
    %v3866 = vpack.c.b16 %v3500, %v3494
    %v3867 = vpack.c.b16 %v3507, %v3501
    %v3868 = vpack.c.b16 %v3508, %v3502
    %v3869 = vpack.c.b16 %v3509, %v3503
    %v3870 = vpack.c.b16 %v3510, %v3504
    %v3871 = vpack.c.b16 %v3511, %v3505
    %v3872 = vpack.c.b16 %v3512, %v3506
    %v3873 = vpack.c.b16 %v3519, %v3513
    %v3874 = vpack.c.b16 %v3520, %v3514
    %v3875 = vpack.c.b16 %v3521, %v3515
    %v3876 = vpack.c.b16 %v3522, %v3516
    %v3877 = vpack.c.b16 %v3523, %v3517
    %v3878 = vpack.c.b16 %v3524, %v3518
    %v3879 = vpack.c.b16 %v3531, %v3525
    %v3880 = vpack.c.b16 %v3532, %v3526
    %v3881 = vpack.c.b16 %v3533, %v3527
    %v3882 = vpack.c.b16 %v3534, %v3528
    %v3883 = vpack.c.b16 %v3535, %v3529
    %v3884 = vpack.c.b16 %v3536, %v3530
    %v3885 = vpack.c.b16 %v3543, %v3537
    %v3886 = vpack.c.b16 %v3544, %v3538
    %v3887 = vpack.c.b16 %v3545, %v3539
    %v3888 = vpack.c.b16 %v3546, %v3540
    %v3889 = vpack.c.b16 %v3547, %v3541
    %v3890 = vpack.c.b16 %v3548, %v3542
    %v3891 = vpack.c.b16 %v3555, %v3549
    %v3892 = vpack.c.b16 %v3556, %v3550
    %v3893 = vpack.c.b16 %v3557, %v3551
    %v3894 = vpack.c.b16 %v3558, %v3552
    %v3895 = vpack.c.b16 %v3559, %v3553
    %v3896 = vpack.c.b16 %v3560, %v3554
    %v3897 = vpack.c.b16 %v3567, %v3561
    %v3898 = vpack.c.b16 %v3568, %v3562
    %v3899 = vpack.c.b16 %v3569, %v3563
    %v3900 = vpack.c.b16 %v3570, %v3564
    %v3901 = vpack.c.b16 %v3571, %v3565
    %v3902 = vpack.c.b16 %v3572, %v3566
    %v3903 = vpack.c.b16 %v3579, %v3573
    %v3904 = vpack.c.b16 %v3580, %v3574
    %v3905 = vpack.c.b16 %v3581, %v3575
    %v3906 = vpack.c.b16 %v3582, %v3576
    %v3907 = vpack.c.b16 %v3583, %v3577
    %v3908 = vpack.c.b16 %v3584, %v3578
    %v3909 = vpack.c.b16 %v3591, %v3585
    %v3910 = vpack.c.b16 %v3592, %v3586
    %v3911 = vpack.c.b16 %v3593, %v3587
    %v3912 = vpack.c.b16 %v3594, %v3588
    %v3913 = vpack.c.b16 %v3595, %v3589
    %v3914 = vpack.c.b16 %v3596, %v3590
    %v3915 = vpack.c.b16 %v3603, %v3597
    %v3916 = vpack.c.b16 %v3604, %v3598
    %v3917 = vpack.c.b16 %v3605, %v3599
    %v3918 = vpack.c.b16 %v3606, %v3600
    %v3919 = vpack.c.b16 %v3607, %v3601
    %v3920 = vpack.c.b16 %v3608, %v3602
    %v3921 = vpack.c.b16 %v3615, %v3609
    %v3922 = vpack.c.b16 %v3616, %v3610
    %v3923 = vpack.c.b16 %v3617, %v3611
    %v3924 = vpack.c.b16 %v3618, %v3612
    %v3925 = vpack.c.b16 %v3619, %v3613
    %v3926 = vpack.c.b16 %v3620, %v3614
    %v3927 = vpack.c.b16 %v3627, %v3621
    %v3928 = vpack.c.b16 %v3628, %v3622
    %v3929 = vpack.c.b16 %v3629, %v3623
    %v3930 = vpack.c.b16 %v3630, %v3624
    %v3931 = vpack.c.b16 %v3631, %v3625
    %v3932 = vpack.c.b16 %v3632, %v3626
    %v3933 = vpack.c.b16 %v3639, %v3633
    %v3934 = vpack.c.b16 %v3640, %v3634
    %v3935 = vpack.c.b16 %v3641, %v3635
    %v3936 = vpack.c.b16 %v3642, %v3636
    %v3937 = vpack.c.b16 %v3643, %v3637
    %v3938 = vpack.c.b16 %v3644, %v3638
    %v3939 = vpack.c.b16 %v3651, %v3645
    %v3940 = vpack.c.b16 %v3652, %v3646
    %v3941 = vpack.c.b16 %v3653, %v3647
    %v3942 = vpack.c.b16 %v3654, %v3648
    %v3943 = vpack.c.b16 %v3655, %v3649
    %v3944 = vpack.c.b16 %v3656, %v3650
    %4233 = vmatprep.subr.bf16.mxu0 %v3658
    %4234 = vmatpush1.bf16.msra.mxu0 %v3657
    %4235 = vmatprep.subr.bf16.mxu0 %v3664
    %4236 = vmatpush1.bf16.msra.mxu0 %v3663
    %4237 = vmatprep.subr.bf16.mxu0 %v3670
    %4238 = vmatpush1.bf16.msra.mxu0 %v3669
    %4239 = vmatprep.subr.bf16.mxu0 %v3676
    %4240 = vmatpush1.bf16.msra.mxu0 %v3675
    %4241 = vmatprep.subr.bf16.mxu0 %v3682
    %4242 = vmatpush1.bf16.msra.mxu0 %v3681
    %4243 = vmatprep.subr.bf16.mxu0 %v3688
    %4244 = vmatpush1.bf16.msra.mxu0 %v3687
    %4245 = vmatprep.subr.bf16.mxu0 %v3694
    %4246 = vmatpush1.bf16.msra.mxu0 %v3693
    %4247 = vmatprep.subr.bf16.mxu0 %v3700
    %4248 = vmatpush1.bf16.msra.mxu0 %v3699
    %4249 = vmatprep.subr.bf16.mxu0 %v3706
    %4250 = vmatpush1.bf16.msra.mxu0 %v3705
    %4251 = vmatprep.subr.bf16.mxu0 %v3712
    %4252 = vmatpush1.bf16.msra.mxu0 %v3711
    %4253 = vmatprep.subr.bf16.mxu0 %v3718
    %4254 = vmatpush1.bf16.msra.mxu0 %v3717
    %4255 = vmatprep.subr.bf16.mxu0 %v3724
    %4256 = vmatpush1.bf16.msra.mxu0 %v3723
    %4257 = vmatprep.subr.bf16.mxu0 %v3730
    %4258 = vmatpush1.bf16.msra.mxu0 %v3729
    %4259 = vmatprep.subr.bf16.mxu0 %v3736
    %4260 = vmatpush1.bf16.msra.mxu0 %v3735
    %4261 = vmatprep.subr.bf16.mxu0 %v3742
    %4262 = vmatpush1.bf16.msra.mxu0 %v3741
    %4263 = vmatprep.subr.bf16.mxu0 %v3748
    %4264 = vmatpush1.bf16.msra.mxu0 %v3747
    %4265 = vmatprep.mubr.bf16.mxu0 %v2335
    %4266 = vmatmul.mubr.bf16.gmra.mrb[0].mxu0 %v2334
    %v4267 = vpop.f32.mrb[0].mxu0
    %v4268 = vadd.f32 %v2705, %v4267
    %v4269 = vpop.f32.mrb[0].mxu0
    %v4270 = vadd.f32 %v2707, %v4269
    %v4271 = vpop.f32.mrb[0].mxu0
    %v4272 = vpop.f32.mrb[0].mxu0
    %4273 = vdwg.mxu0
    %4274 = vmatprep.subr.bf16.mxu0 %v3754
    %4275 = vmatpush1.bf16.msra.mxu0 %v3753
    %4276 = vmatprep.subr.bf16.mxu0 %v3760
    %4277 = vmatpush1.bf16.msra.mxu0 %v3759
    %4278 = vmatprep.subr.bf16.mxu0 %v3766
    %4279 = vmatpush1.bf16.msra.mxu0 %v3765
    %4280 = vmatprep.subr.bf16.mxu0 %v3772
    %4281 = vmatpush1.bf16.msra.mxu0 %v3771
    %4282 = vmatprep.subr.bf16.mxu0 %v3778
    %4283 = vmatpush1.bf16.msra.mxu0 %v3777
    %4284 = vmatprep.subr.bf16.mxu0 %v3784
    %4285 = vmatpush1.bf16.msra.mxu0 %v3783
    %4286 = vmatprep.subr.bf16.mxu0 %v3790
    %4287 = vmatpush1.bf16.msra.mxu0 %v3789
    %4288 = vmatprep.subr.bf16.mxu0 %v3796
    %4289 = vmatpush1.bf16.msra.mxu0 %v3795
    %4290 = vmatprep.subr.bf16.mxu0 %v3802
    %4291 = vmatpush1.bf16.msra.mxu0 %v3801
    %4292 = vmatprep.subr.bf16.mxu0 %v3808
    %4293 = vmatpush1.bf16.msra.mxu0 %v3807
    %4294 = vmatprep.subr.bf16.mxu0 %v3814
    %4295 = vmatpush1.bf16.msra.mxu0 %v3813
    %4296 = vmatprep.subr.bf16.mxu0 %v3820
    %4297 = vmatpush1.bf16.msra.mxu0 %v3819
    %4298 = vmatprep.subr.bf16.mxu0 %v3826
    %4299 = vmatpush1.bf16.msra.mxu0 %v3825
    %4300 = vmatprep.subr.bf16.mxu0 %v3832
    %4301 = vmatpush1.bf16.msra.mxu0 %v3831
    %4302 = vmatprep.subr.bf16.mxu0 %v3838
    %4303 = vmatpush1.bf16.msra.mxu0 %v3837
    %4304 = vmatprep.subr.bf16.mxu0 %v3844
    %4305 = vmatpush1.bf16.msra.mxu0 %v3843
    %4306 = vmatprep.mubr.bf16.mxu0 %v2337
    %4307 = vmatmul.mubr.bf16.gmra.mrb[0].mxu0 %v2336
    %v4308 = vpop.f32.mrb[0].mxu0
    %v4309 = vadd.f32 %v4268, %v4308
    %v4310 = vpop.f32.mrb[0].mxu0
    %v4311 = vadd.f32 %v4270, %v4310
    %v4312 = vpop.f32.mrb[0].mxu0
    %v4313 = vpop.f32.mrb[0].mxu0
    %4314 = vdwg.mxu0
    %4315 = vmatprep.subr.bf16.mxu0 %v3850
    %4316 = vmatpush1.bf16.msra.mxu0 %v3849
    %4317 = vmatprep.subr.bf16.mxu0 %v3856
    %4318 = vmatpush1.bf16.msra.mxu0 %v3855
    %4319 = vmatprep.subr.bf16.mxu0 %v3862
    %4320 = vmatpush1.bf16.msra.mxu0 %v3861
    %4321 = vmatprep.subr.bf16.mxu0 %v3868
    %4322 = vmatpush1.bf16.msra.mxu0 %v3867
    %4323 = vmatprep.subr.bf16.mxu0 %v3874
    %4324 = vmatpush1.bf16.msra.mxu0 %v3873
    %4325 = vmatprep.subr.bf16.mxu0 %v3880
    %4326 = vmatpush1.bf16.msra.mxu0 %v3879
    %4327 = vmatprep.subr.bf16.mxu0 %v3886
    %4328 = vmatpush1.bf16.msra.mxu0 %v3885
    %4329 = vmatprep.subr.bf16.mxu0 %v3892
    %4330 = vmatpush1.bf16.msra.mxu0 %v3891
    %4331 = vmatprep.subr.bf16.mxu0 %v3898
    %4332 = vmatpush1.bf16.msra.mxu0 %v3897
    %4333 = vmatprep.subr.bf16.mxu0 %v3904
    %4334 = vmatpush1.bf16.msra.mxu0 %v3903
    %4335 = vmatprep.subr.bf16.mxu0 %v3910
    %4336 = vmatpush1.bf16.msra.mxu0 %v3909
    %4337 = vmatprep.subr.bf16.mxu0 %v3916
    %4338 = vmatpush1.bf16.msra.mxu0 %v3915
    %4339 = vmatprep.subr.bf16.mxu0 %v3922
    %4340 = vmatpush1.bf16.msra.mxu0 %v3921
    %4341 = vmatprep.subr.bf16.mxu0 %v3928
    %4342 = vmatpush1.bf16.msra.mxu0 %v3927
    %4343 = vmatprep.subr.bf16.mxu0 %v3934
    %4344 = vmatpush1.bf16.msra.mxu0 %v3933
    %4345 = vmatprep.subr.bf16.mxu0 %v3940
    %4346 = vmatpush1.bf16.msra.mxu0 %v3939
    %4347 = vmatprep.mubr.bf16.mxu0 %v2339
    %4348 = vmatmul.mubr.bf16.gmra.mrb[0].mxu0 %v2338
    %v4349 = vpop.f32.mrb[0].mxu0
    %v4350 = vadd.f32 %v4309, %v4349
    %v4351 = vpop.f32.mrb[0].mxu0
    %v4352 = vadd.f32 %v4311, %v4351
    %v4353 = vpop.f32.mrb[0].mxu0
    %v4354 = vpop.f32.mrb[0].mxu0
    %4355 = vdwg.mxu0
    %4356 = vmatprep.subr.bf16.mxu0 %v3660
    %4357 = vmatpush1.bf16.msra.mxu0 %v3659
    %4358 = vmatprep.subr.bf16.mxu0 %v3666
    %4359 = vmatpush1.bf16.msra.mxu0 %v3665
    %4360 = vmatprep.subr.bf16.mxu0 %v3672
    %4361 = vmatpush1.bf16.msra.mxu0 %v3671
    %4362 = vmatprep.subr.bf16.mxu0 %v3678
    %4363 = vmatpush1.bf16.msra.mxu0 %v3677
    %4364 = vmatprep.subr.bf16.mxu0 %v3684
    %4365 = vmatpush1.bf16.msra.mxu0 %v3683
    %4366 = vmatprep.subr.bf16.mxu0 %v3690
    %4367 = vmatpush1.bf16.msra.mxu0 %v3689
    %4368 = vmatprep.subr.bf16.mxu0 %v3696
    %4369 = vmatpush1.bf16.msra.mxu0 %v3695
    %4370 = vmatprep.subr.bf16.mxu0 %v3702
    %4371 = vmatpush1.bf16.msra.mxu0 %v3701
    %4372 = vmatprep.subr.bf16.mxu0 %v3708
    %4373 = vmatpush1.bf16.msra.mxu0 %v3707
    %4374 = vmatprep.subr.bf16.mxu0 %v3714
    %4375 = vmatpush1.bf16.msra.mxu0 %v3713
    %4376 = vmatprep.subr.bf16.mxu0 %v3720
    %4377 = vmatpush1.bf16.msra.mxu0 %v3719
    %4378 = vmatprep.subr.bf16.mxu0 %v3726
    %4379 = vmatpush1.bf16.msra.mxu0 %v3725
    %4380 = vmatprep.subr.bf16.mxu0 %v3732
    %4381 = vmatpush1.bf16.msra.mxu0 %v3731
    %4382 = vmatprep.subr.bf16.mxu0 %v3738
    %4383 = vmatpush1.bf16.msra.mxu0 %v3737
    %4384 = vmatprep.subr.bf16.mxu0 %v3744
    %4385 = vmatpush1.bf16.msra.mxu0 %v3743
    %4386 = vmatprep.subr.bf16.mxu0 %v3750
    %4387 = vmatpush1.bf16.msra.mxu0 %v3749
    %4388 = vmatprep.mubr.bf16.mxu0 %v2335
    %4389 = vmatmul.mubr.bf16.gmra.mrb[0].mxu0 %v2334
    %v4390 = vpop.f32.mrb[0].mxu0
    %v4391 = vadd.f32 %v2746, %v4390
    %v4392 = vpop.f32.mrb[0].mxu0
    %v4393 = vadd.f32 %v2748, %v4392
    %v4394 = vpop.f32.mrb[0].mxu0
    %v4395 = vpop.f32.mrb[0].mxu0
    %4396 = vdwg.mxu0
    %4397 = vmatprep.subr.bf16.mxu0 %v3756
    %4398 = vmatpush1.bf16.msra.mxu0 %v3755
    %4399 = vmatprep.subr.bf16.mxu0 %v3762
    %4400 = vmatpush1.bf16.msra.mxu0 %v3761
    %4401 = vmatprep.subr.bf16.mxu0 %v3768
    %4402 = vmatpush1.bf16.msra.mxu0 %v3767
    %4403 = vmatprep.subr.bf16.mxu0 %v3774
    %4404 = vmatpush1.bf16.msra.mxu0 %v3773
    %4405 = vmatprep.subr.bf16.mxu0 %v3780
    %4406 = vmatpush1.bf16.msra.mxu0 %v3779
    %4407 = vmatprep.subr.bf16.mxu0 %v3786
    %4408 = vmatpush1.bf16.msra.mxu0 %v3785
    %4409 = vmatprep.subr.bf16.mxu0 %v3792
    %4410 = vmatpush1.bf16.msra.mxu0 %v3791
    %4411 = vmatprep.subr.bf16.mxu0 %v3798
    %4412 = vmatpush1.bf16.msra.mxu0 %v3797
    %4413 = vmatprep.subr.bf16.mxu0 %v3804
    %4414 = vmatpush1.bf16.msra.mxu0 %v3803
    %4415 = vmatprep.subr.bf16.mxu0 %v3810
    %4416 = vmatpush1.bf16.msra.mxu0 %v3809
    %4417 = vmatprep.subr.bf16.mxu0 %v3816
    %4418 = vmatpush1.bf16.msra.mxu0 %v3815
    %4419 = vmatprep.subr.bf16.mxu0 %v3822
    %4420 = vmatpush1.bf16.msra.mxu0 %v3821
    %4421 = vmatprep.subr.bf16.mxu0 %v3828
    %4422 = vmatpush1.bf16.msra.mxu0 %v3827
    %4423 = vmatprep.subr.bf16.mxu0 %v3834
    %4424 = vmatpush1.bf16.msra.mxu0 %v3833
    %4425 = vmatprep.subr.bf16.mxu0 %v3840
    %4426 = vmatpush1.bf16.msra.mxu0 %v3839
    %4427 = vmatprep.subr.bf16.mxu0 %v3846
    %4428 = vmatpush1.bf16.msra.mxu0 %v3845
    %4429 = vmatprep.mubr.bf16.mxu0 %v2337
    %4430 = vmatmul.mubr.bf16.gmra.mrb[0].mxu0 %v2336
    %v4431 = vpop.f32.mrb[0].mxu0
    %v4432 = vadd.f32 %v4391, %v4431
    %v4433 = vpop.f32.mrb[0].mxu0
    %v4434 = vadd.f32 %v4393, %v4433
    %v4435 = vpop.f32.mrb[0].mxu0
    %v4436 = vpop.f32.mrb[0].mxu0
    %4437 = vdwg.mxu0
    %4438 = vmatprep.subr.bf16.mxu0 %v3852
    %4439 = vmatpush1.bf16.msra.mxu0 %v3851
    %4440 = vmatprep.subr.bf16.mxu0 %v3858
    %4441 = vmatpush1.bf16.msra.mxu0 %v3857
    %4442 = vmatprep.subr.bf16.mxu0 %v3864
    %4443 = vmatpush1.bf16.msra.mxu0 %v3863
    %4444 = vmatprep.subr.bf16.mxu0 %v3870
    %4445 = vmatpush1.bf16.msra.mxu0 %v3869
    %4446 = vmatprep.subr.bf16.mxu0 %v3876
    %4447 = vmatpush1.bf16.msra.mxu0 %v3875
    %4448 = vmatprep.subr.bf16.mxu0 %v3882
    %4449 = vmatpush1.bf16.msra.mxu0 %v3881
    %4450 = vmatprep.subr.bf16.mxu0 %v3888
    %4451 = vmatpush1.bf16.msra.mxu0 %v3887
    %4452 = vmatprep.subr.bf16.mxu0 %v3894
    %4453 = vmatpush1.bf16.msra.mxu0 %v3893
    %4454 = vmatprep.subr.bf16.mxu0 %v3900
    %4455 = vmatpush1.bf16.msra.mxu0 %v3899
    %4456 = vmatprep.subr.bf16.mxu0 %v3906
    %4457 = vmatpush1.bf16.msra.mxu0 %v3905
    %4458 = vmatprep.subr.bf16.mxu0 %v3912
    %4459 = vmatpush1.bf16.msra.mxu0 %v3911
    %4460 = vmatprep.subr.bf16.mxu0 %v3918
    %4461 = vmatpush1.bf16.msra.mxu0 %v3917
    %4462 = vmatprep.subr.bf16.mxu0 %v3924
    %4463 = vmatpush1.bf16.msra.mxu0 %v3923
    %4464 = vmatprep.subr.bf16.mxu0 %v3930
    %4465 = vmatpush1.bf16.msra.mxu0 %v3929
    %4466 = vmatprep.subr.bf16.mxu0 %v3936
    %4467 = vmatpush1.bf16.msra.mxu0 %v3935
    %4468 = vmatprep.subr.bf16.mxu0 %v3942
    %4469 = vmatpush1.bf16.msra.mxu0 %v3941
    %4470 = vmatprep.mubr.bf16.mxu0 %v2339
    %4471 = vmatmul.mubr.bf16.gmra.mrb[0].mxu0 %v2338
    %v4472 = vpop.f32.mrb[0].mxu0
    %v4473 = vadd.f32 %v4432, %v4472
    %v4474 = vpop.f32.mrb[0].mxu0
    %v4475 = vadd.f32 %v4434, %v4474
    %v4476 = vpop.f32.mrb[0].mxu0
    %v4477 = vpop.f32.mrb[0].mxu0
    %4478 = vdwg.mxu0
    %4479 = vmatprep.subr.bf16.mxu0 %v3662
    %4480 = vmatpush1.bf16.msra.mxu0 %v3661
    %4481 = vmatprep.subr.bf16.mxu0 %v3668
    %4482 = vmatpush1.bf16.msra.mxu0 %v3667
    %4483 = vmatprep.subr.bf16.mxu0 %v3674
    %4484 = vmatpush1.bf16.msra.mxu0 %v3673
    %4485 = vmatprep.subr.bf16.mxu0 %v3680
    %4486 = vmatpush1.bf16.msra.mxu0 %v3679
    %4487 = vmatprep.subr.bf16.mxu0 %v3686
    %4488 = vmatpush1.bf16.msra.mxu0 %v3685
    %4489 = vmatprep.subr.bf16.mxu0 %v3692
    %4490 = vmatpush1.bf16.msra.mxu0 %v3691
    %4491 = vmatprep.subr.bf16.mxu0 %v3698
    %4492 = vmatpush1.bf16.msra.mxu0 %v3697
    %4493 = vmatprep.subr.bf16.mxu0 %v3704
    %4494 = vmatpush1.bf16.msra.mxu0 %v3703
    %4495 = vmatprep.subr.bf16.mxu0 %v3710
    %4496 = vmatpush1.bf16.msra.mxu0 %v3709
    %4497 = vmatprep.subr.bf16.mxu0 %v3716
    %4498 = vmatpush1.bf16.msra.mxu0 %v3715
    %4499 = vmatprep.subr.bf16.mxu0 %v3722
    %4500 = vmatpush1.bf16.msra.mxu0 %v3721
    %4501 = vmatprep.subr.bf16.mxu0 %v3728
    %4502 = vmatpush1.bf16.msra.mxu0 %v3727
    %4503 = vmatprep.subr.bf16.mxu0 %v3734
    %4504 = vmatpush1.bf16.msra.mxu0 %v3733
    %4505 = vmatprep.subr.bf16.mxu0 %v3740
    %4506 = vmatpush1.bf16.msra.mxu0 %v3739
    %4507 = vmatprep.subr.bf16.mxu0 %v3746
    %4508 = vmatpush1.bf16.msra.mxu0 %v3745
    %4509 = vmatprep.subr.bf16.mxu0 %v3752
    %4510 = vmatpush1.bf16.msra.mxu0 %v3751
    %4511 = vmatprep.mubr.bf16.mxu0 %v2335
    %4512 = vmatmul.mubr.bf16.gmra.mrb[0].mxu0 %v2334
    %v4513 = vpop.f32.mrb[0].mxu0
    %v4514 = vadd.f32 %v2787, %v4513
    %v4515 = vpop.f32.mrb[0].mxu0
    %v4516 = vadd.f32 %v2789, %v4515
    %v4517 = vpop.f32.mrb[0].mxu0
    %v4518 = vpop.f32.mrb[0].mxu0
    %4519 = vdwg.mxu0
    %4520 = vmatprep.subr.bf16.mxu0 %v3758
    %4521 = vmatpush1.bf16.msra.mxu0 %v3757
    %4522 = vmatprep.subr.bf16.mxu0 %v3764
    %4523 = vmatpush1.bf16.msra.mxu0 %v3763
    %4524 = vmatprep.subr.bf16.mxu0 %v3770
    %4525 = vmatpush1.bf16.msra.mxu0 %v3769
    %4526 = vmatprep.subr.bf16.mxu0 %v3776
    %4527 = vmatpush1.bf16.msra.mxu0 %v3775
    %4528 = vmatprep.subr.bf16.mxu0 %v3782
    %4529 = vmatpush1.bf16.msra.mxu0 %v3781
    %4530 = vmatprep.subr.bf16.mxu0 %v3788
    %4531 = vmatpush1.bf16.msra.mxu0 %v3787
    %4532 = vmatprep.subr.bf16.mxu0 %v3794
    %4533 = vmatpush1.bf16.msra.mxu0 %v3793
    %4534 = vmatprep.subr.bf16.mxu0 %v3800
    %4535 = vmatpush1.bf16.msra.mxu0 %v3799
    %4536 = vmatprep.subr.bf16.mxu0 %v3806
    %4537 = vmatpush1.bf16.msra.mxu0 %v3805
    %4538 = vmatprep.subr.bf16.mxu0 %v3812
    %4539 = vmatpush1.bf16.msra.mxu0 %v3811
    %4540 = vmatprep.subr.bf16.mxu0 %v3818
    %4541 = vmatpush1.bf16.msra.mxu0 %v3817
    %4542 = vmatprep.subr.bf16.mxu0 %v3824
    %4543 = vmatpush1.bf16.msra.mxu0 %v3823
    %4544 = vmatprep.subr.bf16.mxu0 %v3830
    %4545 = vmatpush1.bf16.msra.mxu0 %v3829
    %4546 = vmatprep.subr.bf16.mxu0 %v3836
    %4547 = vmatpush1.bf16.msra.mxu0 %v3835
    %4548 = vmatprep.subr.bf16.mxu0 %v3842
    %4549 = vmatpush1.bf16.msra.mxu0 %v3841
    %4550 = vmatprep.subr.bf16.mxu0 %v3848
    %4551 = vmatpush1.bf16.msra.mxu0 %v3847
    %4552 = vmatprep.mubr.bf16.mxu0 %v2337
    %4553 = vmatmul.mubr.bf16.gmra.mrb[0].mxu0 %v2336
    %v4554 = vpop.f32.mrb[0].mxu0
    %v4555 = vadd.f32 %v4514, %v4554
    %v4556 = vpop.f32.mrb[0].mxu0
    %v4557 = vadd.f32 %v4516, %v4556
    %v4558 = vpop.f32.mrb[0].mxu0
    %v4559 = vpop.f32.mrb[0].mxu0
    %4560 = vdwg.mxu0
    %4561 = vmatprep.subr.bf16.mxu0 %v3854
    %4562 = vmatpush1.bf16.msra.mxu0 %v3853
    %4563 = vmatprep.subr.bf16.mxu0 %v3860
    %4564 = vmatpush1.bf16.msra.mxu0 %v3859
    %4565 = vmatprep.subr.bf16.mxu0 %v3866
    %4566 = vmatpush1.bf16.msra.mxu0 %v3865
    %4567 = vmatprep.subr.bf16.mxu0 %v3872
    %4568 = vmatpush1.bf16.msra.mxu0 %v3871
    %4569 = vmatprep.subr.bf16.mxu0 %v3878
    %4570 = vmatpush1.bf16.msra.mxu0 %v3877
    %4571 = vmatprep.subr.bf16.mxu0 %v3884
    %4572 = vmatpush1.bf16.msra.mxu0 %v3883
    %4573 = vmatprep.subr.bf16.mxu0 %v3890
    %4574 = vmatpush1.bf16.msra.mxu0 %v3889
    %4575 = vmatprep.subr.bf16.mxu0 %v3896
    %4576 = vmatpush1.bf16.msra.mxu0 %v3895
    %4577 = vmatprep.subr.bf16.mxu0 %v3902
    %4578 = vmatpush1.bf16.msra.mxu0 %v3901
    %4579 = vmatprep.subr.bf16.mxu0 %v3908
    %4580 = vmatpush1.bf16.msra.mxu0 %v3907
    %4581 = vmatprep.subr.bf16.mxu0 %v3914
    %4582 = vmatpush1.bf16.msra.mxu0 %v3913
    %4583 = vmatprep.subr.bf16.mxu0 %v3920
    %4584 = vmatpush1.bf16.msra.mxu0 %v3919
    %4585 = vmatprep.subr.bf16.mxu0 %v3926
    %4586 = vmatpush1.bf16.msra.mxu0 %v3925
    %4587 = vmatprep.subr.bf16.mxu0 %v3932
    %4588 = vmatpush1.bf16.msra.mxu0 %v3931
    %4589 = vmatprep.subr.bf16.mxu0 %v3938
    %4590 = vmatpush1.bf16.msra.mxu0 %v3937
    %4591 = vmatprep.subr.bf16.mxu0 %v3944
    %4592 = vmatpush1.bf16.msra.mxu0 %v3943
    %4593 = vmatprep.mubr.bf16.mxu0 %v2339
    %4594 = vmatmul.mubr.bf16.gmra.mrb[0].mxu0 %v2338
    %v4595 = vpop.f32.mrb[0].mxu0
    %v4596 = vadd.f32 %v4555, %v4595
    %v4597 = vpop.f32.mrb[0].mxu0
    %v4598 = vadd.f32 %v4557, %v4597
    %v4599 = vpop.f32.mrb[0].mxu0
    %v4600 = vpop.f32.mrb[0].mxu0
    %4601 = vdwg.mxu0
    %v4602 = vld [vmem:[#allocation13] sm:$0x3f]
    %v4604 = vlaneseq
    %v4605 = vshrl.u32 %v4604, 7
    %v4606 = vsub.s32 0, %v4605
    %v4607 = vrot.slane %v4602, %v4606
    %v4608 = vlaneseq
    %v4609 = vshrl.u32 %v4608, 7
    %v4610 = vsub.s32 1, %v4609
    %v4611 = vrot.slane %v4602, %v4610
    %v4612 = vlaneseq
    %v4613 = vshrl.u32 %v4612, 7
    %v4614 = vsub.s32 2, %v4613
    %v4615 = vrot.slane %v4602, %v4614
    %v4616 = vlaneseq
    %v4617 = vshrl.u32 %v4616, 7
    %v4618 = vsub.s32 3, %v4617
    %v4619 = vrot.slane %v4602, %v4618
    %v4620 = vlaneseq
    %v4621 = vshrl.u32 %v4620, 7
    %v4622 = vsub.s32 4, %v4621
    %v4623 = vrot.slane %v4602, %v4622
    %v4624 = vlaneseq
    %v4625 = vshrl.u32 %v4624, 7
    %v4626 = vsub.s32 5, %v4625
    %v4627 = vrot.slane %v4602, %v4626
    %v4634 = vadd.f32 %v4350, %v4607
    %v4635 = vadd.f32 %v4352, %v4611
    %v4636 = vadd.f32 %v4473, %v4615
    %v4637 = vadd.f32 %v4475, %v4619
    %v4638 = vadd.f32 %v4596, %v4623
    %v4639 = vadd.f32 %v4598, %v4627
    %v4640 = vmax.f32 %v4634, 0.0
    %v4641 = vmax.f32 %v4635, 0.0
    %v4642 = vmax.f32 %v4636, 0.0
    %v4643 = vmax.f32 %v4637, 0.0
    %v4644 = vmax.f32 %v4638, 0.0
    %v4645 = vmax.f32 %v4639, 0.0
    %v4646 = vpack.c.bf16 %v4640, %v4640
    %v4647 = vpack.c.bf16 %v4641, %v4641
    %v4648 = vpack.c.bf16 %v4642, %v4642
    %v4649 = vpack.c.bf16 %v4643, %v4643
    %v4650 = vpack.c.bf16 %v4644, %v4644
    %v4651 = vpack.c.bf16 %v4645, %v4645
    %v4652 = vld [vmem:[#allocation14] sm:$0xff]
    %v4653 = vld [vmem:[#allocation14 + $0x8] sm:$0xff]
    %v4654 = vld [vmem:[#allocation14 + $0x10] sm:$0xff]
    %v4655 = vld [vmem:[#allocation14 + $0x18] sm:$0xff]
    %v4656 = vld [vmem:[#allocation14 + $0x20] sm:$0xff]
    %v4657 = vld [vmem:[#allocation14 + $0x28] sm:$0xff]
    %v4658 = vld [vmem:[#allocation14 + $0x30] sm:$0xff]
    %v4659 = vld [vmem:[#allocation14 + $0x38] sm:$0xff]
    %v4660 = vld [vmem:[#allocation14 + $0x40] sm:$0xff]
    %v4661 = vld [vmem:[#allocation14 + $0x48] sm:$0xff]
    %v4662 = vld [vmem:[#allocation14 + $0x50] sm:$0xff]
    %v4663 = vld [vmem:[#allocation14 + $0x58] sm:$0xff]
    %v4664 = vld [vmem:[#allocation14 + $0x60] sm:$0xff]
    %v4665 = vld [vmem:[#allocation14 + $0x68] sm:$0xff]
    %v4666 = vld [vmem:[#allocation14 + $0x70] sm:$0xff]
    %v4667 = vld [vmem:[#allocation14 + $0x78] sm:$0xff]
    %v4668 = vld [vmem:[#allocation14 + $0x80] sm:$0xff]
    %v4669 = vld [vmem:[#allocation14 + $0x88] sm:$0xff]
    %v4670 = vld [vmem:[#allocation14 + $0x90] sm:$0xff]
    %v4671 = vld [vmem:[#allocation14 + $0x98] sm:$0xff]
    %v4672 = vld [vmem:[#allocation14 + $0xa0] sm:$0xff]
    %v4673 = vld [vmem:[#allocation14 + $0xa8] sm:$0xff]
    %v4674 = vld [vmem:[#allocation14 + $0xb0] sm:$0xff]
    %v4675 = vld [vmem:[#allocation14 + $0xb8] sm:$0xff]
    %v4676 = vld [vmem:[#allocation14 + $0xc0] sm:$0xff]
    %v4677 = vld [vmem:[#allocation14 + $0xc8] sm:$0xff]
    %v4678 = vld [vmem:[#allocation14 + $0xd0] sm:$0xff]
    %v4679 = vld [vmem:[#allocation14 + $0xd8] sm:$0xff]
    %v4680 = vld [vmem:[#allocation14 + $0xe0] sm:$0xff]
    %v4681 = vld [vmem:[#allocation14 + $0xe8] sm:$0xff]
    %v4682 = vld [vmem:[#allocation14 + $0xf0] sm:$0xff]
    %v4683 = vld [vmem:[#allocation14 + $0xf8] sm:$0xff]
    %v4684 = vld [vmem:[#allocation14 + $0x100] sm:$0xff]
    %v4685 = vld [vmem:[#allocation14 + $0x108] sm:$0xff]
    %v4686 = vld [vmem:[#allocation14 + $0x110] sm:$0xff]
    %v4687 = vld [vmem:[#allocation14 + $0x118] sm:$0xff]
    %v4688 = vld [vmem:[#allocation14 + $0x120] sm:$0xff]
    %v4689 = vld [vmem:[#allocation14 + $0x128] sm:$0xff]
    %v4690 = vld [vmem:[#allocation14 + $0x130] sm:$0xff]
    %v4691 = vld [vmem:[#allocation14 + $0x138] sm:$0xff]
    %v4692 = vld [vmem:[#allocation14 + $0x140] sm:$0xff]
    %v4693 = vld [vmem:[#allocation14 + $0x148] sm:$0xff]
    %v4694 = vld [vmem:[#allocation14 + $0x150] sm:$0xff]
    %v4695 = vld [vmem:[#allocation14 + $0x158] sm:$0xff]
    %v4696 = vld [vmem:[#allocation14 + $0x160] sm:$0xff]
    %v4697 = vld [vmem:[#allocation14 + $0x168] sm:$0xff]
    %v4698 = vld [vmem:[#allocation14 + $0x170] sm:$0xff]
    %v4699 = vld [vmem:[#allocation14 + $0x178] sm:$0xff]
    %v4700 = vld [vmem:[#allocation14 + $0x180] sm:$0xff]
    %v4701 = vld [vmem:[#allocation14 + $0x188] sm:$0xff]
    %v4702 = vld [vmem:[#allocation14 + $0x190] sm:$0xff]
    %v4703 = vld [vmem:[#allocation14 + $0x198] sm:$0xff]
    %v4704 = vld [vmem:[#allocation14 + $0x1a0] sm:$0xff]
    %v4705 = vld [vmem:[#allocation14 + $0x1a8] sm:$0xff]
    %v4706 = vld [vmem:[#allocation14 + $0x1b0] sm:$0xff]
    %v4707 = vld [vmem:[#allocation14 + $0x1b8] sm:$0xff]
    %v4708 = vld [vmem:[#allocation14 + $0x1c0] sm:$0xff]
    %v4709 = vld [vmem:[#allocation14 + $0x1c8] sm:$0xff]
    %v4710 = vld [vmem:[#allocation14 + $0x1d0] sm:$0xff]
    %v4711 = vld [vmem:[#allocation14 + $0x1d8] sm:$0xff]
    %v4712 = vld [vmem:[#allocation14 + $0x1e0] sm:$0xff]
    %v4713 = vld [vmem:[#allocation14 + $0x1e8] sm:$0xff]
    %v4714 = vld [vmem:[#allocation14 + $0x1f0] sm:$0xff]
    %v4715 = vld [vmem:[#allocation14 + $0x1f8] sm:$0xff]
    %v4716 = vld [vmem:[#allocation14 + $0x200] sm:$0xff]
    %v4717 = vld [vmem:[#allocation14 + $0x208] sm:$0xff]
    %v4718 = vld [vmem:[#allocation14 + $0x210] sm:$0xff]
    %v4719 = vld [vmem:[#allocation14 + $0x218] sm:$0xff]
    %v4720 = vld [vmem:[#allocation14 + $0x220] sm:$0xff]
    %v4721 = vld [vmem:[#allocation14 + $0x228] sm:$0xff]
    %v4722 = vld [vmem:[#allocation14 + $0x230] sm:$0xff]
    %v4723 = vld [vmem:[#allocation14 + $0x238] sm:$0xff]
    %v4724 = vld [vmem:[#allocation14 + $0x240] sm:$0xff]
    %v4725 = vld [vmem:[#allocation14 + $0x248] sm:$0xff]
    %v4726 = vld [vmem:[#allocation14 + $0x250] sm:$0xff]
    %v4727 = vld [vmem:[#allocation14 + $0x258] sm:$0xff]
    %v4728 = vld [vmem:[#allocation14 + $0x260] sm:$0xff]
    %v4729 = vld [vmem:[#allocation14 + $0x268] sm:$0xff]
    %v4730 = vld [vmem:[#allocation14 + $0x270] sm:$0xff]
    %v4731 = vld [vmem:[#allocation14 + $0x278] sm:$0xff]
    %v4732 = vld [vmem:[#allocation14 + $0x280] sm:$0xff]
    %v4733 = vld [vmem:[#allocation14 + $0x288] sm:$0xff]
    %v4734 = vld [vmem:[#allocation14 + $0x290] sm:$0xff]
    %v4735 = vld [vmem:[#allocation14 + $0x298] sm:$0xff]
    %v4736 = vld [vmem:[#allocation14 + $0x2a0] sm:$0xff]
    %v4737 = vld [vmem:[#allocation14 + $0x2a8] sm:$0xff]
    %v4738 = vld [vmem:[#allocation14 + $0x2b0] sm:$0xff]
    %v4739 = vld [vmem:[#allocation14 + $0x2b8] sm:$0xff]
    %v4740 = vld [vmem:[#allocation14 + $0x2c0] sm:$0xff]
    %v4741 = vld [vmem:[#allocation14 + $0x2c8] sm:$0xff]
    %v4742 = vld [vmem:[#allocation14 + $0x2d0] sm:$0xff]
    %v4743 = vld [vmem:[#allocation14 + $0x2d8] sm:$0xff]
    %v4744 = vld [vmem:[#allocation14 + $0x2e0] sm:$0xff]
    %v4745 = vld [vmem:[#allocation14 + $0x2e8] sm:$0xff]
    %v4746 = vld [vmem:[#allocation14 + $0x2f0] sm:$0xff]
    %v4747 = vld [vmem:[#allocation14 + $0x2f8] sm:$0xff]
    %v4748 = vld [vmem:[#allocation14 + $0x300] sm:$0xff]
    %v4749 = vld [vmem:[#allocation14 + $0x308] sm:$0xff]
    %v4750 = vld [vmem:[#allocation14 + $0x310] sm:$0xff]
    %v4751 = vld [vmem:[#allocation14 + $0x318] sm:$0xff]
    %v4752 = vld [vmem:[#allocation14 + $0x320] sm:$0xff]
    %v4753 = vld [vmem:[#allocation14 + $0x328] sm:$0xff]
    %v4754 = vld [vmem:[#allocation14 + $0x330] sm:$0xff]
    %v4755 = vld [vmem:[#allocation14 + $0x338] sm:$0xff]
    %v4756 = vld [vmem:[#allocation14 + $0x340] sm:$0xff]
    %v4757 = vld [vmem:[#allocation14 + $0x348] sm:$0xff]
    %v4758 = vld [vmem:[#allocation14 + $0x350] sm:$0xff]
    %v4759 = vld [vmem:[#allocation14 + $0x358] sm:$0xff]
    %v4760 = vld [vmem:[#allocation14 + $0x360] sm:$0xff]
    %v4761 = vld [vmem:[#allocation14 + $0x368] sm:$0xff]
    %v4762 = vld [vmem:[#allocation14 + $0x370] sm:$0xff]
    %v4763 = vld [vmem:[#allocation14 + $0x378] sm:$0xff]
    %v4764 = vld [vmem:[#allocation14 + $0x380] sm:$0xff]
    %v4765 = vld [vmem:[#allocation14 + $0x388] sm:$0xff]
    %v4766 = vld [vmem:[#allocation14 + $0x390] sm:$0xff]
    %v4767 = vld [vmem:[#allocation14 + $0x398] sm:$0xff]
    %v4768 = vld [vmem:[#allocation14 + $0x3a0] sm:$0xff]
    %v4769 = vld [vmem:[#allocation14 + $0x3a8] sm:$0xff]
    %v4770 = vld [vmem:[#allocation14 + $0x3b0] sm:$0xff]
    %v4771 = vld [vmem:[#allocation14 + $0x3b8] sm:$0xff]
    %v4772 = vld [vmem:[#allocation14 + $0x3c0] sm:$0xff]
    %v4773 = vld [vmem:[#allocation14 + $0x3c8] sm:$0xff]
    %v4774 = vld [vmem:[#allocation14 + $0x3d0] sm:$0xff]
    %v4775 = vld [vmem:[#allocation14 + $0x3d8] sm:$0xff]
    %v4776 = vld [vmem:[#allocation14 + $0x3e0] sm:$0xff]
    %v4777 = vld [vmem:[#allocation14 + $0x3e8] sm:$0xff]
    %v4778 = vld [vmem:[#allocation14 + $0x3f0] sm:$0xff]
    %v4779 = vld [vmem:[#allocation14 + $0x3f8] sm:$0xff]
    %v4780 = vld [vmem:[#allocation14 + $0x400] sm:$0xff]
    %v4781 = vld [vmem:[#allocation14 + $0x408] sm:$0xff]
    %v4782 = vld [vmem:[#allocation14 + $0x410] sm:$0xff]
    %v4783 = vld [vmem:[#allocation14 + $0x418] sm:$0xff]
    %v4784 = vld [vmem:[#allocation14 + $0x420] sm:$0xff]
    %v4785 = vld [vmem:[#allocation14 + $0x428] sm:$0xff]
    %v4786 = vld [vmem:[#allocation14 + $0x430] sm:$0xff]
    %v4787 = vld [vmem:[#allocation14 + $0x438] sm:$0xff]
    %v4788 = vld [vmem:[#allocation14 + $0x440] sm:$0xff]
    %v4789 = vld [vmem:[#allocation14 + $0x448] sm:$0xff]
    %v4790 = vld [vmem:[#allocation14 + $0x450] sm:$0xff]
    %v4791 = vld [vmem:[#allocation14 + $0x458] sm:$0xff]
    %v4792 = vld [vmem:[#allocation14 + $0x460] sm:$0xff]
    %v4793 = vld [vmem:[#allocation14 + $0x468] sm:$0xff]
    %v4794 = vld [vmem:[#allocation14 + $0x470] sm:$0xff]
    %v4795 = vld [vmem:[#allocation14 + $0x478] sm:$0xff]
    %v4796 = vld [vmem:[#allocation14 + $0x480] sm:$0xff]
    %v4797 = vld [vmem:[#allocation14 + $0x488] sm:$0xff]
    %v4798 = vld [vmem:[#allocation14 + $0x490] sm:$0xff]
    %v4799 = vld [vmem:[#allocation14 + $0x498] sm:$0xff]
    %v4800 = vld [vmem:[#allocation14 + $0x4a0] sm:$0xff]
    %v4801 = vld [vmem:[#allocation14 + $0x4a8] sm:$0xff]
    %v4802 = vld [vmem:[#allocation14 + $0x4b0] sm:$0xff]
    %v4803 = vld [vmem:[#allocation14 + $0x4b8] sm:$0xff]
    %v4804 = vld [vmem:[#allocation14 + $0x4c0] sm:$0xff]
    %v4805 = vld [vmem:[#allocation14 + $0x4c8] sm:$0xff]
    %v4806 = vld [vmem:[#allocation14 + $0x4d0] sm:$0xff]
    %v4807 = vld [vmem:[#allocation14 + $0x4d8] sm:$0xff]
    %v4808 = vld [vmem:[#allocation14 + $0x4e0] sm:$0xff]
    %v4809 = vld [vmem:[#allocation14 + $0x4e8] sm:$0xff]
    %v4810 = vld [vmem:[#allocation14 + $0x4f0] sm:$0xff]
    %v4811 = vld [vmem:[#allocation14 + $0x4f8] sm:$0xff]
    %v4812 = vld [vmem:[#allocation14 + $0x500] sm:$0xff]
    %v4813 = vld [vmem:[#allocation14 + $0x508] sm:$0xff]
    %v4814 = vld [vmem:[#allocation14 + $0x510] sm:$0xff]
    %v4815 = vld [vmem:[#allocation14 + $0x518] sm:$0xff]
    %v4816 = vld [vmem:[#allocation14 + $0x520] sm:$0xff]
    %v4817 = vld [vmem:[#allocation14 + $0x528] sm:$0xff]
    %v4818 = vld [vmem:[#allocation14 + $0x530] sm:$0xff]
    %v4819 = vld [vmem:[#allocation14 + $0x538] sm:$0xff]
    %v4820 = vld [vmem:[#allocation14 + $0x540] sm:$0xff]
    %v4821 = vld [vmem:[#allocation14 + $0x548] sm:$0xff]
    %v4822 = vld [vmem:[#allocation14 + $0x550] sm:$0xff]
    %v4823 = vld [vmem:[#allocation14 + $0x558] sm:$0xff]
    %v4824 = vld [vmem:[#allocation14 + $0x560] sm:$0xff]
    %v4825 = vld [vmem:[#allocation14 + $0x568] sm:$0xff]
    %v4826 = vld [vmem:[#allocation14 + $0x570] sm:$0xff]
    %v4827 = vld [vmem:[#allocation14 + $0x578] sm:$0xff]
    %v4828 = vld [vmem:[#allocation14 + $0x580] sm:$0xff]
    %v4829 = vld [vmem:[#allocation14 + $0x588] sm:$0xff]
    %v4830 = vld [vmem:[#allocation14 + $0x590] sm:$0xff]
    %v4831 = vld [vmem:[#allocation14 + $0x598] sm:$0xff]
    %v4832 = vld [vmem:[#allocation14 + $0x5a0] sm:$0xff]
    %v4833 = vld [vmem:[#allocation14 + $0x5a8] sm:$0xff]
    %v4834 = vld [vmem:[#allocation14 + $0x5b0] sm:$0xff]
    %v4835 = vld [vmem:[#allocation14 + $0x5b8] sm:$0xff]
    %v4836 = vld [vmem:[#allocation14 + $0x5c0] sm:$0xff]
    %v4837 = vld [vmem:[#allocation14 + $0x5c8] sm:$0xff]
    %v4838 = vld [vmem:[#allocation14 + $0x5d0] sm:$0xff]
    %v4839 = vld [vmem:[#allocation14 + $0x5d8] sm:$0xff]
    %v4840 = vld [vmem:[#allocation14 + $0x5e0] sm:$0xff]
    %v4841 = vld [vmem:[#allocation14 + $0x5e8] sm:$0xff]
    %v4842 = vld [vmem:[#allocation14 + $0x5f0] sm:$0xff]
    %v4843 = vld [vmem:[#allocation14 + $0x5f8] sm:$0xff]
    %v4844 = vld [vmem:[#allocation16] sm:$0xf]
    %v4846 = vlaneseq
    %v4847 = vshrl.u32 %v4846, 7
    %v4848 = vsub.s32 0, %v4847
    %v4849 = vrot.slane %v4844, %v4848
    %v4850 = vlaneseq
    %v4851 = vshrl.u32 %v4850, 7
    %v4852 = vsub.s32 1, %v4851
    %v4853 = vrot.slane %v4844, %v4852
    %v4854 = vlaneseq
    %v4855 = vshrl.u32 %v4854, 7
    %v4856 = vsub.s32 2, %v4855
    %v4857 = vrot.slane %v4844, %v4856
    %v4858 = vlaneseq
    %v4859 = vshrl.u32 %v4858, 7
    %v4860 = vsub.s32 3, %v4859
    %v4861 = vrot.slane %v4844, %v4860
    %v5058 = vunpack.c.l.b16 %v4652
    %v5059 = vunpack.c.h.b16 %v4652
    %v5060 = vunpack.c.l.b16 %v4653
    %v5061 = vunpack.c.h.b16 %v4653
    %v5062 = vunpack.c.l.b16 %v4654
    %v5063 = vunpack.c.h.b16 %v4654
    %v5064 = vunpack.c.l.b16 %v4655
    %v5065 = vunpack.c.h.b16 %v4655
    %v5066 = vunpack.c.l.b16 %v4656
    %v5067 = vunpack.c.h.b16 %v4656
    %v5068 = vunpack.c.l.b16 %v4657
    %v5069 = vunpack.c.h.b16 %v4657
    %v5070 = vunpack.c.l.b16 %v4658
    %v5071 = vunpack.c.h.b16 %v4658
    %v5072 = vunpack.c.l.b16 %v4659
    %v5073 = vunpack.c.h.b16 %v4659
    %v5074 = vunpack.c.l.b16 %v4660
    %v5075 = vunpack.c.h.b16 %v4660
    %v5076 = vunpack.c.l.b16 %v4661
    %v5077 = vunpack.c.h.b16 %v4661
    %v5078 = vunpack.c.l.b16 %v4662
    %v5079 = vunpack.c.h.b16 %v4662
    %v5080 = vunpack.c.l.b16 %v4663
    %v5081 = vunpack.c.h.b16 %v4663
    %v5082 = vunpack.c.l.b16 %v4664
    %v5083 = vunpack.c.h.b16 %v4664
    %v5084 = vunpack.c.l.b16 %v4665
    %v5085 = vunpack.c.h.b16 %v4665
    %v5086 = vunpack.c.l.b16 %v4666
    %v5087 = vunpack.c.h.b16 %v4666
    %v5088 = vunpack.c.l.b16 %v4667
    %v5089 = vunpack.c.h.b16 %v4667
    %v5090 = vunpack.c.l.b16 %v4668
    %v5091 = vunpack.c.h.b16 %v4668
    %v5092 = vunpack.c.l.b16 %v4669
    %v5093 = vunpack.c.h.b16 %v4669
    %v5094 = vunpack.c.l.b16 %v4670
    %v5095 = vunpack.c.h.b16 %v4670
    %v5096 = vunpack.c.l.b16 %v4671
    %v5097 = vunpack.c.h.b16 %v4671
    %v5098 = vunpack.c.l.b16 %v4672
    %v5099 = vunpack.c.h.b16 %v4672
    %v5100 = vunpack.c.l.b16 %v4673
    %v5101 = vunpack.c.h.b16 %v4673
    %v5102 = vunpack.c.l.b16 %v4674
    %v5103 = vunpack.c.h.b16 %v4674
    %v5104 = vunpack.c.l.b16 %v4675
    %v5105 = vunpack.c.h.b16 %v4675
    %v5106 = vunpack.c.l.b16 %v4676
    %v5107 = vunpack.c.h.b16 %v4676
    %v5108 = vunpack.c.l.b16 %v4677
    %v5109 = vunpack.c.h.b16 %v4677
    %v5110 = vunpack.c.l.b16 %v4678
    %v5111 = vunpack.c.h.b16 %v4678
    %v5112 = vunpack.c.l.b16 %v4679
    %v5113 = vunpack.c.h.b16 %v4679
    %v5114 = vunpack.c.l.b16 %v4680
    %v5115 = vunpack.c.h.b16 %v4680
    %v5116 = vunpack.c.l.b16 %v4681
    %v5117 = vunpack.c.h.b16 %v4681
    %v5118 = vunpack.c.l.b16 %v4682
    %v5119 = vunpack.c.h.b16 %v4682
    %v5120 = vunpack.c.l.b16 %v4683
    %v5121 = vunpack.c.h.b16 %v4683
    %v5122 = vunpack.c.l.b16 %v4684
    %v5123 = vunpack.c.h.b16 %v4684
    %v5124 = vunpack.c.l.b16 %v4685
    %v5125 = vunpack.c.h.b16 %v4685
    %v5126 = vunpack.c.l.b16 %v4686
    %v5127 = vunpack.c.h.b16 %v4686
    %v5128 = vunpack.c.l.b16 %v4687
    %v5129 = vunpack.c.h.b16 %v4687
    %v5130 = vunpack.c.l.b16 %v4688
    %v5131 = vunpack.c.h.b16 %v4688
    %v5132 = vunpack.c.l.b16 %v4689
    %v5133 = vunpack.c.h.b16 %v4689
    %v5134 = vunpack.c.l.b16 %v4690
    %v5135 = vunpack.c.h.b16 %v4690
    %v5136 = vunpack.c.l.b16 %v4691
    %v5137 = vunpack.c.h.b16 %v4691
    %v5138 = vunpack.c.l.b16 %v4692
    %v5139 = vunpack.c.h.b16 %v4692
    %v5140 = vunpack.c.l.b16 %v4693
    %v5141 = vunpack.c.h.b16 %v4693
    %v5142 = vunpack.c.l.b16 %v4694
    %v5143 = vunpack.c.h.b16 %v4694
    %v5144 = vunpack.c.l.b16 %v4695
    %v5145 = vunpack.c.h.b16 %v4695
    %v5146 = vunpack.c.l.b16 %v4696
    %v5147 = vunpack.c.h.b16 %v4696
    %v5148 = vunpack.c.l.b16 %v4697
    %v5149 = vunpack.c.h.b16 %v4697
    %v5150 = vunpack.c.l.b16 %v4698
    %v5151 = vunpack.c.h.b16 %v4698
    %v5152 = vunpack.c.l.b16 %v4699
    %v5153 = vunpack.c.h.b16 %v4699
    %v5154 = vunpack.c.l.b16 %v4700
    %v5155 = vunpack.c.h.b16 %v4700
    %v5156 = vunpack.c.l.b16 %v4701
    %v5157 = vunpack.c.h.b16 %v4701
    %v5158 = vunpack.c.l.b16 %v4702
    %v5159 = vunpack.c.h.b16 %v4702
    %v5160 = vunpack.c.l.b16 %v4703
    %v5161 = vunpack.c.h.b16 %v4703
    %v5162 = vunpack.c.l.b16 %v4704
    %v5163 = vunpack.c.h.b16 %v4704
    %v5164 = vunpack.c.l.b16 %v4705
    %v5165 = vunpack.c.h.b16 %v4705
    %v5166 = vunpack.c.l.b16 %v4706
    %v5167 = vunpack.c.h.b16 %v4706
    %v5168 = vunpack.c.l.b16 %v4707
    %v5169 = vunpack.c.h.b16 %v4707
    %v5170 = vunpack.c.l.b16 %v4708
    %v5171 = vunpack.c.h.b16 %v4708
    %v5172 = vunpack.c.l.b16 %v4709
    %v5173 = vunpack.c.h.b16 %v4709
    %v5174 = vunpack.c.l.b16 %v4710
    %v5175 = vunpack.c.h.b16 %v4710
    %v5176 = vunpack.c.l.b16 %v4711
    %v5177 = vunpack.c.h.b16 %v4711
    %v5178 = vunpack.c.l.b16 %v4712
    %v5179 = vunpack.c.h.b16 %v4712
    %v5180 = vunpack.c.l.b16 %v4713
    %v5181 = vunpack.c.h.b16 %v4713
    %v5182 = vunpack.c.l.b16 %v4714
    %v5183 = vunpack.c.h.b16 %v4714
    %v5184 = vunpack.c.l.b16 %v4715
    %v5185 = vunpack.c.h.b16 %v4715
    %v5186 = vunpack.c.l.b16 %v4716
    %v5187 = vunpack.c.h.b16 %v4716
    %v5188 = vunpack.c.l.b16 %v4717
    %v5189 = vunpack.c.h.b16 %v4717
    %v5190 = vunpack.c.l.b16 %v4718
    %v5191 = vunpack.c.h.b16 %v4718
    %v5192 = vunpack.c.l.b16 %v4719
    %v5193 = vunpack.c.h.b16 %v4719
    %v5194 = vunpack.c.l.b16 %v4720
    %v5195 = vunpack.c.h.b16 %v4720
    %v5196 = vunpack.c.l.b16 %v4721
    %v5197 = vunpack.c.h.b16 %v4721
    %v5198 = vunpack.c.l.b16 %v4722
    %v5199 = vunpack.c.h.b16 %v4722
    %v5200 = vunpack.c.l.b16 %v4723
    %v5201 = vunpack.c.h.b16 %v4723
    %v5202 = vunpack.c.l.b16 %v4724
    %v5203 = vunpack.c.h.b16 %v4724
    %v5204 = vunpack.c.l.b16 %v4725
    %v5205 = vunpack.c.h.b16 %v4725
    %v5206 = vunpack.c.l.b16 %v4726
    %v5207 = vunpack.c.h.b16 %v4726
    %v5208 = vunpack.c.l.b16 %v4727
    %v5209 = vunpack.c.h.b16 %v4727
    %v5210 = vunpack.c.l.b16 %v4728
    %v5211 = vunpack.c.h.b16 %v4728
    %v5212 = vunpack.c.l.b16 %v4729
    %v5213 = vunpack.c.h.b16 %v4729
    %v5214 = vunpack.c.l.b16 %v4730
    %v5215 = vunpack.c.h.b16 %v4730
    %v5216 = vunpack.c.l.b16 %v4731
    %v5217 = vunpack.c.h.b16 %v4731
    %v5218 = vunpack.c.l.b16 %v4732
    %v5219 = vunpack.c.h.b16 %v4732
    %v5220 = vunpack.c.l.b16 %v4733
    %v5221 = vunpack.c.h.b16 %v4733
    %v5222 = vunpack.c.l.b16 %v4734
    %v5223 = vunpack.c.h.b16 %v4734
    %v5224 = vunpack.c.l.b16 %v4735
    %v5225 = vunpack.c.h.b16 %v4735
    %v5226 = vunpack.c.l.b16 %v4736
    %v5227 = vunpack.c.h.b16 %v4736
    %v5228 = vunpack.c.l.b16 %v4737
    %v5229 = vunpack.c.h.b16 %v4737
    %v5230 = vunpack.c.l.b16 %v4738
    %v5231 = vunpack.c.h.b16 %v4738
    %v5232 = vunpack.c.l.b16 %v4739
    %v5233 = vunpack.c.h.b16 %v4739
    %v5234 = vunpack.c.l.b16 %v4740
    %v5235 = vunpack.c.h.b16 %v4740
    %v5236 = vunpack.c.l.b16 %v4741
    %v5237 = vunpack.c.h.b16 %v4741
    %v5238 = vunpack.c.l.b16 %v4742
    %v5239 = vunpack.c.h.b16 %v4742
    %v5240 = vunpack.c.l.b16 %v4743
    %v5241 = vunpack.c.h.b16 %v4743
    %v5242 = vunpack.c.l.b16 %v4744
    %v5243 = vunpack.c.h.b16 %v4744
    %v5244 = vunpack.c.l.b16 %v4745
    %v5245 = vunpack.c.h.b16 %v4745
    %v5246 = vunpack.c.l.b16 %v4746
    %v5247 = vunpack.c.h.b16 %v4746
    %v5248 = vunpack.c.l.b16 %v4747
    %v5249 = vunpack.c.h.b16 %v4747
    %v5250 = vunpack.c.l.b16 %v4748
    %v5251 = vunpack.c.h.b16 %v4748
    %v5252 = vunpack.c.l.b16 %v4749
    %v5253 = vunpack.c.h.b16 %v4749
    %v5254 = vunpack.c.l.b16 %v4750
    %v5255 = vunpack.c.h.b16 %v4750
    %v5256 = vunpack.c.l.b16 %v4751
    %v5257 = vunpack.c.h.b16 %v4751
    %v5258 = vunpack.c.l.b16 %v4752
    %v5259 = vunpack.c.h.b16 %v4752
    %v5260 = vunpack.c.l.b16 %v4753
    %v5261 = vunpack.c.h.b16 %v4753
    %v5262 = vunpack.c.l.b16 %v4754
    %v5263 = vunpack.c.h.b16 %v4754
    %v5264 = vunpack.c.l.b16 %v4755
    %v5265 = vunpack.c.h.b16 %v4755
    %v5266 = vunpack.c.l.b16 %v4756
    %v5267 = vunpack.c.h.b16 %v4756
    %v5268 = vunpack.c.l.b16 %v4757
    %v5269 = vunpack.c.h.b16 %v4757
    %v5270 = vunpack.c.l.b16 %v4758
    %v5271 = vunpack.c.h.b16 %v4758
    %v5272 = vunpack.c.l.b16 %v4759
    %v5273 = vunpack.c.h.b16 %v4759
    %v5274 = vunpack.c.l.b16 %v4760
    %v5275 = vunpack.c.h.b16 %v4760
    %v5276 = vunpack.c.l.b16 %v4761
    %v5277 = vunpack.c.h.b16 %v4761
    %v5278 = vunpack.c.l.b16 %v4762
    %v5279 = vunpack.c.h.b16 %v4762
    %v5280 = vunpack.c.l.b16 %v4763
    %v5281 = vunpack.c.h.b16 %v4763
    %v5282 = vunpack.c.l.b16 %v4764
    %v5283 = vunpack.c.h.b16 %v4764
    %v5284 = vunpack.c.l.b16 %v4765
    %v5285 = vunpack.c.h.b16 %v4765
    %v5286 = vunpack.c.l.b16 %v4766
    %v5287 = vunpack.c.h.b16 %v4766
    %v5288 = vunpack.c.l.b16 %v4767
    %v5289 = vunpack.c.h.b16 %v4767
    %v5290 = vunpack.c.l.b16 %v4768
    %v5291 = vunpack.c.h.b16 %v4768
    %v5292 = vunpack.c.l.b16 %v4769
    %v5293 = vunpack.c.h.b16 %v4769
    %v5294 = vunpack.c.l.b16 %v4770
    %v5295 = vunpack.c.h.b16 %v4770
    %v5296 = vunpack.c.l.b16 %v4771
    %v5297 = vunpack.c.h.b16 %v4771
    %v5298 = vunpack.c.l.b16 %v4772
    %v5299 = vunpack.c.h.b16 %v4772
    %v5300 = vunpack.c.l.b16 %v4773
    %v5301 = vunpack.c.h.b16 %v4773
    %v5302 = vunpack.c.l.b16 %v4774
    %v5303 = vunpack.c.h.b16 %v4774
    %v5304 = vunpack.c.l.b16 %v4775
    %v5305 = vunpack.c.h.b16 %v4775
    %v5306 = vunpack.c.l.b16 %v4776
    %v5307 = vunpack.c.h.b16 %v4776
    %v5308 = vunpack.c.l.b16 %v4777
    %v5309 = vunpack.c.h.b16 %v4777
    %v5310 = vunpack.c.l.b16 %v4778
    %v5311 = vunpack.c.h.b16 %v4778
    %v5312 = vunpack.c.l.b16 %v4779
    %v5313 = vunpack.c.h.b16 %v4779
    %v5314 = vunpack.c.l.b16 %v4780
    %v5315 = vunpack.c.h.b16 %v4780
    %v5316 = vunpack.c.l.b16 %v4781
    %v5317 = vunpack.c.h.b16 %v4781
    %v5318 = vunpack.c.l.b16 %v4782
    %v5319 = vunpack.c.h.b16 %v4782
    %v5320 = vunpack.c.l.b16 %v4783
    %v5321 = vunpack.c.h.b16 %v4783
    %v5322 = vunpack.c.l.b16 %v4784
    %v5323 = vunpack.c.h.b16 %v4784
    %v5324 = vunpack.c.l.b16 %v4785
    %v5325 = vunpack.c.h.b16 %v4785
    %v5326 = vunpack.c.l.b16 %v4786
    %v5327 = vunpack.c.h.b16 %v4786
    %v5328 = vunpack.c.l.b16 %v4787
    %v5329 = vunpack.c.h.b16 %v4787
    %v5330 = vunpack.c.l.b16 %v4788
    %v5331 = vunpack.c.h.b16 %v4788
    %v5332 = vunpack.c.l.b16 %v4789
    %v5333 = vunpack.c.h.b16 %v4789
    %v5334 = vunpack.c.l.b16 %v4790
    %v5335 = vunpack.c.h.b16 %v4790
    %v5336 = vunpack.c.l.b16 %v4791
    %v5337 = vunpack.c.h.b16 %v4791
    %v5338 = vunpack.c.l.b16 %v4792
    %v5339 = vunpack.c.h.b16 %v4792
    %v5340 = vunpack.c.l.b16 %v4793
    %v5341 = vunpack.c.h.b16 %v4793
    %v5342 = vunpack.c.l.b16 %v4794
    %v5343 = vunpack.c.h.b16 %v4794
    %v5344 = vunpack.c.l.b16 %v4795
    %v5345 = vunpack.c.h.b16 %v4795
    %v5346 = vunpack.c.l.b16 %v4796
    %v5347 = vunpack.c.h.b16 %v4796
    %v5348 = vunpack.c.l.b16 %v4797
    %v5349 = vunpack.c.h.b16 %v4797
    %v5350 = vunpack.c.l.b16 %v4798
    %v5351 = vunpack.c.h.b16 %v4798
    %v5352 = vunpack.c.l.b16 %v4799
    %v5353 = vunpack.c.h.b16 %v4799
    %v5354 = vunpack.c.l.b16 %v4800
    %v5355 = vunpack.c.h.b16 %v4800
    %v5356 = vunpack.c.l.b16 %v4801
    %v5357 = vunpack.c.h.b16 %v4801
    %v5358 = vunpack.c.l.b16 %v4802
    %v5359 = vunpack.c.h.b16 %v4802
    %v5360 = vunpack.c.l.b16 %v4803
    %v5361 = vunpack.c.h.b16 %v4803
    %v5362 = vunpack.c.l.b16 %v4804
    %v5363 = vunpack.c.h.b16 %v4804
    %v5364 = vunpack.c.l.b16 %v4805
    %v5365 = vunpack.c.h.b16 %v4805
    %v5366 = vunpack.c.l.b16 %v4806
    %v5367 = vunpack.c.h.b16 %v4806
    %v5368 = vunpack.c.l.b16 %v4807
    %v5369 = vunpack.c.h.b16 %v4807
    %v5370 = vunpack.c.l.b16 %v4808
    %v5371 = vunpack.c.h.b16 %v4808
    %v5372 = vunpack.c.l.b16 %v4809
    %v5373 = vunpack.c.h.b16 %v4809
    %v5374 = vunpack.c.l.b16 %v4810
    %v5375 = vunpack.c.h.b16 %v4810
    %v5376 = vunpack.c.l.b16 %v4811
    %v5377 = vunpack.c.h.b16 %v4811
    %v5378 = vunpack.c.l.b16 %v4812
    %v5379 = vunpack.c.h.b16 %v4812
    %v5380 = vunpack.c.l.b16 %v4813
    %v5381 = vunpack.c.h.b16 %v4813
    %v5382 = vunpack.c.l.b16 %v4814
    %v5383 = vunpack.c.h.b16 %v4814
    %v5384 = vunpack.c.l.b16 %v4815
    %v5385 = vunpack.c.h.b16 %v4815
    %v5386 = vunpack.c.l.b16 %v4816
    %v5387 = vunpack.c.h.b16 %v4816
    %v5388 = vunpack.c.l.b16 %v4817
    %v5389 = vunpack.c.h.b16 %v4817
    %v5390 = vunpack.c.l.b16 %v4818
    %v5391 = vunpack.c.h.b16 %v4818
    %v5392 = vunpack.c.l.b16 %v4819
    %v5393 = vunpack.c.h.b16 %v4819
    %v5394 = vunpack.c.l.b16 %v4820
    %v5395 = vunpack.c.h.b16 %v4820
    %v5396 = vunpack.c.l.b16 %v4821
    %v5397 = vunpack.c.h.b16 %v4821
    %v5398 = vunpack.c.l.b16 %v4822
    %v5399 = vunpack.c.h.b16 %v4822
    %v5400 = vunpack.c.l.b16 %v4823
    %v5401 = vunpack.c.h.b16 %v4823
    %v5402 = vunpack.c.l.b16 %v4824
    %v5403 = vunpack.c.h.b16 %v4824
    %v5404 = vunpack.c.l.b16 %v4825
    %v5405 = vunpack.c.h.b16 %v4825
    %v5406 = vunpack.c.l.b16 %v4826
    %v5407 = vunpack.c.h.b16 %v4826
    %v5408 = vunpack.c.l.b16 %v4827
    %v5409 = vunpack.c.h.b16 %v4827
    %v5410 = vunpack.c.l.b16 %v4828
    %v5411 = vunpack.c.h.b16 %v4828
    %v5412 = vunpack.c.l.b16 %v4829
    %v5413 = vunpack.c.h.b16 %v4829
    %v5414 = vunpack.c.l.b16 %v4830
    %v5415 = vunpack.c.h.b16 %v4830
    %v5416 = vunpack.c.l.b16 %v4831
    %v5417 = vunpack.c.h.b16 %v4831
    %v5418 = vunpack.c.l.b16 %v4832
    %v5419 = vunpack.c.h.b16 %v4832
    %v5420 = vunpack.c.l.b16 %v4833
    %v5421 = vunpack.c.h.b16 %v4833
    %v5422 = vunpack.c.l.b16 %v4834
    %v5423 = vunpack.c.h.b16 %v4834
    %v5424 = vunpack.c.l.b16 %v4835
    %v5425 = vunpack.c.h.b16 %v4835
    %v5426 = vunpack.c.l.b16 %v4836
    %v5427 = vunpack.c.h.b16 %v4836
    %v5428 = vunpack.c.l.b16 %v4837
    %v5429 = vunpack.c.h.b16 %v4837
    %v5430 = vunpack.c.l.b16 %v4838
    %v5431 = vunpack.c.h.b16 %v4838
    %v5432 = vunpack.c.l.b16 %v4839
    %v5433 = vunpack.c.h.b16 %v4839
    %v5434 = vunpack.c.l.b16 %v4840
    %v5435 = vunpack.c.h.b16 %v4840
    %v5436 = vunpack.c.l.b16 %v4841
    %v5437 = vunpack.c.h.b16 %v4841
    %v5438 = vunpack.c.l.b16 %v4842
    %v5439 = vunpack.c.h.b16 %v4842
    %v5440 = vunpack.c.l.b16 %v4843
    %v5441 = vunpack.c.h.b16 %v4843
    %v5442 = vpack.c.b16 %v5062, %v5058
    %v5443 = vpack.c.b16 %v5063, %v5059
    %v5444 = vpack.c.b16 %v5064, %v5060
    %v5445 = vpack.c.b16 %v5065, %v5061
    %v5446 = vpack.c.b16 %v5070, %v5066
    %v5447 = vpack.c.b16 %v5071, %v5067
    %v5448 = vpack.c.b16 %v5072, %v5068
    %v5449 = vpack.c.b16 %v5073, %v5069
    %v5450 = vpack.c.b16 %v5078, %v5074
    %v5451 = vpack.c.b16 %v5079, %v5075
    %v5452 = vpack.c.b16 %v5080, %v5076
    %v5453 = vpack.c.b16 %v5081, %v5077
    %v5454 = vpack.c.b16 %v5086, %v5082
    %v5455 = vpack.c.b16 %v5087, %v5083
    %v5456 = vpack.c.b16 %v5088, %v5084
    %v5457 = vpack.c.b16 %v5089, %v5085
    %v5458 = vpack.c.b16 %v5094, %v5090
    %v5459 = vpack.c.b16 %v5095, %v5091
    %v5460 = vpack.c.b16 %v5096, %v5092
    %v5461 = vpack.c.b16 %v5097, %v5093
    %v5462 = vpack.c.b16 %v5102, %v5098
    %v5463 = vpack.c.b16 %v5103, %v5099
    %v5464 = vpack.c.b16 %v5104, %v5100
    %v5465 = vpack.c.b16 %v5105, %v5101
    %v5466 = vpack.c.b16 %v5110, %v5106
    %v5467 = vpack.c.b16 %v5111, %v5107
    %v5468 = vpack.c.b16 %v5112, %v5108
    %v5469 = vpack.c.b16 %v5113, %v5109
    %v5470 = vpack.c.b16 %v5118, %v5114
    %v5471 = vpack.c.b16 %v5119, %v5115
    %v5472 = vpack.c.b16 %v5120, %v5116
    %v5473 = vpack.c.b16 %v5121, %v5117
    %v5474 = vpack.c.b16 %v5126, %v5122
    %v5475 = vpack.c.b16 %v5127, %v5123
    %v5476 = vpack.c.b16 %v5128, %v5124
    %v5477 = vpack.c.b16 %v5129, %v5125
    %v5478 = vpack.c.b16 %v5134, %v5130
    %v5479 = vpack.c.b16 %v5135, %v5131
    %v5480 = vpack.c.b16 %v5136, %v5132
    %v5481 = vpack.c.b16 %v5137, %v5133
    %v5482 = vpack.c.b16 %v5142, %v5138
    %v5483 = vpack.c.b16 %v5143, %v5139
    %v5484 = vpack.c.b16 %v5144, %v5140
    %v5485 = vpack.c.b16 %v5145, %v5141
    %v5486 = vpack.c.b16 %v5150, %v5146
    %v5487 = vpack.c.b16 %v5151, %v5147
    %v5488 = vpack.c.b16 %v5152, %v5148
    %v5489 = vpack.c.b16 %v5153, %v5149
    %v5490 = vpack.c.b16 %v5158, %v5154
    %v5491 = vpack.c.b16 %v5159, %v5155
    %v5492 = vpack.c.b16 %v5160, %v5156
    %v5493 = vpack.c.b16 %v5161, %v5157
    %v5494 = vpack.c.b16 %v5166, %v5162
    %v5495 = vpack.c.b16 %v5167, %v5163
    %v5496 = vpack.c.b16 %v5168, %v5164
    %v5497 = vpack.c.b16 %v5169, %v5165
    %v5498 = vpack.c.b16 %v5174, %v5170
    %v5499 = vpack.c.b16 %v5175, %v5171
    %v5500 = vpack.c.b16 %v5176, %v5172
    %v5501 = vpack.c.b16 %v5177, %v5173
    %v5502 = vpack.c.b16 %v5182, %v5178
    %v5503 = vpack.c.b16 %v5183, %v5179
    %v5504 = vpack.c.b16 %v5184, %v5180
    %v5505 = vpack.c.b16 %v5185, %v5181
    %v5506 = vpack.c.b16 %v5190, %v5186
    %v5507 = vpack.c.b16 %v5191, %v5187
    %v5508 = vpack.c.b16 %v5192, %v5188
    %v5509 = vpack.c.b16 %v5193, %v5189
    %v5510 = vpack.c.b16 %v5198, %v5194
    %v5511 = vpack.c.b16 %v5199, %v5195
    %v5512 = vpack.c.b16 %v5200, %v5196
    %v5513 = vpack.c.b16 %v5201, %v5197
    %v5514 = vpack.c.b16 %v5206, %v5202
    %v5515 = vpack.c.b16 %v5207, %v5203
    %v5516 = vpack.c.b16 %v5208, %v5204
    %v5517 = vpack.c.b16 %v5209, %v5205
    %v5518 = vpack.c.b16 %v5214, %v5210
    %v5519 = vpack.c.b16 %v5215, %v5211
    %v5520 = vpack.c.b16 %v5216, %v5212
    %v5521 = vpack.c.b16 %v5217, %v5213
    %v5522 = vpack.c.b16 %v5222, %v5218
    %v5523 = vpack.c.b16 %v5223, %v5219
    %v5524 = vpack.c.b16 %v5224, %v5220
    %v5525 = vpack.c.b16 %v5225, %v5221
    %v5526 = vpack.c.b16 %v5230, %v5226
    %v5527 = vpack.c.b16 %v5231, %v5227
    %v5528 = vpack.c.b16 %v5232, %v5228
    %v5529 = vpack.c.b16 %v5233, %v5229
    %v5530 = vpack.c.b16 %v5238, %v5234
    %v5531 = vpack.c.b16 %v5239, %v5235
    %v5532 = vpack.c.b16 %v5240, %v5236
    %v5533 = vpack.c.b16 %v5241, %v5237
    %v5534 = vpack.c.b16 %v5246, %v5242
    %v5535 = vpack.c.b16 %v5247, %v5243
    %v5536 = vpack.c.b16 %v5248, %v5244
    %v5537 = vpack.c.b16 %v5249, %v5245
    %v5538 = vpack.c.b16 %v5254, %v5250
    %v5539 = vpack.c.b16 %v5255, %v5251
    %v5540 = vpack.c.b16 %v5256, %v5252
    %v5541 = vpack.c.b16 %v5257, %v5253
    %v5542 = vpack.c.b16 %v5262, %v5258
    %v5543 = vpack.c.b16 %v5263, %v5259
    %v5544 = vpack.c.b16 %v5264, %v5260
    %v5545 = vpack.c.b16 %v5265, %v5261
    %v5546 = vpack.c.b16 %v5270, %v5266
    %v5547 = vpack.c.b16 %v5271, %v5267
    %v5548 = vpack.c.b16 %v5272, %v5268
    %v5549 = vpack.c.b16 %v5273, %v5269
    %v5550 = vpack.c.b16 %v5278, %v5274
    %v5551 = vpack.c.b16 %v5279, %v5275
    %v5552 = vpack.c.b16 %v5280, %v5276
    %v5553 = vpack.c.b16 %v5281, %v5277
    %v5554 = vpack.c.b16 %v5286, %v5282
    %v5555 = vpack.c.b16 %v5287, %v5283
    %v5556 = vpack.c.b16 %v5288, %v5284
    %v5557 = vpack.c.b16 %v5289, %v5285
    %v5558 = vpack.c.b16 %v5294, %v5290
    %v5559 = vpack.c.b16 %v5295, %v5291
    %v5560 = vpack.c.b16 %v5296, %v5292
    %v5561 = vpack.c.b16 %v5297, %v5293
    %v5562 = vpack.c.b16 %v5302, %v5298
    %v5563 = vpack.c.b16 %v5303, %v5299
    %v5564 = vpack.c.b16 %v5304, %v5300
    %v5565 = vpack.c.b16 %v5305, %v5301
    %v5566 = vpack.c.b16 %v5310, %v5306
    %v5567 = vpack.c.b16 %v5311, %v5307
    %v5568 = vpack.c.b16 %v5312, %v5308
    %v5569 = vpack.c.b16 %v5313, %v5309
    %v5570 = vpack.c.b16 %v5318, %v5314
    %v5571 = vpack.c.b16 %v5319, %v5315
    %v5572 = vpack.c.b16 %v5320, %v5316
    %v5573 = vpack.c.b16 %v5321, %v5317
    %v5574 = vpack.c.b16 %v5326, %v5322
    %v5575 = vpack.c.b16 %v5327, %v5323
    %v5576 = vpack.c.b16 %v5328, %v5324
    %v5577 = vpack.c.b16 %v5329, %v5325
    %v5578 = vpack.c.b16 %v5334, %v5330
    %v5579 = vpack.c.b16 %v5335, %v5331
    %v5580 = vpack.c.b16 %v5336, %v5332
    %v5581 = vpack.c.b16 %v5337, %v5333
    %v5582 = vpack.c.b16 %v5342, %v5338
    %v5583 = vpack.c.b16 %v5343, %v5339
    %v5584 = vpack.c.b16 %v5344, %v5340
    %v5585 = vpack.c.b16 %v5345, %v5341
    %v5586 = vpack.c.b16 %v5350, %v5346
    %v5587 = vpack.c.b16 %v5351, %v5347
    %v5588 = vpack.c.b16 %v5352, %v5348
    %v5589 = vpack.c.b16 %v5353, %v5349
    %v5590 = vpack.c.b16 %v5358, %v5354
    %v5591 = vpack.c.b16 %v5359, %v5355
    %v5592 = vpack.c.b16 %v5360, %v5356
    %v5593 = vpack.c.b16 %v5361, %v5357
    %v5594 = vpack.c.b16 %v5366, %v5362
    %v5595 = vpack.c.b16 %v5367, %v5363
    %v5596 = vpack.c.b16 %v5368, %v5364
    %v5597 = vpack.c.b16 %v5369, %v5365
    %v5598 = vpack.c.b16 %v5374, %v5370
    %v5599 = vpack.c.b16 %v5375, %v5371
    %v5600 = vpack.c.b16 %v5376, %v5372
    %v5601 = vpack.c.b16 %v5377, %v5373
    %v5602 = vpack.c.b16 %v5382, %v5378
    %v5603 = vpack.c.b16 %v5383, %v5379
    %v5604 = vpack.c.b16 %v5384, %v5380
    %v5605 = vpack.c.b16 %v5385, %v5381
    %v5606 = vpack.c.b16 %v5390, %v5386
    %v5607 = vpack.c.b16 %v5391, %v5387
    %v5608 = vpack.c.b16 %v5392, %v5388
    %v5609 = vpack.c.b16 %v5393, %v5389
    %v5610 = vpack.c.b16 %v5398, %v5394
    %v5611 = vpack.c.b16 %v5399, %v5395
    %v5612 = vpack.c.b16 %v5400, %v5396
    %v5613 = vpack.c.b16 %v5401, %v5397
    %v5614 = vpack.c.b16 %v5406, %v5402
    %v5615 = vpack.c.b16 %v5407, %v5403
    %v5616 = vpack.c.b16 %v5408, %v5404
    %v5617 = vpack.c.b16 %v5409, %v5405
    %v5618 = vpack.c.b16 %v5414, %v5410
    %v5619 = vpack.c.b16 %v5415, %v5411
    %v5620 = vpack.c.b16 %v5416, %v5412
    %v5621 = vpack.c.b16 %v5417, %v5413
    %v5622 = vpack.c.b16 %v5422, %v5418
    %v5623 = vpack.c.b16 %v5423, %v5419
    %v5624 = vpack.c.b16 %v5424, %v5420
    %v5625 = vpack.c.b16 %v5425, %v5421
    %v5626 = vpack.c.b16 %v5430, %v5426
    %v5627 = vpack.c.b16 %v5431, %v5427
    %v5628 = vpack.c.b16 %v5432, %v5428
    %v5629 = vpack.c.b16 %v5433, %v5429
    %v5630 = vpack.c.b16 %v5438, %v5434
    %v5631 = vpack.c.b16 %v5439, %v5435
    %v5632 = vpack.c.b16 %v5440, %v5436
    %v5633 = vpack.c.b16 %v5441, %v5437
    %5826 = vmatprep.subr.bf16.mxu0 %v5443
    %5827 = vmatpush1.bf16.msra.mxu0 %v5442
    %5828 = vmatprep.subr.bf16.mxu0 %v5447
    %5829 = vmatpush1.bf16.msra.mxu0 %v5446
    %5830 = vmatprep.subr.bf16.mxu0 %v5451
    %5831 = vmatpush1.bf16.msra.mxu0 %v5450
    %5832 = vmatprep.subr.bf16.mxu0 %v5455
    %5833 = vmatpush1.bf16.msra.mxu0 %v5454
    %5834 = vmatprep.subr.bf16.mxu0 %v5459
    %5835 = vmatpush1.bf16.msra.mxu0 %v5458
    %5836 = vmatprep.subr.bf16.mxu0 %v5463
    %5837 = vmatpush1.bf16.msra.mxu0 %v5462
    %5838 = vmatprep.subr.bf16.mxu0 %v5467
    %5839 = vmatpush1.bf16.msra.mxu0 %v5466
    %5840 = vmatprep.subr.bf16.mxu0 %v5471
    %5841 = vmatpush1.bf16.msra.mxu0 %v5470
    %5842 = vmatprep.subr.bf16.mxu0 %v5475
    %5843 = vmatpush1.bf16.msra.mxu0 %v5474
    %5844 = vmatprep.subr.bf16.mxu0 %v5479
    %5845 = vmatpush1.bf16.msra.mxu0 %v5478
    %5846 = vmatprep.subr.bf16.mxu0 %v5483
    %5847 = vmatpush1.bf16.msra.mxu0 %v5482
    %5848 = vmatprep.subr.bf16.mxu0 %v5487
    %5849 = vmatpush1.bf16.msra.mxu0 %v5486
    %5850 = vmatprep.subr.bf16.mxu0 %v5491
    %5851 = vmatpush1.bf16.msra.mxu0 %v5490
    %5852 = vmatprep.subr.bf16.mxu0 %v5495
    %5853 = vmatpush1.bf16.msra.mxu0 %v5494
    %5854 = vmatprep.subr.bf16.mxu0 %v5499
    %5855 = vmatpush1.bf16.msra.mxu0 %v5498
    %5856 = vmatprep.subr.bf16.mxu0 %v5503
    %5857 = vmatpush1.bf16.msra.mxu0 %v5502
    %5858 = vmatprep.mubr.bf16.mxu0 %v4647
    %5859 = vmatmul.mubr.bf16.gmra.mrb[0].mxu0 %v4646
    %v5860 = vpop.f32.mrb[0].mxu0
    %v5861 = vadd.f32 %v4849, %v5860
    %v5862 = vpop.f32.mrb[0].mxu0
    %v5863 = vadd.f32 %v4853, %v5862
    %v5864 = vpop.f32.mrb[0].mxu0
    %v5865 = vpop.f32.mrb[0].mxu0
    %5866 = vdwg.mxu0
    %5867 = vmatprep.subr.bf16.mxu0 %v5507
    %5868 = vmatpush1.bf16.msra.mxu0 %v5506
    %5869 = vmatprep.subr.bf16.mxu0 %v5511
    %5870 = vmatpush1.bf16.msra.mxu0 %v5510
    %5871 = vmatprep.subr.bf16.mxu0 %v5515
    %5872 = vmatpush1.bf16.msra.mxu0 %v5514
    %5873 = vmatprep.subr.bf16.mxu0 %v5519
    %5874 = vmatpush1.bf16.msra.mxu0 %v5518
    %5875 = vmatprep.subr.bf16.mxu0 %v5523
    %5876 = vmatpush1.bf16.msra.mxu0 %v5522
    %5877 = vmatprep.subr.bf16.mxu0 %v5527
    %5878 = vmatpush1.bf16.msra.mxu0 %v5526
    %5879 = vmatprep.subr.bf16.mxu0 %v5531
    %5880 = vmatpush1.bf16.msra.mxu0 %v5530
    %5881 = vmatprep.subr.bf16.mxu0 %v5535
    %5882 = vmatpush1.bf16.msra.mxu0 %v5534
    %5883 = vmatprep.subr.bf16.mxu0 %v5539
    %5884 = vmatpush1.bf16.msra.mxu0 %v5538
    %5885 = vmatprep.subr.bf16.mxu0 %v5543
    %5886 = vmatpush1.bf16.msra.mxu0 %v5542
    %5887 = vmatprep.subr.bf16.mxu0 %v5547
    %5888 = vmatpush1.bf16.msra.mxu0 %v5546
    %5889 = vmatprep.subr.bf16.mxu0 %v5551
    %5890 = vmatpush1.bf16.msra.mxu0 %v5550
    %5891 = vmatprep.subr.bf16.mxu0 %v5555
    %5892 = vmatpush1.bf16.msra.mxu0 %v5554
    %5893 = vmatprep.subr.bf16.mxu0 %v5559
    %5894 = vmatpush1.bf16.msra.mxu0 %v5558
    %5895 = vmatprep.subr.bf16.mxu0 %v5563
    %5896 = vmatpush1.bf16.msra.mxu0 %v5562
    %5897 = vmatprep.subr.bf16.mxu0 %v5567
    %5898 = vmatpush1.bf16.msra.mxu0 %v5566
    %5899 = vmatprep.mubr.bf16.mxu0 %v4649
    %5900 = vmatmul.mubr.bf16.gmra.mrb[0].mxu0 %v4648
    %v5901 = vpop.f32.mrb[0].mxu0
    %v5902 = vadd.f32 %v5861, %v5901
    %v5903 = vpop.f32.mrb[0].mxu0
    %v5904 = vadd.f32 %v5863, %v5903
    %v5905 = vpop.f32.mrb[0].mxu0
    %v5906 = vpop.f32.mrb[0].mxu0
    %5907 = vdwg.mxu0
    %5908 = vmatprep.subr.bf16.mxu0 %v5571
    %5909 = vmatpush1.bf16.msra.mxu0 %v5570
    %5910 = vmatprep.subr.bf16.mxu0 %v5575
    %5911 = vmatpush1.bf16.msra.mxu0 %v5574
    %5912 = vmatprep.subr.bf16.mxu0 %v5579
    %5913 = vmatpush1.bf16.msra.mxu0 %v5578
    %5914 = vmatprep.subr.bf16.mxu0 %v5583
    %5915 = vmatpush1.bf16.msra.mxu0 %v5582
    %5916 = vmatprep.subr.bf16.mxu0 %v5587
    %5917 = vmatpush1.bf16.msra.mxu0 %v5586
    %5918 = vmatprep.subr.bf16.mxu0 %v5591
    %5919 = vmatpush1.bf16.msra.mxu0 %v5590
    %5920 = vmatprep.subr.bf16.mxu0 %v5595
    %5921 = vmatpush1.bf16.msra.mxu0 %v5594
    %5922 = vmatprep.subr.bf16.mxu0 %v5599
    %5923 = vmatpush1.bf16.msra.mxu0 %v5598
    %5924 = vmatprep.subr.bf16.mxu0 %v5603
    %5925 = vmatpush1.bf16.msra.mxu0 %v5602
    %5926 = vmatprep.subr.bf16.mxu0 %v5607
    %5927 = vmatpush1.bf16.msra.mxu0 %v5606
    %5928 = vmatprep.subr.bf16.mxu0 %v5611
    %5929 = vmatpush1.bf16.msra.mxu0 %v5610
    %5930 = vmatprep.subr.bf16.mxu0 %v5615
    %5931 = vmatpush1.bf16.msra.mxu0 %v5614
    %5932 = vmatprep.subr.bf16.mxu0 %v5619
    %5933 = vmatpush1.bf16.msra.mxu0 %v5618
    %5934 = vmatprep.subr.bf16.mxu0 %v5623
    %5935 = vmatpush1.bf16.msra.mxu0 %v5622
    %5936 = vmatprep.subr.bf16.mxu0 %v5627
    %5937 = vmatpush1.bf16.msra.mxu0 %v5626
    %5938 = vmatprep.subr.bf16.mxu0 %v5631
    %5939 = vmatpush1.bf16.msra.mxu0 %v5630
    %5940 = vmatprep.mubr.bf16.mxu0 %v4651
    %5941 = vmatmul.mubr.bf16.gmra.mrb[0].mxu0 %v4650
    %v5942 = vpop.f32.mrb[0].mxu0
    %v5943 = vadd.f32 %v5902, %v5942
    %v5944 = vpop.f32.mrb[0].mxu0
    %v5945 = vadd.f32 %v5904, %v5944
    %v5946 = vpop.f32.mrb[0].mxu0
    %v5947 = vpop.f32.mrb[0].mxu0
    %5948 = vdwg.mxu0
    %5949 = vmatprep.subr.bf16.mxu0 %v5445
    %5950 = vmatpush1.bf16.msra.mxu0 %v5444
    %5951 = vmatprep.subr.bf16.mxu0 %v5449
    %5952 = vmatpush1.bf16.msra.mxu0 %v5448
    %5953 = vmatprep.subr.bf16.mxu0 %v5453
    %5954 = vmatpush1.bf16.msra.mxu0 %v5452
    %5955 = vmatprep.subr.bf16.mxu0 %v5457
    %5956 = vmatpush1.bf16.msra.mxu0 %v5456
    %5957 = vmatprep.subr.bf16.mxu0 %v5461
    %5958 = vmatpush1.bf16.msra.mxu0 %v5460
    %5959 = vmatprep.subr.bf16.mxu0 %v5465
    %5960 = vmatpush1.bf16.msra.mxu0 %v5464
    %5961 = vmatprep.subr.bf16.mxu0 %v5469
    %5962 = vmatpush1.bf16.msra.mxu0 %v5468
    %5963 = vmatprep.subr.bf16.mxu0 %v5473
    %5964 = vmatpush1.bf16.msra.mxu0 %v5472
    %5965 = vmatprep.subr.bf16.mxu0 %v5477
    %5966 = vmatpush1.bf16.msra.mxu0 %v5476
    %5967 = vmatprep.subr.bf16.mxu0 %v5481
    %5968 = vmatpush1.bf16.msra.mxu0 %v5480
    %5969 = vmatprep.subr.bf16.mxu0 %v5485
    %5970 = vmatpush1.bf16.msra.mxu0 %v5484
    %5971 = vmatprep.subr.bf16.mxu0 %v5489
    %5972 = vmatpush1.bf16.msra.mxu0 %v5488
    %5973 = vmatprep.subr.bf16.mxu0 %v5493
    %5974 = vmatpush1.bf16.msra.mxu0 %v5492
    %5975 = vmatprep.subr.bf16.mxu0 %v5497
    %5976 = vmatpush1.bf16.msra.mxu0 %v5496
    %5977 = vmatprep.subr.bf16.mxu0 %v5501
    %5978 = vmatpush1.bf16.msra.mxu0 %v5500
    %5979 = vmatprep.subr.bf16.mxu0 %v5505
    %5980 = vmatpush1.bf16.msra.mxu0 %v5504
    %5981 = vmatprep.mubr.bf16.mxu0 %v4647
    %5982 = vmatmul.mubr.bf16.gmra.mrb[0].mxu0 %v4646
    %v5983 = vpop.f32.mrb[0].mxu0
    %v5984 = vadd.f32 %v4857, %v5983
    %v5985 = vpop.f32.mrb[0].mxu0
    %v5986 = vadd.f32 %v4861, %v5985
    %v5987 = vpop.f32.mrb[0].mxu0
    %v5988 = vpop.f32.mrb[0].mxu0
    %5989 = vdwg.mxu0
    %5990 = vmatprep.subr.bf16.mxu0 %v5509
    %5991 = vmatpush1.bf16.msra.mxu0 %v5508
    %5992 = vmatprep.subr.bf16.mxu0 %v5513
    %5993 = vmatpush1.bf16.msra.mxu0 %v5512
    %5994 = vmatprep.subr.bf16.mxu0 %v5517
    %5995 = vmatpush1.bf16.msra.mxu0 %v5516
    %5996 = vmatprep.subr.bf16.mxu0 %v5521
    %5997 = vmatpush1.bf16.msra.mxu0 %v5520
    %5998 = vmatprep.subr.bf16.mxu0 %v5525
    %5999 = vmatpush1.bf16.msra.mxu0 %v5524
    %6000 = vmatprep.subr.bf16.mxu0 %v5529
    %6001 = vmatpush1.bf16.msra.mxu0 %v5528
    %6002 = vmatprep.subr.bf16.mxu0 %v5533
    %6003 = vmatpush1.bf16.msra.mxu0 %v5532
    %6004 = vmatprep.subr.bf16.mxu0 %v5537
    %6005 = vmatpush1.bf16.msra.mxu0 %v5536
    %6006 = vmatprep.subr.bf16.mxu0 %v5541
    %6007 = vmatpush1.bf16.msra.mxu0 %v5540
    %6008 = vmatprep.subr.bf16.mxu0 %v5545
    %6009 = vmatpush1.bf16.msra.mxu0 %v5544
    %6010 = vmatprep.subr.bf16.mxu0 %v5549
    %6011 = vmatpush1.bf16.msra.mxu0 %v5548
    %6012 = vmatprep.subr.bf16.mxu0 %v5553
    %6013 = vmatpush1.bf16.msra.mxu0 %v5552
    %6014 = vmatprep.subr.bf16.mxu0 %v5557
    %6015 = vmatpush1.bf16.msra.mxu0 %v5556
    %6016 = vmatprep.subr.bf16.mxu0 %v5561
    %6017 = vmatpush1.bf16.msra.mxu0 %v5560
    %6018 = vmatprep.subr.bf16.mxu0 %v5565
    %6019 = vmatpush1.bf16.msra.mxu0 %v5564
    %6020 = vmatprep.subr.bf16.mxu0 %v5569
    %6021 = vmatpush1.bf16.msra.mxu0 %v5568
    %6022 = vmatprep.mubr.bf16.mxu0 %v4649
    %6023 = vmatmul.mubr.bf16.gmra.mrb[0].mxu0 %v4648
    %v6024 = vpop.f32.mrb[0].mxu0
    %v6025 = vadd.f32 %v5984, %v6024
    %v6026 = vpop.f32.mrb[0].mxu0
    %v6027 = vadd.f32 %v5986, %v6026
    %v6028 = vpop.f32.mrb[0].mxu0
    %v6029 = vpop.f32.mrb[0].mxu0
    %6030 = vdwg.mxu0
    %6031 = vmatprep.subr.bf16.mxu0 %v5573
    %6032 = vmatpush1.bf16.msra.mxu0 %v5572
    %6033 = vmatprep.subr.bf16.mxu0 %v5577
    %6034 = vmatpush1.bf16.msra.mxu0 %v5576
    %6035 = vmatprep.subr.bf16.mxu0 %v5581
    %6036 = vmatpush1.bf16.msra.mxu0 %v5580
    %6037 = vmatprep.subr.bf16.mxu0 %v5585
    %6038 = vmatpush1.bf16.msra.mxu0 %v5584
    %6039 = vmatprep.subr.bf16.mxu0 %v5589
    %6040 = vmatpush1.bf16.msra.mxu0 %v5588
    %6041 = vmatprep.subr.bf16.mxu0 %v5593
    %6042 = vmatpush1.bf16.msra.mxu0 %v5592
    %6043 = vmatprep.subr.bf16.mxu0 %v5597
    %6044 = vmatpush1.bf16.msra.mxu0 %v5596
    %6045 = vmatprep.subr.bf16.mxu0 %v5601
    %6046 = vmatpush1.bf16.msra.mxu0 %v5600
    %6047 = vmatprep.subr.bf16.mxu0 %v5605
    %6048 = vmatpush1.bf16.msra.mxu0 %v5604
    %6049 = vmatprep.subr.bf16.mxu0 %v5609
    %6050 = vmatpush1.bf16.msra.mxu0 %v5608
    %6051 = vmatprep.subr.bf16.mxu0 %v5613
    %6052 = vmatpush1.bf16.msra.mxu0 %v5612
    %6053 = vmatprep.subr.bf16.mxu0 %v5617
    %6054 = vmatpush1.bf16.msra.mxu0 %v5616
    %6055 = vmatprep.subr.bf16.mxu0 %v5621
    %6056 = vmatpush1.bf16.msra.mxu0 %v5620
    %6057 = vmatprep.subr.bf16.mxu0 %v5625
    %6058 = vmatpush1.bf16.msra.mxu0 %v5624
    %6059 = vmatprep.subr.bf16.mxu0 %v5629
    %6060 = vmatpush1.bf16.msra.mxu0 %v5628
    %6061 = vmatprep.subr.bf16.mxu0 %v5633
    %6062 = vmatpush1.bf16.msra.mxu0 %v5632
    %6063 = vmatprep.mubr.bf16.mxu0 %v4651
    %6064 = vmatmul.mubr.bf16.gmra.mrb[0].mxu0 %v4650
    %v6065 = vpop.f32.mrb[0].mxu0
    %v6066 = vadd.f32 %v6025, %v6065
    %v6067 = vpop.f32.mrb[0].mxu0
    %v6068 = vadd.f32 %v6027, %v6067
    %v6069 = vpop.f32.mrb[0].mxu0
    %v6070 = vpop.f32.mrb[0].mxu0
    %6071 = vdwg.mxu0
    %v6072 = vmax.f32 %v5943, 0.0
    %v6073 = vmax.f32 %v5945, 0.0
    %v6074 = vmax.f32 %v6066, 0.0
    %v6075 = vmax.f32 %v6068, 0.0
    %v6076 = vpack.c.bf16 %v6072, %v6072
    %v6077 = vpack.c.bf16 %v6073, %v6073
    %v6078 = vpack.c.bf16 %v6074, %v6074
    %v6079 = vpack.c.bf16 %v6075, %v6075
    %v6080 = vld [vmem:[#allocation17] sm:$0xf]
    %v6081 = vld [vmem:[#allocation17 + $0x4] sm:$0xf]
    %v6082 = vld [vmem:[#allocation17 + $0x8] sm:$0xf]
    %v6083 = vld [vmem:[#allocation17 + $0xc] sm:$0xf]
    %v6084 = vld [vmem:[#allocation17 + $0x10] sm:$0xf]
    %v6085 = vld [vmem:[#allocation17 + $0x14] sm:$0xf]
    %v6086 = vld [vmem:[#allocation17 + $0x18] sm:$0xf]
    %v6087 = vld [vmem:[#allocation17 + $0x1c] sm:$0xf]
    %v6088 = vld [vmem:[#allocation17 + $0x20] sm:$0xf]
    %v6089 = vld [vmem:[#allocation17 + $0x24] sm:$0xf]
    %v6090 = vld [vmem:[#allocation17 + $0x28] sm:$0xf]
    %v6091 = vld [vmem:[#allocation17 + $0x2c] sm:$0xf]
    %v6092 = vld [vmem:[#allocation17 + $0x30] sm:$0xf]
    %v6093 = vld [vmem:[#allocation17 + $0x34] sm:$0xf]
    %v6094 = vld [vmem:[#allocation17 + $0x38] sm:$0xf]
    %v6095 = vld [vmem:[#allocation17 + $0x3c] sm:$0xf]
    %v6096 = vld [vmem:[#allocation17 + $0x40] sm:$0xf]
    %v6097 = vld [vmem:[#allocation17 + $0x44] sm:$0xf]
    %v6098 = vld [vmem:[#allocation17 + $0x48] sm:$0xf]
    %v6099 = vld [vmem:[#allocation17 + $0x4c] sm:$0xf]
    %v6100 = vld [vmem:[#allocation17 + $0x50] sm:$0xf]
    %v6101 = vld [vmem:[#allocation17 + $0x54] sm:$0xf]
    %v6102 = vld [vmem:[#allocation17 + $0x58] sm:$0xf]
    %v6103 = vld [vmem:[#allocation17 + $0x5c] sm:$0xf]
    %v6104 = vld [vmem:[#allocation17 + $0x60] sm:$0xf]
    %v6105 = vld [vmem:[#allocation17 + $0x64] sm:$0xf]
    %v6106 = vld [vmem:[#allocation17 + $0x68] sm:$0xf]
    %v6107 = vld [vmem:[#allocation17 + $0x6c] sm:$0xf]
    %v6108 = vld [vmem:[#allocation17 + $0x70] sm:$0xf]
    %v6109 = vld [vmem:[#allocation17 + $0x74] sm:$0xf]
    %v6110 = vld [vmem:[#allocation17 + $0x78] sm:$0xf]
    %v6111 = vld [vmem:[#allocation17 + $0x7c] sm:$0xf]
    %v6112 = vld [vmem:[#allocation17 + $0x80] sm:$0xf]
    %v6113 = vld [vmem:[#allocation17 + $0x84] sm:$0xf]
    %v6114 = vld [vmem:[#allocation17 + $0x88] sm:$0xf]
    %v6115 = vld [vmem:[#allocation17 + $0x8c] sm:$0xf]
    %v6116 = vld [vmem:[#allocation17 + $0x90] sm:$0xf]
    %v6117 = vld [vmem:[#allocation17 + $0x94] sm:$0xf]
    %v6118 = vld [vmem:[#allocation17 + $0x98] sm:$0xf]
    %v6119 = vld [vmem:[#allocation17 + $0x9c] sm:$0xf]
    %v6120 = vld [vmem:[#allocation17 + $0xa0] sm:$0xf]
    %v6121 = vld [vmem:[#allocation17 + $0xa4] sm:$0xf]
    %v6122 = vld [vmem:[#allocation17 + $0xa8] sm:$0xf]
    %v6123 = vld [vmem:[#allocation17 + $0xac] sm:$0xf]
    %v6124 = vld [vmem:[#allocation17 + $0xb0] sm:$0xf]
    %v6125 = vld [vmem:[#allocation17 + $0xb4] sm:$0xf]
    %v6126 = vld [vmem:[#allocation17 + $0xb8] sm:$0xf]
    %v6127 = vld [vmem:[#allocation17 + $0xbc] sm:$0xf]
    %v6128 = vld [vmem:[#allocation17 + $0xc0] sm:$0xf]
    %v6129 = vld [vmem:[#allocation17 + $0xc4] sm:$0xf]
    %v6130 = vld [vmem:[#allocation17 + $0xc8] sm:$0xf]
    %v6131 = vld [vmem:[#allocation17 + $0xcc] sm:$0xf]
    %v6132 = vld [vmem:[#allocation17 + $0xd0] sm:$0xf]
    %v6133 = vld [vmem:[#allocation17 + $0xd4] sm:$0xf]
    %v6134 = vld [vmem:[#allocation17 + $0xd8] sm:$0xf]
    %v6135 = vld [vmem:[#allocation17 + $0xdc] sm:$0xf]
    %v6136 = vld [vmem:[#allocation17 + $0xe0] sm:$0xf]
    %v6137 = vld [vmem:[#allocation17 + $0xe4] sm:$0xf]
    %v6138 = vld [vmem:[#allocation17 + $0xe8] sm:$0xf]
    %v6139 = vld [vmem:[#allocation17 + $0xec] sm:$0xf]
    %v6140 = vld [vmem:[#allocation17 + $0xf0] sm:$0xf]
    %v6141 = vld [vmem:[#allocation17 + $0xf4] sm:$0xf]
    %v6142 = vld [vmem:[#allocation17 + $0xf8] sm:$0xf]
    %v6143 = vld [vmem:[#allocation17 + $0xfc] sm:$0xf]
    %v6144 = vld [vmem:[#allocation19] sm:$0x1]
    %v6146 = vlaneseq
    %v6147 = vshrl.u32 %v6146, 7
    %v6148 = vsub.s32 0, %v6147
    %v6149 = vrot.slane %v6144, %v6148
    %v6215 = vunpack.c.l.b16 %v6080
    %v6216 = vunpack.c.l.b16 %v6081
    %v6217 = vunpack.c.l.b16 %v6082
    %v6218 = vunpack.c.l.b16 %v6083
    %v6219 = vunpack.c.l.b16 %v6084
    %v6220 = vunpack.c.l.b16 %v6085
    %v6221 = vunpack.c.l.b16 %v6086
    %v6222 = vunpack.c.l.b16 %v6087
    %v6223 = vunpack.c.l.b16 %v6088
    %v6224 = vunpack.c.l.b16 %v6089
    %v6225 = vunpack.c.l.b16 %v6090
    %v6226 = vunpack.c.l.b16 %v6091
    %v6227 = vunpack.c.l.b16 %v6092
    %v6228 = vunpack.c.l.b16 %v6093
    %v6229 = vunpack.c.l.b16 %v6094
    %v6230 = vunpack.c.l.b16 %v6095
    %v6231 = vunpack.c.l.b16 %v6096
    %v6232 = vunpack.c.l.b16 %v6097
    %v6233 = vunpack.c.l.b16 %v6098
    %v6234 = vunpack.c.l.b16 %v6099
    %v6235 = vunpack.c.l.b16 %v6100
    %v6236 = vunpack.c.l.b16 %v6101
    %v6237 = vunpack.c.l.b16 %v6102
    %v6238 = vunpack.c.l.b16 %v6103
    %v6239 = vunpack.c.l.b16 %v6104
    %v6240 = vunpack.c.l.b16 %v6105
    %v6241 = vunpack.c.l.b16 %v6106
    %v6242 = vunpack.c.l.b16 %v6107
    %v6243 = vunpack.c.l.b16 %v6108
    %v6244 = vunpack.c.l.b16 %v6109
    %v6245 = vunpack.c.l.b16 %v6110
    %v6246 = vunpack.c.l.b16 %v6111
    %v6247 = vunpack.c.l.b16 %v6112
    %v6248 = vunpack.c.l.b16 %v6113
    %v6249 = vunpack.c.l.b16 %v6114
    %v6250 = vunpack.c.l.b16 %v6115
    %v6251 = vunpack.c.l.b16 %v6116
    %v6252 = vunpack.c.l.b16 %v6117
    %v6253 = vunpack.c.l.b16 %v6118
    %v6254 = vunpack.c.l.b16 %v6119
    %v6255 = vunpack.c.l.b16 %v6120
    %v6256 = vunpack.c.l.b16 %v6121
    %v6257 = vunpack.c.l.b16 %v6122
    %v6258 = vunpack.c.l.b16 %v6123
    %v6259 = vunpack.c.l.b16 %v6124
    %v6260 = vunpack.c.l.b16 %v6125
    %v6261 = vunpack.c.l.b16 %v6126
    %v6262 = vunpack.c.l.b16 %v6127
    %v6263 = vunpack.c.l.b16 %v6128
    %v6264 = vunpack.c.l.b16 %v6129
    %v6265 = vunpack.c.l.b16 %v6130
    %v6266 = vunpack.c.l.b16 %v6131
    %v6267 = vunpack.c.l.b16 %v6132
    %v6268 = vunpack.c.l.b16 %v6133
    %v6269 = vunpack.c.l.b16 %v6134
    %v6270 = vunpack.c.l.b16 %v6135
    %v6271 = vunpack.c.l.b16 %v6136
    %v6272 = vunpack.c.l.b16 %v6137
    %v6273 = vunpack.c.l.b16 %v6138
    %v6274 = vunpack.c.l.b16 %v6139
    %v6275 = vunpack.c.l.b16 %v6140
    %v6276 = vunpack.c.l.b16 %v6141
    %v6277 = vunpack.c.l.b16 %v6142
    %v6278 = vunpack.c.l.b16 %v6143
    %v6279 = vpack.c.b16 %v6216, %v6215
    %v6280 = vpack.c.b16 %v6218, %v6217
    %v6281 = vpack.c.b16 %v6220, %v6219
    %v6282 = vpack.c.b16 %v6222, %v6221
    %v6283 = vpack.c.b16 %v6224, %v6223
    %v6284 = vpack.c.b16 %v6226, %v6225
    %v6285 = vpack.c.b16 %v6228, %v6227
    %v6286 = vpack.c.b16 %v6230, %v6229
    %v6287 = vpack.c.b16 %v6232, %v6231
    %v6288 = vpack.c.b16 %v6234, %v6233
    %v6289 = vpack.c.b16 %v6236, %v6235
    %v6290 = vpack.c.b16 %v6238, %v6237
    %v6291 = vpack.c.b16 %v6240, %v6239
    %v6292 = vpack.c.b16 %v6242, %v6241
    %v6293 = vpack.c.b16 %v6244, %v6243
    %v6294 = vpack.c.b16 %v6246, %v6245
    %v6295 = vpack.c.b16 %v6248, %v6247
    %v6296 = vpack.c.b16 %v6250, %v6249
    %v6297 = vpack.c.b16 %v6252, %v6251
    %v6298 = vpack.c.b16 %v6254, %v6253
    %v6299 = vpack.c.b16 %v6256, %v6255
    %v6300 = vpack.c.b16 %v6258, %v6257
    %v6301 = vpack.c.b16 %v6260, %v6259
    %v6302 = vpack.c.b16 %v6262, %v6261
    %v6303 = vpack.c.b16 %v6264, %v6263
    %v6304 = vpack.c.b16 %v6266, %v6265
    %v6305 = vpack.c.b16 %v6268, %v6267
    %v6306 = vpack.c.b16 %v6270, %v6269
    %v6307 = vpack.c.b16 %v6272, %v6271
    %v6308 = vpack.c.b16 %v6274, %v6273
    %v6309 = vpack.c.b16 %v6276, %v6275
    %v6310 = vpack.c.b16 %v6278, %v6277
    %6343 = vmatprep.subr.bf16.mxu0 0
    %6344 = vmatpush1.bf16.msra.mxu0 %v6279
    %6345 = vmatprep.subr.bf16.mxu0 0
    %6346 = vmatpush1.bf16.msra.mxu0 %v6280
    %6347 = vmatprep.subr.bf16.mxu0 0
    %6348 = vmatpush1.bf16.msra.mxu0 %v6281
    %6349 = vmatprep.subr.bf16.mxu0 0
    %6350 = vmatpush1.bf16.msra.mxu0 %v6282
    %6351 = vmatprep.subr.bf16.mxu0 0
    %6352 = vmatpush1.bf16.msra.mxu0 %v6283
    %6353 = vmatprep.subr.bf16.mxu0 0
    %6354 = vmatpush1.bf16.msra.mxu0 %v6284
    %6355 = vmatprep.subr.bf16.mxu0 0
    %6356 = vmatpush1.bf16.msra.mxu0 %v6285
    %6357 = vmatprep.subr.bf16.mxu0 0
    %6358 = vmatpush1.bf16.msra.mxu0 %v6286
    %6359 = vmatprep.subr.bf16.mxu0 0
    %6360 = vmatpush1.bf16.msra.mxu0 %v6287
    %6361 = vmatprep.subr.bf16.mxu0 0
    %6362 = vmatpush1.bf16.msra.mxu0 %v6288
    %6363 = vmatprep.subr.bf16.mxu0 0
    %6364 = vmatpush1.bf16.msra.mxu0 %v6289
    %6365 = vmatprep.subr.bf16.mxu0 0
    %6366 = vmatpush1.bf16.msra.mxu0 %v6290
    %6367 = vmatprep.subr.bf16.mxu0 0
    %6368 = vmatpush1.bf16.msra.mxu0 %v6291
    %6369 = vmatprep.subr.bf16.mxu0 0
    %6370 = vmatpush1.bf16.msra.mxu0 %v6292
    %6371 = vmatprep.subr.bf16.mxu0 0
    %6372 = vmatpush1.bf16.msra.mxu0 %v6293
    %6373 = vmatprep.subr.bf16.mxu0 0
    %6374 = vmatpush1.bf16.msra.mxu0 %v6294
    %6375 = vmatprep.mubr.bf16.mxu0 %v6077
    %6376 = vmatmul.mubr.bf16.gmra.mrb[0].mxu0 %v6076
    %v6377 = vpop.f32.mrb[0].mxu0
    %v6378 = vadd.f32 %v6149, %v6377
    %v6379 = vpop.f32.mrb[0].mxu0
    %v6380 = vpop.f32.mrb[0].mxu0
    %v6381 = vpop.f32.mrb[0].mxu0
    %6382 = vdwg.mxu0
    %6383 = vmatprep.subr.bf16.mxu0 0
    %6384 = vmatpush1.bf16.msra.mxu0 %v6295
    %6385 = vmatprep.subr.bf16.mxu0 0
    %6386 = vmatpush1.bf16.msra.mxu0 %v6296
    %6387 = vmatprep.subr.bf16.mxu0 0
    %6388 = vmatpush1.bf16.msra.mxu0 %v6297
    %6389 = vmatprep.subr.bf16.mxu0 0
    %6390 = vmatpush1.bf16.msra.mxu0 %v6298
    %6391 = vmatprep.subr.bf16.mxu0 0
    %6392 = vmatpush1.bf16.msra.mxu0 %v6299
    %6393 = vmatprep.subr.bf16.mxu0 0
    %6394 = vmatpush1.bf16.msra.mxu0 %v6300
    %6395 = vmatprep.subr.bf16.mxu0 0
    %6396 = vmatpush1.bf16.msra.mxu0 %v6301
    %6397 = vmatprep.subr.bf16.mxu0 0
    %6398 = vmatpush1.bf16.msra.mxu0 %v6302
    %6399 = vmatprep.subr.bf16.mxu0 0
    %6400 = vmatpush1.bf16.msra.mxu0 %v6303
    %6401 = vmatprep.subr.bf16.mxu0 0
    %6402 = vmatpush1.bf16.msra.mxu0 %v6304
    %6403 = vmatprep.subr.bf16.mxu0 0
    %6404 = vmatpush1.bf16.msra.mxu0 %v6305
    %6405 = vmatprep.subr.bf16.mxu0 0
    %6406 = vmatpush1.bf16.msra.mxu0 %v6306
    %6407 = vmatprep.subr.bf16.mxu0 0
    %6408 = vmatpush1.bf16.msra.mxu0 %v6307
    %6409 = vmatprep.subr.bf16.mxu0 0
    %6410 = vmatpush1.bf16.msra.mxu0 %v6308
    %6411 = vmatprep.subr.bf16.mxu0 0
    %6412 = vmatpush1.bf16.msra.mxu0 %v6309
    %6413 = vmatprep.subr.bf16.mxu0 0
    %6414 = vmatpush1.bf16.msra.mxu0 %v6310
    %6415 = vmatprep.mubr.bf16.mxu0 %v6079
    %6416 = vmatmul.mubr.bf16.gmra.mrb[0].mxu0 %v6078
    %v6417 = vpop.f32.mrb[0].mxu0
    %v6418 = vadd.f32 %v6378, %v6417
    %v6419 = vpop.f32.mrb[0].mxu0
    %v6420 = vpop.f32.mrb[0].mxu0
    %v6421 = vpop.f32.mrb[0].mxu0
    %6422 = vdwg.mxu0
    %6423 = vmax.xlane.f32.xlu0 %v6418
    %v6424 = vpop.xlane.xlu0 %6423
    %v6425 = vsub.f32 %v6418, %v6424
    %v6426 = vmul.f32 %v6425, 1.442695
    %v6427 = vpow.pop %v6426
    %6428 = vadd.xlane.f32.xlu0 %v6427
    %v6429 = vpop.xlane.xlu0 %6428
    %v6430 = vlog2.pop %v6429
    %v6431 = vmul.f32 %v6430, 0.6931472
    %v6432 = vsub.f32 %v6425, %v6431
    %6433 = vst [vmem:[#allocation20] sm:$0xff] %v6432
    // Predicated region
    $region90: #{tpu_custom_call.1} parent=1 // pred_check
      _
    $region91: #{tpu_custom_call.1} parent=1 // pred_check_branch
      %6435 = sbr.rel (0) target = $region93
    $region92: #{tpu_custom_call.1} parent=1 // pred_region
      %s6437 = ssub.s32 128, 128
      %6438 = vsyncadd [#allocation4], %s6437
      %s6440 = sshll.u32 [#allocation20], 4
      %s6441 = int_to_ptr.vmem [resolvable:$true] %s6440
      %6443 = dma.vmem_to_hbm [thread:$0]  %s6441, 128, %s11, [#allocation4]
    $region93: #{tpu_custom_call.1} parent=1 // pred_fallthru
      _
    // Predicated region
    $region94: #{tpu_custom_call.1} parent=1 // pred_check
      _
    $region95: #{tpu_custom_call.1} parent=1 // pred_check_branch
      %6445 = sbr.rel (0) target = $region97
    $region96: #{tpu_custom_call.1} parent=1 // pred_region
      %6446 = dma.done [#allocation4], 128
    $region97: #{tpu_custom_call.1} parent=1 // pred_fallthru
      _
    %6447 = vsyncpa [#allocation3], 1
    %6448 = vsyncpa [#allocation6], 1
    %6449 = vsyncpa [#allocation9], 1
    %6450 = vsyncpa [#allocation12], 1
    %6451 = vsyncpa [#allocation15], 1
    %6452 = vsyncpa [#allocation18], 1
    %6453 = vsyncpa [#allocation4], 1

</llo_original>
